<compile_context>
chip_gen: v6e
topology: v6e:2x2x1
jax: 0.10.0
libtpu: 0.0.40
codegen_flags: <defaults>
</compile_context>

<pallas_src>
import math
import functools

import jax
import jax.numpy as jnp
from jax import lax
from jax.experimental import pallas as pl
from jax.experimental.pallas import tpu as pltpu


# ----------------------------------------------------------------------------
# Kernel
# ----------------------------------------------------------------------------
def _multiatt_kernel(x_ref, wq_ref, wk_ref, wv_ref, wo_ref, out_ref, acc_ref,
                     *, heads_per_group, d_head, q_tile):
    # x_ref:   (S, D)            full sequence for this batch element
    # wq_ref:  (NG, D, G*dk)     all Q weight slabs (resident; pre-scaled by 1/sqrt(dk))
    # wk_ref:  (NG, D, G*dk)     all K weight slabs (resident)
    # wv_ref:  (NG, D, G*dk)     all V weight slabs (resident)
    # wo_ref:  (NG, G*dk, D)     all output-projection slabs (resident)
    # out_ref: (TQ, D)           output rows for this query tile (written once)
    # acc_ref: (TQ, D) f32       accumulator across head groups
    G, dk, TQ = heads_per_group, d_head, q_tile
    qi = pl.program_id(1)
    g = pl.program_id(2)
    num_groups = pl.num_programs(2)

    @pl.when(g == 0)
    def _():
        acc_ref[...] = jnp.zeros_like(acc_ref)

    x = x_ref[...]                                   # (S, D), native dtype
    S = x.shape[0]
    dt = x.dtype

    q_start = pl.multiple_of(qi * TQ, TQ)
    x_q = x_ref[pl.ds(q_start, TQ), :]               # (TQ, D) query rows

    # This group's resident weight slabs (dynamic first-axis index, no DMA).
    wq = wq_ref[g]                                   # (D, G*dk), scale folded in
    wk = wk_ref[g]
    wv = wv_ref[g]
    wo = wo_ref[g]                                   # (G*dk, D)

    # Wide projections: N = G*dk lanes on the MXU, f32 accumulation.
    q = jnp.dot(x_q, wq, preferred_element_type=jnp.float32)   # (TQ, G*dk)
    k = jnp.dot(x,   wk, preferred_element_type=jnp.float32)   # (S,  G*dk)
    v = jnp.dot(x,   wv, preferred_element_type=jnp.float32)   # (S,  G*dk)

    q3 = q.astype(dt).reshape(TQ, G, dk)
    k3 = k.astype(dt).reshape(S, G, dk)
    v3 = v.astype(dt).reshape(S, G, dk)

    # Batched scores over the G fused sub-heads: (G, TQ, S) = Q K^T (pre-scaled).
    scores = jnp.einsum("igd,jgd->gij", q3, k3,
                        preferred_element_type=jnp.float32)

    # Causal mask from (TQ,1) x (1,S) iotas (torch.triu(..., diagonal=1)).
    rows = q_start + lax.broadcasted_iota(jnp.int32, (TQ, 1), 0)
    cols = lax.broadcasted_iota(jnp.int32, (1, S), 1)
    scores = jnp.where(cols > rows, jnp.float32(-1e30), scores)

    # Numerically-stable softmax; normalization deferred until after PV.
    m = jnp.max(scores, axis=-1, keepdims=True)      # (G, TQ, 1)
    p = jnp.exp(scores - m)                          # (G, TQ, S) unnormalized
    denom = jnp.sum(p, axis=-1, keepdims=True)       # (G, TQ, 1)

    # PV with unnormalized probabilities, then exact (TQ x dk) normalization.
    pv = jnp.einsum("gij,jgd->gid", p.astype(dt), v3,
                    preferred_element_type=jnp.float32)          # (G, TQ, dk)
    head = pv * (1.0 / denom)                                    # exact divide
    head_flat = jnp.transpose(head, (1, 0, 2)).reshape(TQ, G * dk).astype(dt)

    # Fold the head-concat into the output projection: one wide accumulate.
    acc_ref[...] += jnp.dot(head_flat, wo, preferred_element_type=jnp.float32)

    @pl.when(g == num_groups - 1)
    def _():
        out_ref[...] = acc_ref[...].astype(out_ref.dtype)


# ----------------------------------------------------------------------------
# Host-side helpers
# ----------------------------------------------------------------------------
def _pick_heads_per_group(num_heads, d_head, target_lanes=256):
    """Smallest divisor G of num_heads with G*d_head >= target_lanes, else all."""
    for g in range(1, num_heads + 1):
        if num_heads % g == 0 and g * d_head >= target_lanes:
            return g
    return num_heads


def _pick_query_tile(seq_len, max_tile=256):
    if seq_len <= max_tile:
        return seq_len
    for tq in range(max_tile, 7, -1):
        if seq_len % tq == 0 and tq % 8 == 0:
            return tq
    return seq_len


def _prepare_weights(w_qkv, w_out, num_heads, heads_per_group):
    """Rearrange nn.Linear weights into per-group slabs (one-time XLA reshapes)."""
    three_d, D = w_qkv.shape
    H, G = num_heads, heads_per_group
    dk = D // H
    NG = H // G
    scale = 1.0 / math.sqrt(dk)

    w3 = w_qkv.reshape(3, H, dk, D)                    # (3, H, dk, D)

    def slab(w_heads, apply_scale=False):
        # (H, dk, D) -> (NG, D, G*dk) with columns ordered (local head, dk)
        w = jnp.transpose(w_heads, (0, 2, 1))          # (H, D, dk)
        w = w.reshape(NG, G, D, dk)
        w = jnp.transpose(w, (0, 2, 1, 3)).reshape(NG, D, G * dk)
        return w * jnp.asarray(scale, w.dtype) if apply_scale else w

    wq_g = slab(w3[0], apply_scale=True)               # fold 1/sqrt(dk) into Q
    wk_g = slab(w3[1])
    wv_g = slab(w3[2])
    # ans = att @ w_out.T ; per-group slab of w_out.T rows.
    wo_g = jnp.transpose(w_out, (1, 0)).reshape(NG, G * dk, D)
    return wq_g, wk_g, wv_g, wo_g


def multiatt_forward(x, w_qkv, w_out, *, num_heads, heads_per_group=None,
                     q_tile=None, mxu_lanes=256):
    """x: (B, S, D); w_qkv: (3D, D) = nn.Linear(D, 3D).weight; w_out: (D, D)."""
    B, S, D = x.shape
    assert D % num_heads == 0
    dk = D // num_heads

    G = heads_per_group or _pick_heads_per_group(num_heads, dk, mxu_lanes)
    assert num_heads % G == 0
    NG = num_heads // G
    Gdk = G * dk

    TQ = q_tile or _pick_query_tile(S)
    if S % TQ != 0:
        TQ = S
    NQ = S // TQ

    wq_g, wk_g, wv_g, wo_g = _prepare_weights(w_qkv, w_out, num_heads, G)

    kernel = functools.partial(_multiatt_kernel, heads_per_group=G,
                               d_head=dk, q_tile=TQ)

    # Rough VMEM budget (blocks + in-body temporaries), clamped to 32..64 MiB
    # so it is valid on v5e/v6e (128 MiB physical) and v7x (64 MiB physical).
    itemsize = x.dtype.itemsize
    f32b = 4
    est = (2 * S * D * itemsize                 # x block (double-buffered)
           + 2 * TQ * D * itemsize              # out block (double-buffered)
           + TQ * D * f32b                      # accumulator scratch
           + 2 * 4 * D * D * itemsize           # resident weight slabs
           + (TQ + 2 * S) * Gdk * f32b          # q / k / v f32 intermediates
           + 4 * G * TQ * S * f32b              # scores / p temporaries (slack)
           + 2 * G * TQ * dk * f32b)            # pv / normalized heads
    vmem_limit = int(min(max(2 * est, 32 * 1024 * 1024), 64 * 1024 * 1024))

    return pl.pallas_call(
        kernel,
        out_shape=jax.ShapeDtypeStruct((B, S, D), x.dtype),
        grid_spec=pltpu.PrefetchScalarGridSpec(
            num_scalar_prefetch=0,
            grid=(B, NQ, NG),
            in_specs=[
                # x: same full-sequence block for every (q, g) of a batch elem.
                pl.BlockSpec((None, S, D), lambda b, q, g: (b, 0, 0)),
                # Weights: full arrays, constant index map -> DMA'd once, resident.
                pl.BlockSpec((NG, D, Gdk), lambda b, q, g: (0, 0, 0)),
                pl.BlockSpec((NG, D, Gdk), lambda b, q, g: (0, 0, 0)),
                pl.BlockSpec((NG, D, Gdk), lambda b, q, g: (0, 0, 0)),
                pl.BlockSpec((NG, Gdk, D), lambda b, q, g: (0, 0, 0)),
            ],
            out_specs=pl.BlockSpec((None, TQ, D), lambda b, q, g: (b, q, 0)),
            scratch_shapes=[pltpu.VMEM((TQ, D), jnp.float32)],
        ),
        compiler_params=pltpu.CompilerParams(
            # Head-group axis accumulates into the output tile -> "arbitrary";
            # batch and query-tile axes are independent -> "parallel" (megacore).
            dimension_semantics=("parallel", "parallel", "arbitrary"),
            vmem_limit_bytes=vmem_limit,
        ),
    )(x, wq_g, wk_g, wv_g, wo_g)


# ----------------------------------------------------------------------------
# Pure-JAX reference (matches the PyTorch forward with attn_pdrop = 0)
# ----------------------------------------------------------------------------
def multiatt_reference(x, w_qkv, w_out, *, num_heads):
    B, S, D = x.shape
    dk = D // num_heads
    hp = jax.lax.Precision.HIGHEST  # avoid TPU default bf16 matmul passes
    qkv = jnp.einsum("bsd,cd->bsc", x, w_qkv, precision=hp)       # x @ w_qkv.T
    qkv = qkv.reshape(B, S, 3, num_heads, dk)
    q = jnp.transpose(qkv[:, :, 0], (0, 2, 1, 3))                 # (B, H, S, dk)
    k = jnp.transpose(qkv[:, :, 1], (0, 2, 1, 3))
    v = jnp.transpose(qkv[:, :, 2], (0, 2, 1, 3))
    scores = jnp.einsum("bhqd,bhkd->bhqk", q, k, precision=hp) / math.sqrt(dk)
    mask = jnp.triu(jnp.ones((S, S), dtype=bool), k=1)
    scores = jnp.where(mask, -jnp.inf, scores)
    probs = jax.nn.softmax(scores, axis=-1)
    att = jnp.einsum("bhqk,bhkd->bhqd", probs, v, precision=hp)
    att = jnp.transpose(att, (0, 2, 1, 3)).reshape(B, S, D)
    return jnp.einsum("bsc,oc->bso", att, w_out, precision=hp)    # att @ w_out.T


if __name__ == "__main__":
    # Small, TPU-tile-friendly shapes consistent with the module.
    B, S = 2, 128
    d_model, num_heads = 512, 8          # d_kq = 64
    attn_pdrop = 0.0                     # dropout disabled (eval-mode forward)

    key = jax.random.PRNGKey(0)
    kx, kqkv, kout = jax.random.split(key, 3)

    x = jax.random.normal(kx, (B, S, d_model), dtype=jnp.float32)
    # nn.Linear(d_model, 3*d_model, bias=False).weight -> (3*d_model, d_model)
    w_qkv = jax.random.normal(kqkv, (3 * d_model, d_model),
                              dtype=jnp.float32) / math.sqrt(d_model)
    # nn.Linear(d_model, d_model, bias=False).weight -> (d_model, d_model)
    w_out = jax.random.normal(kout, (d_model, d_model),
                              dtype=jnp.float32) / math.sqrt(d_model)

    # q_tile=64 -> 2 query tiles; heads_per_group auto -> G=4, 2 head groups.
    out = multiatt_forward(x, w_qkv, w_out, num_heads=num_heads, q_tile=64)
    out = jax.block_until_ready(out)

    ref = multiatt_reference(x, w_qkv, w_out, num_heads=num_heads)
    ref = jax.block_until_ready(ref)

    assert out.shape == (B, S, d_model)
    max_err = jnp.max(jnp.abs(out - ref))
    # Tolerance covers MXU f32 pass strategies; structural errors are O(0.1-1).
    assert jnp.allclose(out, ref, atol=5e-3, rtol=5e-3), (
        f"mismatch vs reference (max abs err {max_err})")

    print("KERNEL_OK")
</pallas_src>

<mosaic_0001>
module attributes {stable_mosaic.version = 11 : i64} {
  func.func @_multiatt_kernel(%arg0: i32, %arg1: i32, %arg2: i32, %arg3: memref<1x128x512xf32, #tpu.memory_space<vmem>>, %arg4: memref<2x512x256xf32, #tpu.memory_space<vmem>>, %arg5: memref<2x512x256xf32, #tpu.memory_space<vmem>>, %arg6: memref<2x512x256xf32, #tpu.memory_space<vmem>>, %arg7: memref<2x256x512xf32, #tpu.memory_space<vmem>>, %arg8: memref<1x64x512xf32, #tpu.memory_space<vmem>>, %arg9: memref<64x512xf32, #tpu.memory_space<vmem>>) attributes {dimension_semantics = [#tpu.dimension_semantics<parallel>, #tpu.dimension_semantics<parallel>, #tpu.dimension_semantics<arbitrary>], iteration_bounds = array<i64: 2, 2, 2>, scalar_prefetch = 0 : i64, scratch_operands = 1 : i64, tpu.core_type = #tpu.core_type<tc>, window_params = [{transform_indices = @transform_0, window_bounds = array<i64: 1, 128, 512>}, {pipeline_mode = #tpu.pipeline_mode<synchronous>, transform_indices = @transform_1, window_bounds = array<i64: 2, 512, 256>}, {pipeline_mode = #tpu.pipeline_mode<synchronous>, transform_indices = @transform_2, window_bounds = array<i64: 2, 512, 256>}, {pipeline_mode = #tpu.pipeline_mode<synchronous>, transform_indices = @transform_3, window_bounds = array<i64: 2, 512, 256>}, {pipeline_mode = #tpu.pipeline_mode<synchronous>, transform_indices = @transform_4, window_bounds = array<i64: 2, 256, 512>}, {transform_indices = @transform_5, window_bounds = array<i64: 1, 64, 512>}]} {
    %c0_i32 = arith.constant 0 : i32
    %0 = arith.cmpi eq, %arg2, %c0_i32 : i32
    %1 = arith.extui %0 : i1 to i32
    %c0_i32_0 = arith.constant 0 : i32
    %2 = arith.cmpi ne, %1, %c0_i32_0 : i32
    scf.if %2 {
      %cst_27 = arith.constant 0.000000e+00 : f32
      %61 = vector.broadcast %cst_27 : f32 to vector<64x512xf32>
      %c0_28 = arith.constant 0 : index
      %c0_29 = arith.constant 0 : index
      %62 = vector.load %arg9[%c0_28, %c0_29] : memref<64x512xf32, #tpu.memory_space<vmem>>, vector<64x512xf32>
      tpu.vector_store %arg9[%c0_28, %c0_29], %61 {strides = array<i32>} : memref<64x512xf32, #tpu.memory_space<vmem>>, vector<64x512xf32>,
    } else {
    }
    %c0 = arith.constant 0 : index
    %c0_1 = arith.constant 0 : index
    %c0_2 = arith.constant 0 : index
    %3 = vector.load %arg3[%c0, %c0_1, %c0_2] : memref<1x128x512xf32, #tpu.memory_space<vmem>>, vector<1x128x512xf32>
    %4 = vector.shape_cast %3 : vector<1x128x512xf32> to vector<128x512xf32>
    %c64_i32 = arith.constant 64 : i32
    %5 = arith.muli %arg1, %c64_i32 : i32
    %6 = tpu.assume_multiple %5, 64 : i32
    %c0_3 = arith.constant 0 : index
    %7 = arith.index_cast %6 : i32 to index
    %c0_4 = arith.constant 0 : index
    %8 = vector.load %arg3[%c0_3, %7, %c0_4] : memref<1x128x512xf32, #tpu.memory_space<vmem>>, vector<1x64x512xf32>
    %9 = vector.shape_cast %8 : vector<1x64x512xf32> to vector<64x512xf32>
    %10 = arith.index_cast %arg2 : i32 to index
    %c0_5 = arith.constant 0 : index
    %c0_6 = arith.constant 0 : index
    %11 = vector.load %arg4[%10, %c0_5, %c0_6] : memref<2x512x256xf32, #tpu.memory_space<vmem>>, vector<1x512x256xf32>
    %12 = vector.shape_cast %11 : vector<1x512x256xf32> to vector<512x256xf32>
    %13 = arith.index_cast %arg2 : i32 to index
    %c0_7 = arith.constant 0 : index
    %c0_8 = arith.constant 0 : index
    %14 = vector.load %arg5[%13, %c0_7, %c0_8] : memref<2x512x256xf32, #tpu.memory_space<vmem>>, vector<1x512x256xf32>
    %15 = vector.shape_cast %14 : vector<1x512x256xf32> to vector<512x256xf32>
    %16 = arith.index_cast %arg2 : i32 to index
    %c0_9 = arith.constant 0 : index
    %c0_10 = arith.constant 0 : index
    %17 = vector.load %arg6[%16, %c0_9, %c0_10] : memref<2x512x256xf32, #tpu.memory_space<vmem>>, vector<1x512x256xf32>
    %18 = vector.shape_cast %17 : vector<1x512x256xf32> to vector<512x256xf32>
    %19 = arith.index_cast %arg2 : i32 to index
    %c0_11 = arith.constant 0 : index
    %c0_12 = arith.constant 0 : index
    %20 = vector.load %arg7[%19, %c0_11, %c0_12] : memref<2x256x512xf32, #tpu.memory_space<vmem>>, vector<1x256x512xf32>
    %21 = vector.shape_cast %20 : vector<1x256x512xf32> to vector<256x512xf32>
    %cst = arith.constant dense<0.000000e+00> : vector<64x256xf32>
    %22 = tpu.matmul %9, %12, %cst {dimension_numbers = #tpu.dot_dimension_numbers<[1], [0], [0], [1], [0, 0, 1, 1], [], []>} : vector<64x512xf32>, vector<512x256xf32>, vector<64x256xf32> -> vector<64x256xf32>
    %cst_13 = arith.constant dense<0.000000e+00> : vector<128x256xf32>
    %23 = tpu.matmul %4, %15, %cst_13 {dimension_numbers = #tpu.dot_dimension_numbers<[1], [0], [0], [1], [0, 0, 1, 1], [], []>} : vector<128x512xf32>, vector<512x256xf32>, vector<128x256xf32> -> vector<128x256xf32>
    %cst_14 = arith.constant dense<0.000000e+00> : vector<128x256xf32>
    %24 = tpu.matmul %4, %18, %cst_14 {dimension_numbers = #tpu.dot_dimension_numbers<[1], [0], [0], [1], [0, 0, 1, 1], [], []>} : vector<128x512xf32>, vector<512x256xf32>, vector<128x256xf32> -> vector<128x256xf32>
    %25 = vector.shape_cast %22 : vector<64x256xf32> to vector<64x4x64xf32>
    %26 = vector.shape_cast %23 : vector<128x256xf32> to vector<128x4x64xf32>
    %27 = vector.shape_cast %24 : vector<128x256xf32> to vector<128x4x64xf32>
    "tpu.trace_start"() <{level = 10 : i32, message = "igd,jgd->gij"}> : () -> ()
    %cst_15 = arith.constant dense<0.000000e+00> : vector<4x64x128xf32>
    %28 = tpu.matmul %25, %26, %cst_15 {dimension_numbers = #tpu.dot_dimension_numbers<[2], [2], [0], [0], [0, 1, 0, 0, 1, 0], [1], [1]>} : vector<64x4x64xf32>, vector<128x4x64xf32>, vector<4x64x128xf32> -> vector<4x64x128xf32>
    "tpu.trace_stop"() : () -> ()
    %29 = tpu.iota {dimensions = array<i32: 0>} : vector<64x1xi32>
    %30 = vector.broadcast %6 : i32 to vector<64x1xi32>
    %31 = arith.addi %30, %29 : vector<64x1xi32>
    %32 = tpu.iota {dimensions = array<i32: 1>} : vector<1x128xi32>
    %33 = vector.broadcast %32 : vector<1x128xi32> to vector<64x128xi32>
    %34 = vector.broadcast %31 : vector<64x1xi32> to vector<64x128xi32>
    %35 = arith.cmpi sgt, %33, %34 : vector<64x128xi32>
    %cst_16 = arith.constant -1.000000e+30 : f32
    %36 = vector.shape_cast %35 : vector<64x128xi1> to vector<1x64x128xi1>
    %37 = vector.broadcast %36 : vector<1x64x128xi1> to vector<4x64x128xi1>
    %38 = vector.broadcast %cst_16 : f32 to vector<4x64x128xf32>
    %39 = arith.select %37, %38, %28 : vector<4x64x128xi1>, vector<4x64x128xf32>
    %cst_17 = arith.constant dense<0xFF800000> : vector<4x64xf32>
    %40 = vector.multi_reduction <maximumf>, %39, %cst_17 [2] : vector<4x64x128xf32> to vector<4x64xf32>
    %41 = vector.shape_cast %40 : vector<4x64xf32> to vector<4x64x1xf32>
    %42 = vector.broadcast %41 : vector<4x64x1xf32> to vector<4x64x128xf32>
    %43 = arith.subf %39, %42 : vector<4x64x128xf32>
    %44 = math.exp %43 : vector<4x64x128xf32>
    %cst_18 = arith.constant dense<0.000000e+00> : vector<4x64xf32>
    %45 = vector.multi_reduction <add>, %44, %cst_18 [2] : vector<4x64x128xf32> to vector<4x64xf32>
    %46 = vector.shape_cast %45 : vector<4x64xf32> to vector<4x64x1xf32>
    "tpu.trace_start"() <{level = 10 : i32, message = "gij,jgd->gid"}> : () -> ()
    %cst_19 = arith.constant dense<0.000000e+00> : vector<4x64x64xf32>
    %47 = tpu.matmul %44, %27, %cst_19 {dimension_numbers = #tpu.dot_dimension_numbers<[2], [0], [1], [2], [0, 0, 0, 1, 1, 2], [0], [1]>} : vector<4x64x128xf32>, vector<128x4x64xf32>, vector<4x64x64xf32> -> vector<4x64x64xf32>
    "tpu.trace_stop"() : () -> ()
    %cst_20 = arith.constant 1.000000e+00 : f32
    %48 = vector.broadcast %cst_20 : f32 to vector<4x64x1xf32>
    %49 = arith.divf %48, %46 : vector<4x64x1xf32>
    %50 = vector.broadcast %49 : vector<4x64x1xf32> to vector<4x64x64xf32>
    %51 = arith.mulf %47, %50 : vector<4x64x64xf32>
    %52 = tpu.transpose %51, [1, 0, 2] : vector<4x64x64xf32> -> vector<64x4x64xf32>
    %53 = vector.shape_cast %52 : vector<64x4x64xf32> to vector<64x256xf32>
    %c0_21 = arith.constant 0 : index
    %c0_22 = arith.constant 0 : index
    %54 = vector.load %arg9[%c0_21, %c0_22] : memref<64x512xf32, #tpu.memory_space<vmem>>, vector<64x512xf32>
    %cst_23 = arith.constant dense<0.000000e+00> : vector<64x512xf32>
    %55 = tpu.matmul %53, %21, %cst_23 {dimension_numbers = #tpu.dot_dimension_numbers<[1], [0], [0], [1], [0, 0, 1, 1], [], []>} : vector<64x256xf32>, vector<256x512xf32>, vector<64x512xf32> -> vector<64x512xf32>
    %56 = arith.addf %54, %55 : vector<64x512xf32>
    %c0_24 = arith.constant 0 : index
    %c0_25 = arith.constant 0 : index
    %57 = vector.load %arg9[%c0_24, %c0_25] : memref<64x512xf32, #tpu.memory_space<vmem>>, vector<64x512xf32>
    tpu.vector_store %arg9[%c0_24, %c0_25], %56 {strides = array<i32>} : memref<64x512xf32, #tpu.memory_space<vmem>>, vector<64x512xf32>,
    %c1_i32 = arith.constant 1 : i32
    %58 = arith.cmpi eq, %arg2, %c1_i32 : i32
    %59 = arith.extui %58 : i1 to i32
    %c0_i32_26 = arith.constant 0 : i32
    %60 = arith.cmpi ne, %59, %c0_i32_26 : i32
    scf.if %60 {
      %c0_27 = arith.constant 0 : index
      %c0_28 = arith.constant 0 : index
      %61 = vector.load %arg9[%c0_27, %c0_28] : memref<64x512xf32, #tpu.memory_space<vmem>>, vector<64x512xf32>
      %c0_29 = arith.constant 0 : index
      %c0_30 = arith.constant 0 : index
      %c0_31 = arith.constant 0 : index
      %62 = vector.load %arg8[%c0_29, %c0_30, %c0_31] : memref<1x64x512xf32, #tpu.memory_space<vmem>>, vector<1x64x512xf32>
      %63 = vector.shape_cast %62 : vector<1x64x512xf32> to vector<64x512xf32>
      %64 = vector.shape_cast %61 : vector<64x512xf32> to vector<1x64x512xf32>
      tpu.vector_store %arg8[%c0_29, %c0_30, %c0_31], %64 {strides = array<i32>} : memref<1x64x512xf32, #tpu.memory_space<vmem>>, vector<1x64x512xf32>,
    } else {
    }
    return
  }
  func.func @transform_0(%arg0: i32, %arg1: i32, %arg2: i32) -> (i32, i32, i32) {
    %c0_i32 = arith.constant 0 : i32
    %c0_i32_0 = arith.constant 0 : i32
    %c0_i32_1 = arith.constant 0 : i32
    return %arg0, %c0_i32, %c0_i32_0 : i32, i32, i32
  }
  func.func @transform_1(%arg0: i32, %arg1: i32, %arg2: i32) -> (i32, i32, i32) {
    %c0_i32 = arith.constant 0 : i32
    %c0_i32_0 = arith.constant 0 : i32
    %c0_i32_1 = arith.constant 0 : i32
    %c0_i32_2 = arith.constant 0 : i32
    return %c0_i32, %c0_i32_0, %c0_i32_1 : i32, i32, i32
  }
  func.func @transform_2(%arg0: i32, %arg1: i32, %arg2: i32) -> (i32, i32, i32) {
    %c0_i32 = arith.constant 0 : i32
    %c0_i32_0 = arith.constant 0 : i32
    %c0_i32_1 = arith.constant 0 : i32
    %c0_i32_2 = arith.constant 0 : i32
    return %c0_i32, %c0_i32_0, %c0_i32_1 : i32, i32, i32
  }
  func.func @transform_3(%arg0: i32, %arg1: i32, %arg2: i32) -> (i32, i32, i32) {
    %c0_i32 = arith.constant 0 : i32
    %c0_i32_0 = arith.constant 0 : i32
    %c0_i32_1 = arith.constant 0 : i32
    %c0_i32_2 = arith.constant 0 : i32
    return %c0_i32, %c0_i32_0, %c0_i32_1 : i32, i32, i32
  }
  func.func @transform_4(%arg0: i32, %arg1: i32, %arg2: i32) -> (i32, i32, i32) {
    %c0_i32 = arith.constant 0 : i32
    %c0_i32_0 = arith.constant 0 : i32
    %c0_i32_1 = arith.constant 0 : i32
    %c0_i32_2 = arith.constant 0 : i32
    return %c0_i32, %c0_i32_0, %c0_i32_1 : i32, i32, i32
  }
  func.func @transform_5(%arg0: i32, %arg1: i32, %arg2: i32) -> (i32, i32, i32) {
    %c0_i32 = arith.constant 0 : i32
    %c0_i32_0 = arith.constant 0 : i32
    return %arg0, %arg1, %c0_i32 : i32, i32, i32
  }
}

</mosaic_0001>

<llo_original>
// kernel: tpu_custom_call.1
$region0: #{tpu_custom_call.1}
  #allocation0 [shape = 'u32[]', space=smem, size = 0x4, offset = 0x4, fixed_abs, tag = 'smem constant byte address 0x4 - core index']
  #allocation1 [shape = 'u32[144,128]{1,0:T(1,128)}', space=vmem, size = 0x12000, scoped, tag = 'internal scratch']
  #allocation2 [shape = 'f32[64,512]{1,0:T(8,128)}', space=vmem, size = 0x20000, scoped, tag = 'scratch operand']
  %s0 = inlined_call_operand.hbm [shape: f32[2,128,512], index: 0, kind: input, shape index: {}]
  %s1 = inlined_call_operand.hbm [shape: f32[2,512,256], index: 1, kind: input, shape index: {}]
  %s2 = inlined_call_operand.hbm [shape: f32[2,512,256], index: 2, kind: input, shape index: {}]
  %s3 = inlined_call_operand.hbm [shape: f32[2,512,256], index: 3, kind: input, shape index: {}]
  %s4 = inlined_call_operand.hbm [shape: f32[2,256,512], index: 4, kind: input, shape index: {}]
  %s5 = inlined_call_operand.hbm [shape: f32[2,128,512], index: 5, kind: output, shape index: {}]
  %s6 = sld [smem:[#allocation0]]
  $region81: #{tpu_custom_call.1} parent=0
    _
  %s8 = ssub.s32 1, %s6
  %s9 = scalar_select 0, %s8, %s6
  $region1: #{tpu_custom_call.1} parent=0
    #allocation3 [shape = 'u8[524288]{0}', space=vmem, size = 0x80000, scoped, tag = 'input window, operand 0']
    #allocation4 [shape = 's32[2]{0}', space=sflag, size = 0x8, scoped, tag = 'scoped memory for tpu_custom_call.1']
    #allocation5 [shape = 's32[2]{0}', space=sflag, size = 0x8, scoped, tag = 'scoped memory for tpu_custom_call.1']
    #allocation6 [shape = 'u8[1048576]{0}', space=vmem, size = 0x100000, scoped, tag = 'input window, operand 1, single buffered']
    #allocation7 [shape = 's32[1]{0}', space=sflag, size = 0x4, scoped, tag = 'scoped memory for tpu_custom_call.1']
    #allocation8 [shape = 'u8[1048576]{0}', space=vmem, size = 0x100000, scoped, tag = 'input window, operand 2, single buffered']
    #allocation9 [shape = 'u8[1048576]{0}', space=vmem, size = 0x100000, scoped, tag = 'input window, operand 3, single buffered']
    #allocation10 [shape = 's32[1]{0}', space=sflag, size = 0x4, scoped, tag = 'scoped memory for tpu_custom_call.1']
    #allocation11 [shape = 'u8[1048576]{0}', space=vmem, size = 0x100000, scoped, tag = 'input window, operand 4, single buffered']
    #allocation12 [shape = 'u8[262144]{0}', space=vmem, size = 0x40000, scoped, tag = 'output window, operand 0']
    %10 = vsyncpa [#allocation4], 0
    %s11 = scalar_lea.sflag [#allocation4], 1
    %12 = vsyncpa %s11, 0
    %13 = vsyncpa [#allocation7], 0
    %14 = vsyncpa [#allocation10], 0
    %15 = vsyncpa [#allocation5], 0
    %s16 = scalar_lea.sflag [#allocation5], 1
    %17 = vsyncpa %s16, 0
    loop: start=0, step=1, limit=10
    $region2: #{tpu_custom_call.1} parent=1 // loop_pre_header
      _
    $region3: #{tpu_custom_call.1} parent=1 // loop_header
      %s19 = sphi 0, %s23
      %p20 = scmp.ge.s32.totalorder %s19, 10
      %s26 = sphi 0, %s45
      %s27 = sphi 0, %s41
      %s28 = sphi 0, %s37
      %s29 = sphi 0, %s26
      %s30 = sphi 0, %s27
      %s31 = sphi 0, %s28
      %s32 = sphi 0, %s29
      %s33 = sphi 0, %s30
      %s34 = sphi 0, %s31
      %s48 = sphi 0, %s50
      %s51 = sphi 0, %s48
      %s52 = sphi 0, %s51
      %s68 = sphi 0, %s52
      %s72 = sphi 0, %s72
      %s74 = sphi 0, %s72
      %s75 = sphi 0, %s74
      %s89 = sphi 0, %s75
      %s93 = sphi 0, %s93
      %s95 = sphi 0, %s93
      %s96 = sphi 0, %s95
      %s110 = sphi 0, %s96
      %s114 = sphi 0, %s114
      %s116 = sphi 0, %s114
      %s117 = sphi 0, %s116
      %s131 = sphi 0, %s117
      %s135 = sphi 0, %s135
      %s137 = sphi 0, %s135
      %s138 = sphi 0, %s137
      %s152 = sphi 0, %s138
      %s160 = sphi 0, %s162
      %s163 = sphi 0, %s160
      %s164 = sphi 0, %s163
      %s180 = sphi 0, %s164
    $region4: #{tpu_custom_call.1} parent=1 // loop_header_branch
      %22 = sbr.rel (%p20) target = $region8
    $region5: #{tpu_custom_call.1} parent=1 // loop_body
      %s24 = ssub.s32 %s19, 1
      %s25 = ssub.s32 %s19, 2
      %s35 = sadd.s32 1, %s28
      %p36 = scmp.ge.s32.totalorder %s35, 2
      %s37 = scalar_select %p36, 0, %s35
      %s38 = sadd.s32 1, %s27
      %s39 = scalar_select %p36, %s38, %s27
      %p40 = scmp.ge.s32.totalorder %s39, 2
      %s41 = scalar_select %p40, 0, %s39
      %s42 = sadd.s32 1, %s26
      %s43 = scalar_select %p40, %s42, %s26
      %p44 = scmp.ge.s32.totalorder %s43, 2
      %s45 = scalar_select %p44, 0, %s43
      %s46 = ssub.s32 %s26, %s45
      %p47 = scmp.eq.s32.totalorder %s46, 0
      %s49 = sadd.s32 %s48, 1
      %s50 = scalar_select %p47, %s48, %s49
      %p53 = pneg %p47
      %p54 = scmp.eq.s32.totalorder %s19, 7
      %p55 = por %p53, %p54
      %p56 = scmp.ne.s32.totalorder %s48, %s51
      %p57 = scmp.eq.s32.totalorder %s19, 0
      %p58 = por %p56, %p57
      %p59 = scmp.ne.s32.totalorder %s48, %s51
      %p60 = scmp.eq.s32.totalorder %s24, 7
      %p61 = por %p59, %p60
      %p62 = scmp.ne.s32.totalorder %s51, %s52
      %p63 = scmp.eq.s32.totalorder %s24, 0
      %p64 = por %p62, %p63
      %p65 = scmp.ne.s32.totalorder %s51, %s52
      %p66 = scmp.eq.s32.totalorder %s25, 7
      %p67 = por %p65, %p66
      %p69 = scmp.ne.s32.totalorder %s52, %s68
      %p70 = scmp.eq.s32.totalorder %s25, 0
      %p71 = por %p69, %p70
      %s73 = sadd.s32 %s72, 1
      %p76 = scmp.eq.s32.totalorder %s19, 7
      %p77 = scmp.ne.s32.totalorder %s72, %s74
      %p78 = scmp.eq.s32.totalorder %s19, 0
      %p79 = por %p77, %p78
      %p80 = scmp.ne.s32.totalorder %s72, %s74
      %p81 = scmp.eq.s32.totalorder %s24, 7
      %p82 = por %p80, %p81
      %p83 = scmp.ne.s32.totalorder %s74, %s75
      %p84 = scmp.eq.s32.totalorder %s24, 0
      %p85 = por %p83, %p84
      %p86 = scmp.ne.s32.totalorder %s74, %s75
      %p87 = scmp.eq.s32.totalorder %s25, 7
      %p88 = por %p86, %p87
      %p90 = scmp.ne.s32.totalorder %s75, %s89
      %p91 = scmp.eq.s32.totalorder %s25, 0
      %p92 = por %p90, %p91
      %s94 = sadd.s32 %s93, 1
      %p97 = scmp.eq.s32.totalorder %s19, 7
      %p98 = scmp.ne.s32.totalorder %s93, %s95
      %p99 = scmp.eq.s32.totalorder %s19, 0
      %p100 = por %p98, %p99
      %p101 = scmp.ne.s32.totalorder %s93, %s95
      %p102 = scmp.eq.s32.totalorder %s24, 7
      %p103 = por %p101, %p102
      %p104 = scmp.ne.s32.totalorder %s95, %s96
      %p105 = scmp.eq.s32.totalorder %s24, 0
      %p106 = por %p104, %p105
      %p107 = scmp.ne.s32.totalorder %s95, %s96
      %p108 = scmp.eq.s32.totalorder %s25, 7
      %p109 = por %p107, %p108
      %p111 = scmp.ne.s32.totalorder %s96, %s110
      %p112 = scmp.eq.s32.totalorder %s25, 0
      %p113 = por %p111, %p112
      %s115 = sadd.s32 %s114, 1
      %p118 = scmp.eq.s32.totalorder %s19, 7
      %p119 = scmp.ne.s32.totalorder %s114, %s116
      %p120 = scmp.eq.s32.totalorder %s19, 0
      %p121 = por %p119, %p120
      %p122 = scmp.ne.s32.totalorder %s114, %s116
      %p123 = scmp.eq.s32.totalorder %s24, 7
      %p124 = por %p122, %p123
      %p125 = scmp.ne.s32.totalorder %s116, %s117
      %p126 = scmp.eq.s32.totalorder %s24, 0
      %p127 = por %p125, %p126
      %p128 = scmp.ne.s32.totalorder %s116, %s117
      %p129 = scmp.eq.s32.totalorder %s25, 7
      %p130 = por %p128, %p129
      %p132 = scmp.ne.s32.totalorder %s117, %s131
      %p133 = scmp.eq.s32.totalorder %s25, 0
      %p134 = por %p132, %p133
      %s136 = sadd.s32 %s135, 1
      %p139 = scmp.eq.s32.totalorder %s19, 7
      %p140 = scmp.ne.s32.totalorder %s135, %s137
      %p141 = scmp.eq.s32.totalorder %s19, 0
      %p142 = por %p140, %p141
      %p143 = scmp.ne.s32.totalorder %s135, %s137
      %p144 = scmp.eq.s32.totalorder %s24, 7
      %p145 = por %p143, %p144
      %p146 = scmp.ne.s32.totalorder %s137, %s138
      %p147 = scmp.eq.s32.totalorder %s24, 0
      %p148 = por %p146, %p147
      %p149 = scmp.ne.s32.totalorder %s137, %s138
      %p150 = scmp.eq.s32.totalorder %s25, 7
      %p151 = por %p149, %p150
      %p153 = scmp.ne.s32.totalorder %s138, %s152
      %p154 = scmp.eq.s32.totalorder %s25, 0
      %p155 = por %p153, %p154
      %s156 = ssub.s32 %s26, %s45
      %s157 = ssub.s32 %s27, %s41
      %s158 = sor.u32 %s156, %s157
      %p159 = scmp.eq.s32.totalorder %s158, 0
      %s161 = sadd.s32 %s160, 1
      %s162 = scalar_select %p159, %s160, %s161
      %p165 = pneg %p159
      %p166 = scmp.eq.s32.totalorder %s19, 7
      %p167 = por %p165, %p166
      %p168 = scmp.ne.s32.totalorder %s160, %s163
      %p169 = scmp.eq.s32.totalorder %s19, 0
      %p170 = por %p168, %p169
      %p171 = scmp.ne.s32.totalorder %s160, %s163
      %p172 = scmp.eq.s32.totalorder %s24, 7
      %p173 = por %p171, %p172
      %p174 = scmp.ne.s32.totalorder %s163, %s164
      %p175 = scmp.eq.s32.totalorder %s24, 0
      %p176 = por %p174, %p175
      %p177 = scmp.ne.s32.totalorder %s163, %s164
      %p178 = scmp.eq.s32.totalorder %s25, 7
      %p179 = por %p177, %p178
      %p181 = scmp.ne.s32.totalorder %s164, %s180
      %p182 = scmp.eq.s32.totalorder %s25, 0
      %p183 = por %p181, %p182
      %p184 = scmp.le.s32.totalorder 1, %s19
      %p185 = scmp.lt.s32.totalorder %s19, 9
      %p186 = pnand %p184, %p185
      %p187 = pneg %p186
      // Predicated region
      $region9: #{tpu_custom_call.1} parent=5 // pred_check
        _
      $region10: #{tpu_custom_call.1} parent=5 // pred_check_branch
        %189 = sbr.rel (%p186) target = $region12
      $region11: #{tpu_custom_call.1} parent=5 // pred_region
        %s190 = ssub.s32 %s19, 1
        // Predicated region
        $region13: #{tpu_custom_call.1} parent=11 // pred_check
          %p191 = pneg %p85
        $region14: #{tpu_custom_call.1} parent=11 // pred_check_branch
          %193 = sbr.rel (%p191) target = $region16
        $region15: #{tpu_custom_call.1} parent=11 // pred_region
          %s195 = ssub.s32 32768, 32768
          %196 = vsyncadd [#allocation7], %s195
          %s197 = sshll.u32 [#allocation6], 4
          %s198 = int_to_ptr.vmem [resolvable:$true] %s197
          %203 = dma.hbm_to_vmem [thread:$0]  %s1, 32768, %s198, [#allocation7], 256, 256, 16
        $region16: #{tpu_custom_call.1} parent=11 // pred_fallthru
          _
        // Predicated region
        $region17: #{tpu_custom_call.1} parent=11 // pred_check
          %p204 = pneg %p106
        $region18: #{tpu_custom_call.1} parent=11 // pred_check_branch
          %206 = sbr.rel (%p204) target = $region20
        $region19: #{tpu_custom_call.1} parent=11 // pred_region
          %s208 = ssub.s32 32768, 32768
          %209 = vsyncadd [#allocation7], %s208
          %s210 = sshll.u32 [#allocation8], 4
          %s211 = int_to_ptr.vmem [resolvable:$true] %s210
          %216 = dma.hbm_to_vmem [thread:$0]  %s2, 32768, %s211, [#allocation7], 256, 256, 16
        $region20: #{tpu_custom_call.1} parent=11 // pred_fallthru
          _
        // Predicated region
        $region21: #{tpu_custom_call.1} parent=11 // pred_check
          %p217 = pneg %p127
        $region22: #{tpu_custom_call.1} parent=11 // pred_check_branch
          %219 = sbr.rel (%p217) target = $region24
        $region23: #{tpu_custom_call.1} parent=11 // pred_region
          %s221 = ssub.s32 32768, 32768
          %222 = vsyncadd [#allocation10], %s221
          %s223 = sshll.u32 [#allocation9], 4
          %s224 = int_to_ptr.vmem [resolvable:$true] %s223
          %229 = dma.hbm_to_vmem [thread:$0]  %s3, 32768, %s224, [#allocation10], 256, 256, 16
        $region24: #{tpu_custom_call.1} parent=11 // pred_fallthru
          _
        // Predicated region
        $region25: #{tpu_custom_call.1} parent=11 // pred_check
          %p230 = pneg %p148
        $region26: #{tpu_custom_call.1} parent=11 // pred_check_branch
          %232 = sbr.rel (%p230) target = $region28
        $region27: #{tpu_custom_call.1} parent=11 // pred_region
          %s234 = ssub.s32 32768, 32768
          %235 = vsyncadd [#allocation10], %s234
          %s236 = sshll.u32 [#allocation11], 4
          %s237 = int_to_ptr.vmem [resolvable:$true] %s236
          %242 = dma.hbm_to_vmem [thread:$0]  %s4, 32768, %s237, [#allocation10], 512, 512, 32
        $region28: #{tpu_custom_call.1} parent=11 // pred_fallthru
          _
      $region12: #{tpu_custom_call.1} parent=5 // pred_fallthru
        _
      %p243 = scmp.lt.s32.totalorder %s19, 8
      // Predicated region
      $region29: #{tpu_custom_call.1} parent=5 // pred_check
        %p244 = pneg %p243
      $region30: #{tpu_custom_call.1} parent=5 // pred_check_branch
        %246 = sbr.rel (%p244) target = $region32
      $region31: #{tpu_custom_call.1} parent=5 // pred_region
        // Predicated region
        $region33: #{tpu_custom_call.1} parent=31 // pred_check
          %p247 = pneg %p58
        $region34: #{tpu_custom_call.1} parent=31 // pred_check_branch
          %249 = sbr.rel (%p247) target = $region36
        $region35: #{tpu_custom_call.1} parent=31 // pred_region
          %s250 = sand.u32 %s48, 1
          %s251 = scalar_lea.sflag [#allocation4], %s250
          %s252 = sand.u32 %s48, 1
          %s253 = smul.addr %s252, 512
          %s254 = scalar_lea.vmem [#allocation3], %s253
          %s256 = ssub.s32 8192, 8192
          %257 = vsyncadd %s251, %s256
          %s258 = smul.addr %s26, 64
          %s259 = smul.addr %s258, 128
          %s260 = scalar_lea.hbm %s0, %s259
          %s261 = sshll.u32 %s254, 4
          %s262 = int_to_ptr.vmem [resolvable:$true] %s261
          %267 = dma.hbm_to_vmem [thread:$0]  %s260, 8192, %s262, %s251, 512, 512, 32
        $region36: #{tpu_custom_call.1} parent=31 // pred_fallthru
          _
      $region32: #{tpu_custom_call.1} parent=5 // pred_fallthru
        _
      %p268 = scmp.le.s32.totalorder 1, %s19
      %p269 = scmp.lt.s32.totalorder %s19, 9
      %p270 = pnand %p268, %p269
      %p271 = pneg %p270
      // Predicated region
      $region37: #{tpu_custom_call.1} parent=5 // pred_check
        _
      $region38: #{tpu_custom_call.1} parent=5 // pred_check_branch
        %273 = sbr.rel (%p270) target = $region40
      $region39: #{tpu_custom_call.1} parent=5 // pred_region
        %s274 = ssub.s32 %s19, 1
        %s275 = sand.u32 %s51, 1
        %s276 = scalar_lea.sflag [#allocation4], %s275
        %s277 = sand.u32 %s51, 1
        %s278 = smul.addr %s277, 512
        %s279 = scalar_lea.vmem [#allocation3], %s278
        // Predicated region
        $region41: #{tpu_custom_call.1} parent=39 // pred_check
          %p280 = pneg %p64
        $region42: #{tpu_custom_call.1} parent=39 // pred_check_branch
          %282 = sbr.rel (%p280) target = $region44
        $region43: #{tpu_custom_call.1} parent=39 // pred_region
          %283 = dma.done %s276, 8192
        $region44: #{tpu_custom_call.1} parent=39 // pred_fallthru
          _
        // Predicated region
        $region45: #{tpu_custom_call.1} parent=39 // pred_check
          %p284 = pneg %p85
        $region46: #{tpu_custom_call.1} parent=39 // pred_check_branch
          %286 = sbr.rel (%p284) target = $region48
        $region47: #{tpu_custom_call.1} parent=39 // pred_region
          %287 = dma.done [#allocation7], 32768
        $region48: #{tpu_custom_call.1} parent=39 // pred_fallthru
          _
        // Predicated region
        $region49: #{tpu_custom_call.1} parent=39 // pred_check
          %p288 = pneg %p106
        $region50: #{tpu_custom_call.1} parent=39 // pred_check_branch
          %290 = sbr.rel (%p288) target = $region52
        $region51: #{tpu_custom_call.1} parent=39 // pred_region
          %291 = dma.done [#allocation7], 32768
        $region52: #{tpu_custom_call.1} parent=39 // pred_fallthru
          _
        // Predicated region
        $region53: #{tpu_custom_call.1} parent=39 // pred_check
          %p292 = pneg %p127
        $region54: #{tpu_custom_call.1} parent=39 // pred_check_branch
          %294 = sbr.rel (%p292) target = $region56
        $region55: #{tpu_custom_call.1} parent=39 // pred_region
          %295 = dma.done [#allocation10], 32768
        $region56: #{tpu_custom_call.1} parent=39 // pred_fallthru
          _
        // Predicated region
        $region57: #{tpu_custom_call.1} parent=39 // pred_check
          %p296 = pneg %p148
        $region58: #{tpu_custom_call.1} parent=39 // pred_check_branch
          %298 = sbr.rel (%p296) target = $region60
        $region59: #{tpu_custom_call.1} parent=39 // pred_region
          %299 = dma.done [#allocation10], 32768
        $region60: #{tpu_custom_call.1} parent=39 // pred_fallthru
          _
        %s300 = sand.u32 %s51, 1
        %s301 = scalar_lea.sflag [#allocation4], %s300
        %s302 = sand.u32 %s51, 1
        %s303 = smul.addr %s302, 512
        %s304 = scalar_lea.vmem [#allocation3], %s303
        %p305 = pneg %p64
        %p306 = pneg %p61
        %p307 = pneg %p85
        %p308 = pneg %p82
        %p309 = pneg %p106
        %p310 = pneg %p103
        %p311 = pneg %p127
        %p312 = pneg %p124
        %p313 = pneg %p148
        %p314 = pneg %p145
        %p315 = pneg %p176
        %p316 = pneg %p173
        %s317 = sand.u32 %s163, 1
        %s318 = scalar_lea.sflag [#allocation5], %s317
        %s319 = sand.u32 %s163, 1
        %s320 = smul.addr %s319, 256
        %s321 = scalar_lea.vmem [#allocation12], %s320
        %s322 = smul.u32 8, %s30
        %p323 = scmp.eq.s32.totalorder %s31, 0
        // Predicated region
        $region61: #{tpu_custom_call.1} parent=39 // pred_check
          %p324 = pneg %p323
        $region62: #{tpu_custom_call.1} parent=39 // pred_check_branch
          %326 = sbr.rel (%p324) target = $region64
        $region63: #{tpu_custom_call.1} parent=39 // pred_region
          %327 = vst [vmem:[#allocation2] sm:$0xff] 0.0
          %328 = vst [vmem:[#allocation2 + $0x8] sm:$0xff] 0.0
          %329 = vst [vmem:[#allocation2 + $0x10] sm:$0xff] 0.0
          %330 = vst [vmem:[#allocation2 + $0x18] sm:$0xff] 0.0
          %331 = vst [vmem:[#allocation2 + $0x20] sm:$0xff] 0.0
          %332 = vst [vmem:[#allocation2 + $0x28] sm:$0xff] 0.0
          %333 = vst [vmem:[#allocation2 + $0x30] sm:$0xff] 0.0
          %334 = vst [vmem:[#allocation2 + $0x38] sm:$0xff] 0.0
          %335 = vst [vmem:[#allocation2 + $0x40] sm:$0xff] 0.0
          %336 = vst [vmem:[#allocation2 + $0x48] sm:$0xff] 0.0
          %337 = vst [vmem:[#allocation2 + $0x50] sm:$0xff] 0.0
          %338 = vst [vmem:[#allocation2 + $0x58] sm:$0xff] 0.0
          %339 = vst [vmem:[#allocation2 + $0x60] sm:$0xff] 0.0
          %340 = vst [vmem:[#allocation2 + $0x68] sm:$0xff] 0.0
          %341 = vst [vmem:[#allocation2 + $0x70] sm:$0xff] 0.0
          %342 = vst [vmem:[#allocation2 + $0x78] sm:$0xff] 0.0
          %343 = vst [vmem:[#allocation2 + $0x80] sm:$0xff] 0.0
          %344 = vst [vmem:[#allocation2 + $0x88] sm:$0xff] 0.0
          %345 = vst [vmem:[#allocation2 + $0x90] sm:$0xff] 0.0
          %346 = vst [vmem:[#allocation2 + $0x98] sm:$0xff] 0.0
          %347 = vst [vmem:[#allocation2 + $0xa0] sm:$0xff] 0.0
          %348 = vst [vmem:[#allocation2 + $0xa8] sm:$0xff] 0.0
          %349 = vst [vmem:[#allocation2 + $0xb0] sm:$0xff] 0.0
          %350 = vst [vmem:[#allocation2 + $0xb8] sm:$0xff] 0.0
          %351 = vst [vmem:[#allocation2 + $0xc0] sm:$0xff] 0.0
          %352 = vst [vmem:[#allocation2 + $0xc8] sm:$0xff] 0.0
          %353 = vst [vmem:[#allocation2 + $0xd0] sm:$0xff] 0.0
          %354 = vst [vmem:[#allocation2 + $0xd8] sm:$0xff] 0.0
          %355 = vst [vmem:[#allocation2 + $0xe0] sm:$0xff] 0.0
          %356 = vst [vmem:[#allocation2 + $0xe8] sm:$0xff] 0.0
          %357 = vst [vmem:[#allocation2 + $0xf0] sm:$0xff] 0.0
          %358 = vst [vmem:[#allocation2 + $0xf8] sm:$0xff] 0.0
        $region64: #{tpu_custom_call.1} parent=39 // pred_fallthru
          _
        %v359 = vld [vmem:[%s279] sm:$0xff]
        %v360 = vld [vmem:[%s279 + $0x8] sm:$0xff]
        %v361 = vld [vmem:[%s279 + $0x10] sm:$0xff]
        %v362 = vld [vmem:[%s279 + $0x18] sm:$0xff]
        %v363 = vld [vmem:[%s279 + $0x20] sm:$0xff]
        %v364 = vld [vmem:[%s279 + $0x28] sm:$0xff]
        %v365 = vld [vmem:[%s279 + $0x30] sm:$0xff]
        %v366 = vld [vmem:[%s279 + $0x38] sm:$0xff]
        %v367 = vld [vmem:[%s279 + $0x40] sm:$0xff]
        %v368 = vld [vmem:[%s279 + $0x48] sm:$0xff]
        %v369 = vld [vmem:[%s279 + $0x50] sm:$0xff]
        %v370 = vld [vmem:[%s279 + $0x58] sm:$0xff]
        %v371 = vld [vmem:[%s279 + $0x60] sm:$0xff]
        %v372 = vld [vmem:[%s279 + $0x68] sm:$0xff]
        %v373 = vld [vmem:[%s279 + $0x70] sm:$0xff]
        %v374 = vld [vmem:[%s279 + $0x78] sm:$0xff]
        %v375 = vld [vmem:[%s279 + $0x80] sm:$0xff]
        %v376 = vld [vmem:[%s279 + $0x88] sm:$0xff]
        %v377 = vld [vmem:[%s279 + $0x90] sm:$0xff]
        %v378 = vld [vmem:[%s279 + $0x98] sm:$0xff]
        %v379 = vld [vmem:[%s279 + $0xa0] sm:$0xff]
        %v380 = vld [vmem:[%s279 + $0xa8] sm:$0xff]
        %v381 = vld [vmem:[%s279 + $0xb0] sm:$0xff]
        %v382 = vld [vmem:[%s279 + $0xb8] sm:$0xff]
        %v383 = vld [vmem:[%s279 + $0xc0] sm:$0xff]
        %v384 = vld [vmem:[%s279 + $0xc8] sm:$0xff]
        %v385 = vld [vmem:[%s279 + $0xd0] sm:$0xff]
        %v386 = vld [vmem:[%s279 + $0xd8] sm:$0xff]
        %v387 = vld [vmem:[%s279 + $0xe0] sm:$0xff]
        %v388 = vld [vmem:[%s279 + $0xe8] sm:$0xff]
        %v389 = vld [vmem:[%s279 + $0xf0] sm:$0xff]
        %v390 = vld [vmem:[%s279 + $0xf8] sm:$0xff]
        %v391 = vld [vmem:[%s279 + $0x100] sm:$0xff]
        %v392 = vld [vmem:[%s279 + $0x108] sm:$0xff]
        %v393 = vld [vmem:[%s279 + $0x110] sm:$0xff]
        %v394 = vld [vmem:[%s279 + $0x118] sm:$0xff]
        %v395 = vld [vmem:[%s279 + $0x120] sm:$0xff]
        %v396 = vld [vmem:[%s279 + $0x128] sm:$0xff]
        %v397 = vld [vmem:[%s279 + $0x130] sm:$0xff]
        %v398 = vld [vmem:[%s279 + $0x138] sm:$0xff]
        %v399 = vld [vmem:[%s279 + $0x140] sm:$0xff]
        %v400 = vld [vmem:[%s279 + $0x148] sm:$0xff]
        %v401 = vld [vmem:[%s279 + $0x150] sm:$0xff]
        %v402 = vld [vmem:[%s279 + $0x158] sm:$0xff]
        %v403 = vld [vmem:[%s279 + $0x160] sm:$0xff]
        %v404 = vld [vmem:[%s279 + $0x168] sm:$0xff]
        %v405 = vld [vmem:[%s279 + $0x170] sm:$0xff]
        %v406 = vld [vmem:[%s279 + $0x178] sm:$0xff]
        %v407 = vld [vmem:[%s279 + $0x180] sm:$0xff]
        %v408 = vld [vmem:[%s279 + $0x188] sm:$0xff]
        %v409 = vld [vmem:[%s279 + $0x190] sm:$0xff]
        %v410 = vld [vmem:[%s279 + $0x198] sm:$0xff]
        %v411 = vld [vmem:[%s279 + $0x1a0] sm:$0xff]
        %v412 = vld [vmem:[%s279 + $0x1a8] sm:$0xff]
        %v413 = vld [vmem:[%s279 + $0x1b0] sm:$0xff]
        %v414 = vld [vmem:[%s279 + $0x1b8] sm:$0xff]
        %v415 = vld [vmem:[%s279 + $0x1c0] sm:$0xff]
        %v416 = vld [vmem:[%s279 + $0x1c8] sm:$0xff]
        %v417 = vld [vmem:[%s279 + $0x1d0] sm:$0xff]
        %v418 = vld [vmem:[%s279 + $0x1d8] sm:$0xff]
        %v419 = vld [vmem:[%s279 + $0x1e0] sm:$0xff]
        %v420 = vld [vmem:[%s279 + $0x1e8] sm:$0xff]
        %v421 = vld [vmem:[%s279 + $0x1f0] sm:$0xff]
        %v422 = vld [vmem:[%s279 + $0x1f8] sm:$0xff]
        %s423 = smul.u32 %s30, 64
        %s424 = sshra.s32 %s423, 3
        %s425 = sand.u32 %s423, 7
        %s426 = smul.u32 %s424, 4
        %s427 = smul.addr %s426, 8
        %s428 = scalar_lea.vmem %s279, %s427 [#allocation3]
        %v429 = vld [vmem:[%s428] sm:$0xff]
        %v430 = vld [vmem:[%s428 + $0x8] sm:$0xff]
        %v431 = vld [vmem:[%s428 + $0x10] sm:$0xff]
        %v432 = vld [vmem:[%s428 + $0x18] sm:$0xff]
        %v433 = vld [vmem:[%s428 + $0x20] sm:$0xff]
        %v434 = vld [vmem:[%s428 + $0x28] sm:$0xff]
        %v435 = vld [vmem:[%s428 + $0x30] sm:$0xff]
        %v436 = vld [vmem:[%s428 + $0x38] sm:$0xff]
        %v437 = vld [vmem:[%s428 + $0x40] sm:$0xff]
        %v438 = vld [vmem:[%s428 + $0x48] sm:$0xff]
        %v439 = vld [vmem:[%s428 + $0x50] sm:$0xff]
        %v440 = vld [vmem:[%s428 + $0x58] sm:$0xff]
        %v441 = vld [vmem:[%s428 + $0x60] sm:$0xff]
        %v442 = vld [vmem:[%s428 + $0x68] sm:$0xff]
        %v443 = vld [vmem:[%s428 + $0x70] sm:$0xff]
        %v444 = vld [vmem:[%s428 + $0x78] sm:$0xff]
        %v445 = vld [vmem:[%s428 + $0x80] sm:$0xff]
        %v446 = vld [vmem:[%s428 + $0x88] sm:$0xff]
        %v447 = vld [vmem:[%s428 + $0x90] sm:$0xff]
        %v448 = vld [vmem:[%s428 + $0x98] sm:$0xff]
        %v449 = vld [vmem:[%s428 + $0xa0] sm:$0xff]
        %v450 = vld [vmem:[%s428 + $0xa8] sm:$0xff]
        %v451 = vld [vmem:[%s428 + $0xb0] sm:$0xff]
        %v452 = vld [vmem:[%s428 + $0xb8] sm:$0xff]
        %v453 = vld [vmem:[%s428 + $0xc0] sm:$0xff]
        %v454 = vld [vmem:[%s428 + $0xc8] sm:$0xff]
        %v455 = vld [vmem:[%s428 + $0xd0] sm:$0xff]
        %v456 = vld [vmem:[%s428 + $0xd8] sm:$0xff]
        %v457 = vld [vmem:[%s428 + $0xe0] sm:$0xff]
        %v458 = vld [vmem:[%s428 + $0xe8] sm:$0xff]
        %v459 = vld [vmem:[%s428 + $0xf0] sm:$0xff]
        %v460 = vld [vmem:[%s428 + $0xf8] sm:$0xff]
        %s461 = smul.u32 %s31, 128
        %s462 = smul.addr %s461, 8
        %s463 = scalar_lea.vmem [#allocation6], %s462
        %v464 = vld [vmem:[%s463] sm:$0xff]
        %v465 = vld [vmem:[%s463 + $0x8] sm:$0xff]
        %v466 = vld [vmem:[%s463 + $0x10] sm:$0xff]
        %v467 = vld [vmem:[%s463 + $0x18] sm:$0xff]
        %v468 = vld [vmem:[%s463 + $0x20] sm:$0xff]
        %v469 = vld [vmem:[%s463 + $0x28] sm:$0xff]
        %v470 = vld [vmem:[%s463 + $0x30] sm:$0xff]
        %v471 = vld [vmem:[%s463 + $0x38] sm:$0xff]
        %v472 = vld [vmem:[%s463 + $0x40] sm:$0xff]
        %v473 = vld [vmem:[%s463 + $0x48] sm:$0xff]
        %v474 = vld [vmem:[%s463 + $0x50] sm:$0xff]
        %v475 = vld [vmem:[%s463 + $0x58] sm:$0xff]
        %v476 = vld [vmem:[%s463 + $0x60] sm:$0xff]
        %v477 = vld [vmem:[%s463 + $0x68] sm:$0xff]
        %v478 = vld [vmem:[%s463 + $0x70] sm:$0xff]
        %v479 = vld [vmem:[%s463 + $0x78] sm:$0xff]
        %v480 = vld [vmem:[%s463 + $0x80] sm:$0xff]
        %v481 = vld [vmem:[%s463 + $0x88] sm:$0xff]
        %v482 = vld [vmem:[%s463 + $0x90] sm:$0xff]
        %v483 = vld [vmem:[%s463 + $0x98] sm:$0xff]
        %v484 = vld [vmem:[%s463 + $0xa0] sm:$0xff]
        %v485 = vld [vmem:[%s463 + $0xa8] sm:$0xff]
        %v486 = vld [vmem:[%s463 + $0xb0] sm:$0xff]
        %v487 = vld [vmem:[%s463 + $0xb8] sm:$0xff]
        %v488 = vld [vmem:[%s463 + $0xc0] sm:$0xff]
        %v489 = vld [vmem:[%s463 + $0xc8] sm:$0xff]
        %v490 = vld [vmem:[%s463 + $0xd0] sm:$0xff]
        %v491 = vld [vmem:[%s463 + $0xd8] sm:$0xff]
        %v492 = vld [vmem:[%s463 + $0xe0] sm:$0xff]
        %v493 = vld [vmem:[%s463 + $0xe8] sm:$0xff]
        %v494 = vld [vmem:[%s463 + $0xf0] sm:$0xff]
        %v495 = vld [vmem:[%s463 + $0xf8] sm:$0xff]
        %v496 = vld [vmem:[%s463 + $0x100] sm:$0xff]
        %v497 = vld [vmem:[%s463 + $0x108] sm:$0xff]
        %v498 = vld [vmem:[%s463 + $0x110] sm:$0xff]
        %v499 = vld [vmem:[%s463 + $0x118] sm:$0xff]
        %v500 = vld [vmem:[%s463 + $0x120] sm:$0xff]
        %v501 = vld [vmem:[%s463 + $0x128] sm:$0xff]
        %v502 = vld [vmem:[%s463 + $0x130] sm:$0xff]
        %v503 = vld [vmem:[%s463 + $0x138] sm:$0xff]
        %v504 = vld [vmem:[%s463 + $0x140] sm:$0xff]
        %v505 = vld [vmem:[%s463 + $0x148] sm:$0xff]
        %v506 = vld [vmem:[%s463 + $0x150] sm:$0xff]
        %v507 = vld [vmem:[%s463 + $0x158] sm:$0xff]
        %v508 = vld [vmem:[%s463 + $0x160] sm:$0xff]
        %v509 = vld [vmem:[%s463 + $0x168] sm:$0xff]
        %v510 = vld [vmem:[%s463 + $0x170] sm:$0xff]
        %v511 = vld [vmem:[%s463 + $0x178] sm:$0xff]
        %v512 = vld [vmem:[%s463 + $0x180] sm:$0xff]
        %v513 = vld [vmem:[%s463 + $0x188] sm:$0xff]
        %v514 = vld [vmem:[%s463 + $0x190] sm:$0xff]
        %v515 = vld [vmem:[%s463 + $0x198] sm:$0xff]
        %v516 = vld [vmem:[%s463 + $0x1a0] sm:$0xff]
        %v517 = vld [vmem:[%s463 + $0x1a8] sm:$0xff]
        %v518 = vld [vmem:[%s463 + $0x1b0] sm:$0xff]
        %v519 = vld [vmem:[%s463 + $0x1b8] sm:$0xff]
        %v520 = vld [vmem:[%s463 + $0x1c0] sm:$0xff]
        %v521 = vld [vmem:[%s463 + $0x1c8] sm:$0xff]
        %v522 = vld [vmem:[%s463 + $0x1d0] sm:$0xff]
        %v523 = vld [vmem:[%s463 + $0x1d8] sm:$0xff]
        %v524 = vld [vmem:[%s463 + $0x1e0] sm:$0xff]
        %v525 = vld [vmem:[%s463 + $0x1e8] sm:$0xff]
        %v526 = vld [vmem:[%s463 + $0x1f0] sm:$0xff]
        %v527 = vld [vmem:[%s463 + $0x1f8] sm:$0xff]
        %v528 = vld [vmem:[%s463 + $0x200] sm:$0xff]
        %v529 = vld [vmem:[%s463 + $0x208] sm:$0xff]
        %v530 = vld [vmem:[%s463 + $0x210] sm:$0xff]
        %v531 = vld [vmem:[%s463 + $0x218] sm:$0xff]
        %v532 = vld [vmem:[%s463 + $0x220] sm:$0xff]
        %v533 = vld [vmem:[%s463 + $0x228] sm:$0xff]
        %v534 = vld [vmem:[%s463 + $0x230] sm:$0xff]
        %v535 = vld [vmem:[%s463 + $0x238] sm:$0xff]
        %v536 = vld [vmem:[%s463 + $0x240] sm:$0xff]
        %v537 = vld [vmem:[%s463 + $0x248] sm:$0xff]
        %v538 = vld [vmem:[%s463 + $0x250] sm:$0xff]
        %v539 = vld [vmem:[%s463 + $0x258] sm:$0xff]
        %v540 = vld [vmem:[%s463 + $0x260] sm:$0xff]
        %v541 = vld [vmem:[%s463 + $0x268] sm:$0xff]
        %v542 = vld [vmem:[%s463 + $0x270] sm:$0xff]
        %v543 = vld [vmem:[%s463 + $0x278] sm:$0xff]
        %v544 = vld [vmem:[%s463 + $0x280] sm:$0xff]
        %v545 = vld [vmem:[%s463 + $0x288] sm:$0xff]
        %v546 = vld [vmem:[%s463 + $0x290] sm:$0xff]
        %v547 = vld [vmem:[%s463 + $0x298] sm:$0xff]
        %v548 = vld [vmem:[%s463 + $0x2a0] sm:$0xff]
        %v549 = vld [vmem:[%s463 + $0x2a8] sm:$0xff]
        %v550 = vld [vmem:[%s463 + $0x2b0] sm:$0xff]
        %v551 = vld [vmem:[%s463 + $0x2b8] sm:$0xff]
        %v552 = vld [vmem:[%s463 + $0x2c0] sm:$0xff]
        %v553 = vld [vmem:[%s463 + $0x2c8] sm:$0xff]
        %v554 = vld [vmem:[%s463 + $0x2d0] sm:$0xff]
        %v555 = vld [vmem:[%s463 + $0x2d8] sm:$0xff]
        %v556 = vld [vmem:[%s463 + $0x2e0] sm:$0xff]
        %v557 = vld [vmem:[%s463 + $0x2e8] sm:$0xff]
        %v558 = vld [vmem:[%s463 + $0x2f0] sm:$0xff]
        %v559 = vld [vmem:[%s463 + $0x2f8] sm:$0xff]
        %v560 = vld [vmem:[%s463 + $0x300] sm:$0xff]
        %v561 = vld [vmem:[%s463 + $0x308] sm:$0xff]
        %v562 = vld [vmem:[%s463 + $0x310] sm:$0xff]
        %v563 = vld [vmem:[%s463 + $0x318] sm:$0xff]
        %v564 = vld [vmem:[%s463 + $0x320] sm:$0xff]
        %v565 = vld [vmem:[%s463 + $0x328] sm:$0xff]
        %v566 = vld [vmem:[%s463 + $0x330] sm:$0xff]
        %v567 = vld [vmem:[%s463 + $0x338] sm:$0xff]
        %v568 = vld [vmem:[%s463 + $0x340] sm:$0xff]
        %v569 = vld [vmem:[%s463 + $0x348] sm:$0xff]
        %v570 = vld [vmem:[%s463 + $0x350] sm:$0xff]
        %v571 = vld [vmem:[%s463 + $0x358] sm:$0xff]
        %v572 = vld [vmem:[%s463 + $0x360] sm:$0xff]
        %v573 = vld [vmem:[%s463 + $0x368] sm:$0xff]
        %v574 = vld [vmem:[%s463 + $0x370] sm:$0xff]
        %v575 = vld [vmem:[%s463 + $0x378] sm:$0xff]
        %v576 = vld [vmem:[%s463 + $0x380] sm:$0xff]
        %v577 = vld [vmem:[%s463 + $0x388] sm:$0xff]
        %v578 = vld [vmem:[%s463 + $0x390] sm:$0xff]
        %v579 = vld [vmem:[%s463 + $0x398] sm:$0xff]
        %v580 = vld [vmem:[%s463 + $0x3a0] sm:$0xff]
        %v581 = vld [vmem:[%s463 + $0x3a8] sm:$0xff]
        %v582 = vld [vmem:[%s463 + $0x3b0] sm:$0xff]
        %v583 = vld [vmem:[%s463 + $0x3b8] sm:$0xff]
        %v584 = vld [vmem:[%s463 + $0x3c0] sm:$0xff]
        %v585 = vld [vmem:[%s463 + $0x3c8] sm:$0xff]
        %v586 = vld [vmem:[%s463 + $0x3d0] sm:$0xff]
        %v587 = vld [vmem:[%s463 + $0x3d8] sm:$0xff]
        %v588 = vld [vmem:[%s463 + $0x3e0] sm:$0xff]
        %v589 = vld [vmem:[%s463 + $0x3e8] sm:$0xff]
        %v590 = vld [vmem:[%s463 + $0x3f0] sm:$0xff]
        %v591 = vld [vmem:[%s463 + $0x3f8] sm:$0xff]
        %s592 = smul.addr %s461, 8
        %s593 = scalar_lea.vmem [#allocation8], %s592
        %v594 = vld [vmem:[%s593] sm:$0xff]
        %v595 = vld [vmem:[%s593 + $0x8] sm:$0xff]
        %v596 = vld [vmem:[%s593 + $0x10] sm:$0xff]
        %v597 = vld [vmem:[%s593 + $0x18] sm:$0xff]
        %v598 = vld [vmem:[%s593 + $0x20] sm:$0xff]
        %v599 = vld [vmem:[%s593 + $0x28] sm:$0xff]
        %v600 = vld [vmem:[%s593 + $0x30] sm:$0xff]
        %v601 = vld [vmem:[%s593 + $0x38] sm:$0xff]
        %v602 = vld [vmem:[%s593 + $0x40] sm:$0xff]
        %v603 = vld [vmem:[%s593 + $0x48] sm:$0xff]
        %v604 = vld [vmem:[%s593 + $0x50] sm:$0xff]
        %v605 = vld [vmem:[%s593 + $0x58] sm:$0xff]
        %v606 = vld [vmem:[%s593 + $0x60] sm:$0xff]
        %v607 = vld [vmem:[%s593 + $0x68] sm:$0xff]
        %v608 = vld [vmem:[%s593 + $0x70] sm:$0xff]
        %v609 = vld [vmem:[%s593 + $0x78] sm:$0xff]
        %v610 = vld [vmem:[%s593 + $0x80] sm:$0xff]
        %v611 = vld [vmem:[%s593 + $0x88] sm:$0xff]
        %v612 = vld [vmem:[%s593 + $0x90] sm:$0xff]
        %v613 = vld [vmem:[%s593 + $0x98] sm:$0xff]
        %v614 = vld [vmem:[%s593 + $0xa0] sm:$0xff]
        %v615 = vld [vmem:[%s593 + $0xa8] sm:$0xff]
        %v616 = vld [vmem:[%s593 + $0xb0] sm:$0xff]
        %v617 = vld [vmem:[%s593 + $0xb8] sm:$0xff]
        %v618 = vld [vmem:[%s593 + $0xc0] sm:$0xff]
        %v619 = vld [vmem:[%s593 + $0xc8] sm:$0xff]
        %v620 = vld [vmem:[%s593 + $0xd0] sm:$0xff]
        %v621 = vld [vmem:[%s593 + $0xd8] sm:$0xff]
        %v622 = vld [vmem:[%s593 + $0xe0] sm:$0xff]
        %v623 = vld [vmem:[%s593 + $0xe8] sm:$0xff]
        %v624 = vld [vmem:[%s593 + $0xf0] sm:$0xff]
        %v625 = vld [vmem:[%s593 + $0xf8] sm:$0xff]
        %v626 = vld [vmem:[%s593 + $0x100] sm:$0xff]
        %v627 = vld [vmem:[%s593 + $0x108] sm:$0xff]
        %v628 = vld [vmem:[%s593 + $0x110] sm:$0xff]
        %v629 = vld [vmem:[%s593 + $0x118] sm:$0xff]
        %v630 = vld [vmem:[%s593 + $0x120] sm:$0xff]
        %v631 = vld [vmem:[%s593 + $0x128] sm:$0xff]
        %v632 = vld [vmem:[%s593 + $0x130] sm:$0xff]
        %v633 = vld [vmem:[%s593 + $0x138] sm:$0xff]
        %v634 = vld [vmem:[%s593 + $0x140] sm:$0xff]
        %v635 = vld [vmem:[%s593 + $0x148] sm:$0xff]
        %v636 = vld [vmem:[%s593 + $0x150] sm:$0xff]
        %v637 = vld [vmem:[%s593 + $0x158] sm:$0xff]
        %v638 = vld [vmem:[%s593 + $0x160] sm:$0xff]
        %v639 = vld [vmem:[%s593 + $0x168] sm:$0xff]
        %v640 = vld [vmem:[%s593 + $0x170] sm:$0xff]
        %v641 = vld [vmem:[%s593 + $0x178] sm:$0xff]
        %v642 = vld [vmem:[%s593 + $0x180] sm:$0xff]
        %v643 = vld [vmem:[%s593 + $0x188] sm:$0xff]
        %v644 = vld [vmem:[%s593 + $0x190] sm:$0xff]
        %v645 = vld [vmem:[%s593 + $0x198] sm:$0xff]
        %v646 = vld [vmem:[%s593 + $0x1a0] sm:$0xff]
        %v647 = vld [vmem:[%s593 + $0x1a8] sm:$0xff]
        %v648 = vld [vmem:[%s593 + $0x1b0] sm:$0xff]
        %v649 = vld [vmem:[%s593 + $0x1b8] sm:$0xff]
        %v650 = vld [vmem:[%s593 + $0x1c0] sm:$0xff]
        %v651 = vld [vmem:[%s593 + $0x1c8] sm:$0xff]
        %v652 = vld [vmem:[%s593 + $0x1d0] sm:$0xff]
        %v653 = vld [vmem:[%s593 + $0x1d8] sm:$0xff]
        %v654 = vld [vmem:[%s593 + $0x1e0] sm:$0xff]
        %v655 = vld [vmem:[%s593 + $0x1e8] sm:$0xff]
        %v656 = vld [vmem:[%s593 + $0x1f0] sm:$0xff]
        %v657 = vld [vmem:[%s593 + $0x1f8] sm:$0xff]
        %v658 = vld [vmem:[%s593 + $0x200] sm:$0xff]
        %v659 = vld [vmem:[%s593 + $0x208] sm:$0xff]
        %v660 = vld [vmem:[%s593 + $0x210] sm:$0xff]
        %v661 = vld [vmem:[%s593 + $0x218] sm:$0xff]
        %v662 = vld [vmem:[%s593 + $0x220] sm:$0xff]
        %v663 = vld [vmem:[%s593 + $0x228] sm:$0xff]
        %v664 = vld [vmem:[%s593 + $0x230] sm:$0xff]
        %v665 = vld [vmem:[%s593 + $0x238] sm:$0xff]
        %v666 = vld [vmem:[%s593 + $0x240] sm:$0xff]
        %v667 = vld [vmem:[%s593 + $0x248] sm:$0xff]
        %v668 = vld [vmem:[%s593 + $0x250] sm:$0xff]
        %v669 = vld [vmem:[%s593 + $0x258] sm:$0xff]
        %v670 = vld [vmem:[%s593 + $0x260] sm:$0xff]
        %v671 = vld [vmem:[%s593 + $0x268] sm:$0xff]
        %v672 = vld [vmem:[%s593 + $0x270] sm:$0xff]
        %v673 = vld [vmem:[%s593 + $0x278] sm:$0xff]
        %v674 = vld [vmem:[%s593 + $0x280] sm:$0xff]
        %v675 = vld [vmem:[%s593 + $0x288] sm:$0xff]
        %v676 = vld [vmem:[%s593 + $0x290] sm:$0xff]
        %v677 = vld [vmem:[%s593 + $0x298] sm:$0xff]
        %v678 = vld [vmem:[%s593 + $0x2a0] sm:$0xff]
        %v679 = vld [vmem:[%s593 + $0x2a8] sm:$0xff]
        %v680 = vld [vmem:[%s593 + $0x2b0] sm:$0xff]
        %v681 = vld [vmem:[%s593 + $0x2b8] sm:$0xff]
        %v682 = vld [vmem:[%s593 + $0x2c0] sm:$0xff]
        %v683 = vld [vmem:[%s593 + $0x2c8] sm:$0xff]
        %v684 = vld [vmem:[%s593 + $0x2d0] sm:$0xff]
        %v685 = vld [vmem:[%s593 + $0x2d8] sm:$0xff]
        %v686 = vld [vmem:[%s593 + $0x2e0] sm:$0xff]
        %v687 = vld [vmem:[%s593 + $0x2e8] sm:$0xff]
        %v688 = vld [vmem:[%s593 + $0x2f0] sm:$0xff]
        %v689 = vld [vmem:[%s593 + $0x2f8] sm:$0xff]
        %v690 = vld [vmem:[%s593 + $0x300] sm:$0xff]
        %v691 = vld [vmem:[%s593 + $0x308] sm:$0xff]
        %v692 = vld [vmem:[%s593 + $0x310] sm:$0xff]
        %v693 = vld [vmem:[%s593 + $0x318] sm:$0xff]
        %v694 = vld [vmem:[%s593 + $0x320] sm:$0xff]
        %v695 = vld [vmem:[%s593 + $0x328] sm:$0xff]
        %v696 = vld [vmem:[%s593 + $0x330] sm:$0xff]
        %v697 = vld [vmem:[%s593 + $0x338] sm:$0xff]
        %v698 = vld [vmem:[%s593 + $0x340] sm:$0xff]
        %v699 = vld [vmem:[%s593 + $0x348] sm:$0xff]
        %v700 = vld [vmem:[%s593 + $0x350] sm:$0xff]
        %v701 = vld [vmem:[%s593 + $0x358] sm:$0xff]
        %v702 = vld [vmem:[%s593 + $0x360] sm:$0xff]
        %v703 = vld [vmem:[%s593 + $0x368] sm:$0xff]
        %v704 = vld [vmem:[%s593 + $0x370] sm:$0xff]
        %v705 = vld [vmem:[%s593 + $0x378] sm:$0xff]
        %v706 = vld [vmem:[%s593 + $0x380] sm:$0xff]
        %v707 = vld [vmem:[%s593 + $0x388] sm:$0xff]
        %v708 = vld [vmem:[%s593 + $0x390] sm:$0xff]
        %v709 = vld [vmem:[%s593 + $0x398] sm:$0xff]
        %v710 = vld [vmem:[%s593 + $0x3a0] sm:$0xff]
        %v711 = vld [vmem:[%s593 + $0x3a8] sm:$0xff]
        %v712 = vld [vmem:[%s593 + $0x3b0] sm:$0xff]
        %v713 = vld [vmem:[%s593 + $0x3b8] sm:$0xff]
        %v714 = vld [vmem:[%s593 + $0x3c0] sm:$0xff]
        %v715 = vld [vmem:[%s593 + $0x3c8] sm:$0xff]
        %v716 = vld [vmem:[%s593 + $0x3d0] sm:$0xff]
        %v717 = vld [vmem:[%s593 + $0x3d8] sm:$0xff]
        %v718 = vld [vmem:[%s593 + $0x3e0] sm:$0xff]
        %v719 = vld [vmem:[%s593 + $0x3e8] sm:$0xff]
        %v720 = vld [vmem:[%s593 + $0x3f0] sm:$0xff]
        %v721 = vld [vmem:[%s593 + $0x3f8] sm:$0xff]
        %s722 = smul.addr %s461, 8
        %s723 = scalar_lea.vmem [#allocation9], %s722
        %v724 = vld [vmem:[%s723] sm:$0xff]
        %v725 = vld [vmem:[%s723 + $0x8] sm:$0xff]
        %v726 = vld [vmem:[%s723 + $0x10] sm:$0xff]
        %v727 = vld [vmem:[%s723 + $0x18] sm:$0xff]
        %v728 = vld [vmem:[%s723 + $0x20] sm:$0xff]
        %v729 = vld [vmem:[%s723 + $0x28] sm:$0xff]
        %v730 = vld [vmem:[%s723 + $0x30] sm:$0xff]
        %v731 = vld [vmem:[%s723 + $0x38] sm:$0xff]
        %v732 = vld [vmem:[%s723 + $0x40] sm:$0xff]
        %v733 = vld [vmem:[%s723 + $0x48] sm:$0xff]
        %v734 = vld [vmem:[%s723 + $0x50] sm:$0xff]
        %v735 = vld [vmem:[%s723 + $0x58] sm:$0xff]
        %v736 = vld [vmem:[%s723 + $0x60] sm:$0xff]
        %v737 = vld [vmem:[%s723 + $0x68] sm:$0xff]
        %v738 = vld [vmem:[%s723 + $0x70] sm:$0xff]
        %v739 = vld [vmem:[%s723 + $0x78] sm:$0xff]
        %v740 = vld [vmem:[%s723 + $0x80] sm:$0xff]
        %v741 = vld [vmem:[%s723 + $0x88] sm:$0xff]
        %v742 = vld [vmem:[%s723 + $0x90] sm:$0xff]
        %v743 = vld [vmem:[%s723 + $0x98] sm:$0xff]
        %v744 = vld [vmem:[%s723 + $0xa0] sm:$0xff]
        %v745 = vld [vmem:[%s723 + $0xa8] sm:$0xff]
        %v746 = vld [vmem:[%s723 + $0xb0] sm:$0xff]
        %v747 = vld [vmem:[%s723 + $0xb8] sm:$0xff]
        %v748 = vld [vmem:[%s723 + $0xc0] sm:$0xff]
        %v749 = vld [vmem:[%s723 + $0xc8] sm:$0xff]
        %v750 = vld [vmem:[%s723 + $0xd0] sm:$0xff]
        %v751 = vld [vmem:[%s723 + $0xd8] sm:$0xff]
        %v752 = vld [vmem:[%s723 + $0xe0] sm:$0xff]
        %v753 = vld [vmem:[%s723 + $0xe8] sm:$0xff]
        %v754 = vld [vmem:[%s723 + $0xf0] sm:$0xff]
        %v755 = vld [vmem:[%s723 + $0xf8] sm:$0xff]
        %v756 = vld [vmem:[%s723 + $0x100] sm:$0xff]
        %v757 = vld [vmem:[%s723 + $0x108] sm:$0xff]
        %v758 = vld [vmem:[%s723 + $0x110] sm:$0xff]
        %v759 = vld [vmem:[%s723 + $0x118] sm:$0xff]
        %v760 = vld [vmem:[%s723 + $0x120] sm:$0xff]
        %v761 = vld [vmem:[%s723 + $0x128] sm:$0xff]
        %v762 = vld [vmem:[%s723 + $0x130] sm:$0xff]
        %v763 = vld [vmem:[%s723 + $0x138] sm:$0xff]
        %v764 = vld [vmem:[%s723 + $0x140] sm:$0xff]
        %v765 = vld [vmem:[%s723 + $0x148] sm:$0xff]
        %v766 = vld [vmem:[%s723 + $0x150] sm:$0xff]
        %v767 = vld [vmem:[%s723 + $0x158] sm:$0xff]
        %v768 = vld [vmem:[%s723 + $0x160] sm:$0xff]
        %v769 = vld [vmem:[%s723 + $0x168] sm:$0xff]
        %v770 = vld [vmem:[%s723 + $0x170] sm:$0xff]
        %v771 = vld [vmem:[%s723 + $0x178] sm:$0xff]
        %v772 = vld [vmem:[%s723 + $0x180] sm:$0xff]
        %v773 = vld [vmem:[%s723 + $0x188] sm:$0xff]
        %v774 = vld [vmem:[%s723 + $0x190] sm:$0xff]
        %v775 = vld [vmem:[%s723 + $0x198] sm:$0xff]
        %v776 = vld [vmem:[%s723 + $0x1a0] sm:$0xff]
        %v777 = vld [vmem:[%s723 + $0x1a8] sm:$0xff]
        %v778 = vld [vmem:[%s723 + $0x1b0] sm:$0xff]
        %v779 = vld [vmem:[%s723 + $0x1b8] sm:$0xff]
        %v780 = vld [vmem:[%s723 + $0x1c0] sm:$0xff]
        %v781 = vld [vmem:[%s723 + $0x1c8] sm:$0xff]
        %v782 = vld [vmem:[%s723 + $0x1d0] sm:$0xff]
        %v783 = vld [vmem:[%s723 + $0x1d8] sm:$0xff]
        %v784 = vld [vmem:[%s723 + $0x1e0] sm:$0xff]
        %v785 = vld [vmem:[%s723 + $0x1e8] sm:$0xff]
        %v786 = vld [vmem:[%s723 + $0x1f0] sm:$0xff]
        %v787 = vld [vmem:[%s723 + $0x1f8] sm:$0xff]
        %v788 = vld [vmem:[%s723 + $0x200] sm:$0xff]
        %v789 = vld [vmem:[%s723 + $0x208] sm:$0xff]
        %v790 = vld [vmem:[%s723 + $0x210] sm:$0xff]
        %v791 = vld [vmem:[%s723 + $0x218] sm:$0xff]
        %v792 = vld [vmem:[%s723 + $0x220] sm:$0xff]
        %v793 = vld [vmem:[%s723 + $0x228] sm:$0xff]
        %v794 = vld [vmem:[%s723 + $0x230] sm:$0xff]
        %v795 = vld [vmem:[%s723 + $0x238] sm:$0xff]
        %v796 = vld [vmem:[%s723 + $0x240] sm:$0xff]
        %v797 = vld [vmem:[%s723 + $0x248] sm:$0xff]
        %v798 = vld [vmem:[%s723 + $0x250] sm:$0xff]
        %v799 = vld [vmem:[%s723 + $0x258] sm:$0xff]
        %v800 = vld [vmem:[%s723 + $0x260] sm:$0xff]
        %v801 = vld [vmem:[%s723 + $0x268] sm:$0xff]
        %v802 = vld [vmem:[%s723 + $0x270] sm:$0xff]
        %v803 = vld [vmem:[%s723 + $0x278] sm:$0xff]
        %v804 = vld [vmem:[%s723 + $0x280] sm:$0xff]
        %v805 = vld [vmem:[%s723 + $0x288] sm:$0xff]
        %v806 = vld [vmem:[%s723 + $0x290] sm:$0xff]
        %v807 = vld [vmem:[%s723 + $0x298] sm:$0xff]
        %v808 = vld [vmem:[%s723 + $0x2a0] sm:$0xff]
        %v809 = vld [vmem:[%s723 + $0x2a8] sm:$0xff]
        %v810 = vld [vmem:[%s723 + $0x2b0] sm:$0xff]
        %v811 = vld [vmem:[%s723 + $0x2b8] sm:$0xff]
        %v812 = vld [vmem:[%s723 + $0x2c0] sm:$0xff]
        %v813 = vld [vmem:[%s723 + $0x2c8] sm:$0xff]
        %v814 = vld [vmem:[%s723 + $0x2d0] sm:$0xff]
        %v815 = vld [vmem:[%s723 + $0x2d8] sm:$0xff]
        %v816 = vld [vmem:[%s723 + $0x2e0] sm:$0xff]
        %v817 = vld [vmem:[%s723 + $0x2e8] sm:$0xff]
        %v818 = vld [vmem:[%s723 + $0x2f0] sm:$0xff]
        %v819 = vld [vmem:[%s723 + $0x2f8] sm:$0xff]
        %v820 = vld [vmem:[%s723 + $0x300] sm:$0xff]
        %v821 = vld [vmem:[%s723 + $0x308] sm:$0xff]
        %v822 = vld [vmem:[%s723 + $0x310] sm:$0xff]
        %v823 = vld [vmem:[%s723 + $0x318] sm:$0xff]
        %v824 = vld [vmem:[%s723 + $0x320] sm:$0xff]
        %v825 = vld [vmem:[%s723 + $0x328] sm:$0xff]
        %v826 = vld [vmem:[%s723 + $0x330] sm:$0xff]
        %v827 = vld [vmem:[%s723 + $0x338] sm:$0xff]
        %v828 = vld [vmem:[%s723 + $0x340] sm:$0xff]
        %v829 = vld [vmem:[%s723 + $0x348] sm:$0xff]
        %v830 = vld [vmem:[%s723 + $0x350] sm:$0xff]
        %v831 = vld [vmem:[%s723 + $0x358] sm:$0xff]
        %v832 = vld [vmem:[%s723 + $0x360] sm:$0xff]
        %v833 = vld [vmem:[%s723 + $0x368] sm:$0xff]
        %v834 = vld [vmem:[%s723 + $0x370] sm:$0xff]
        %v835 = vld [vmem:[%s723 + $0x378] sm:$0xff]
        %v836 = vld [vmem:[%s723 + $0x380] sm:$0xff]
        %v837 = vld [vmem:[%s723 + $0x388] sm:$0xff]
        %v838 = vld [vmem:[%s723 + $0x390] sm:$0xff]
        %v839 = vld [vmem:[%s723 + $0x398] sm:$0xff]
        %v840 = vld [vmem:[%s723 + $0x3a0] sm:$0xff]
        %v841 = vld [vmem:[%s723 + $0x3a8] sm:$0xff]
        %v842 = vld [vmem:[%s723 + $0x3b0] sm:$0xff]
        %v843 = vld [vmem:[%s723 + $0x3b8] sm:$0xff]
        %v844 = vld [vmem:[%s723 + $0x3c0] sm:$0xff]
        %v845 = vld [vmem:[%s723 + $0x3c8] sm:$0xff]
        %v846 = vld [vmem:[%s723 + $0x3d0] sm:$0xff]
        %v847 = vld [vmem:[%s723 + $0x3d8] sm:$0xff]
        %v848 = vld [vmem:[%s723 + $0x3e0] sm:$0xff]
        %v849 = vld [vmem:[%s723 + $0x3e8] sm:$0xff]
        %v850 = vld [vmem:[%s723 + $0x3f0] sm:$0xff]
        %v851 = vld [vmem:[%s723 + $0x3f8] sm:$0xff]
        %s852 = smul.addr %s461, 8
        %s853 = scalar_lea.vmem [#allocation11], %s852
        %v854 = vld [vmem:[%s853] sm:$0xff]
        %v855 = vld [vmem:[%s853 + $0x8] sm:$0xff]
        %v856 = vld [vmem:[%s853 + $0x10] sm:$0xff]
        %v857 = vld [vmem:[%s853 + $0x18] sm:$0xff]
        %v858 = vld [vmem:[%s853 + $0x20] sm:$0xff]
        %v859 = vld [vmem:[%s853 + $0x28] sm:$0xff]
        %v860 = vld [vmem:[%s853 + $0x30] sm:$0xff]
        %v861 = vld [vmem:[%s853 + $0x38] sm:$0xff]
        %v862 = vld [vmem:[%s853 + $0x40] sm:$0xff]
        %v863 = vld [vmem:[%s853 + $0x48] sm:$0xff]
        %v864 = vld [vmem:[%s853 + $0x50] sm:$0xff]
        %v865 = vld [vmem:[%s853 + $0x58] sm:$0xff]
        %v866 = vld [vmem:[%s853 + $0x60] sm:$0xff]
        %v867 = vld [vmem:[%s853 + $0x68] sm:$0xff]
        %v868 = vld [vmem:[%s853 + $0x70] sm:$0xff]
        %v869 = vld [vmem:[%s853 + $0x78] sm:$0xff]
        %v870 = vld [vmem:[%s853 + $0x80] sm:$0xff]
        %v871 = vld [vmem:[%s853 + $0x88] sm:$0xff]
        %v872 = vld [vmem:[%s853 + $0x90] sm:$0xff]
        %v873 = vld [vmem:[%s853 + $0x98] sm:$0xff]
        %v874 = vld [vmem:[%s853 + $0xa0] sm:$0xff]
        %v875 = vld [vmem:[%s853 + $0xa8] sm:$0xff]
        %v876 = vld [vmem:[%s853 + $0xb0] sm:$0xff]
        %v877 = vld [vmem:[%s853 + $0xb8] sm:$0xff]
        %v878 = vld [vmem:[%s853 + $0xc0] sm:$0xff]
        %v879 = vld [vmem:[%s853 + $0xc8] sm:$0xff]
        %v880 = vld [vmem:[%s853 + $0xd0] sm:$0xff]
        %v881 = vld [vmem:[%s853 + $0xd8] sm:$0xff]
        %v882 = vld [vmem:[%s853 + $0xe0] sm:$0xff]
        %v883 = vld [vmem:[%s853 + $0xe8] sm:$0xff]
        %v884 = vld [vmem:[%s853 + $0xf0] sm:$0xff]
        %v885 = vld [vmem:[%s853 + $0xf8] sm:$0xff]
        %v886 = vld [vmem:[%s853 + $0x100] sm:$0xff]
        %v887 = vld [vmem:[%s853 + $0x108] sm:$0xff]
        %v888 = vld [vmem:[%s853 + $0x110] sm:$0xff]
        %v889 = vld [vmem:[%s853 + $0x118] sm:$0xff]
        %v890 = vld [vmem:[%s853 + $0x120] sm:$0xff]
        %v891 = vld [vmem:[%s853 + $0x128] sm:$0xff]
        %v892 = vld [vmem:[%s853 + $0x130] sm:$0xff]
        %v893 = vld [vmem:[%s853 + $0x138] sm:$0xff]
        %v894 = vld [vmem:[%s853 + $0x140] sm:$0xff]
        %v895 = vld [vmem:[%s853 + $0x148] sm:$0xff]
        %v896 = vld [vmem:[%s853 + $0x150] sm:$0xff]
        %v897 = vld [vmem:[%s853 + $0x158] sm:$0xff]
        %v898 = vld [vmem:[%s853 + $0x160] sm:$0xff]
        %v899 = vld [vmem:[%s853 + $0x168] sm:$0xff]
        %v900 = vld [vmem:[%s853 + $0x170] sm:$0xff]
        %v901 = vld [vmem:[%s853 + $0x178] sm:$0xff]
        %v902 = vld [vmem:[%s853 + $0x180] sm:$0xff]
        %v903 = vld [vmem:[%s853 + $0x188] sm:$0xff]
        %v904 = vld [vmem:[%s853 + $0x190] sm:$0xff]
        %v905 = vld [vmem:[%s853 + $0x198] sm:$0xff]
        %v906 = vld [vmem:[%s853 + $0x1a0] sm:$0xff]
        %v907 = vld [vmem:[%s853 + $0x1a8] sm:$0xff]
        %v908 = vld [vmem:[%s853 + $0x1b0] sm:$0xff]
        %v909 = vld [vmem:[%s853 + $0x1b8] sm:$0xff]
        %v910 = vld [vmem:[%s853 + $0x1c0] sm:$0xff]
        %v911 = vld [vmem:[%s853 + $0x1c8] sm:$0xff]
        %v912 = vld [vmem:[%s853 + $0x1d0] sm:$0xff]
        %v913 = vld [vmem:[%s853 + $0x1d8] sm:$0xff]
        %v914 = vld [vmem:[%s853 + $0x1e0] sm:$0xff]
        %v915 = vld [vmem:[%s853 + $0x1e8] sm:$0xff]
        %v916 = vld [vmem:[%s853 + $0x1f0] sm:$0xff]
        %v917 = vld [vmem:[%s853 + $0x1f8] sm:$0xff]
        %v918 = vld [vmem:[%s853 + $0x200] sm:$0xff]
        %v919 = vld [vmem:[%s853 + $0x208] sm:$0xff]
        %v920 = vld [vmem:[%s853 + $0x210] sm:$0xff]
        %v921 = vld [vmem:[%s853 + $0x218] sm:$0xff]
        %v922 = vld [vmem:[%s853 + $0x220] sm:$0xff]
        %v923 = vld [vmem:[%s853 + $0x228] sm:$0xff]
        %v924 = vld [vmem:[%s853 + $0x230] sm:$0xff]
        %v925 = vld [vmem:[%s853 + $0x238] sm:$0xff]
        %v926 = vld [vmem:[%s853 + $0x240] sm:$0xff]
        %v927 = vld [vmem:[%s853 + $0x248] sm:$0xff]
        %v928 = vld [vmem:[%s853 + $0x250] sm:$0xff]
        %v929 = vld [vmem:[%s853 + $0x258] sm:$0xff]
        %v930 = vld [vmem:[%s853 + $0x260] sm:$0xff]
        %v931 = vld [vmem:[%s853 + $0x268] sm:$0xff]
        %v932 = vld [vmem:[%s853 + $0x270] sm:$0xff]
        %v933 = vld [vmem:[%s853 + $0x278] sm:$0xff]
        %v934 = vld [vmem:[%s853 + $0x280] sm:$0xff]
        %v935 = vld [vmem:[%s853 + $0x288] sm:$0xff]
        %v936 = vld [vmem:[%s853 + $0x290] sm:$0xff]
        %v937 = vld [vmem:[%s853 + $0x298] sm:$0xff]
        %v938 = vld [vmem:[%s853 + $0x2a0] sm:$0xff]
        %v939 = vld [vmem:[%s853 + $0x2a8] sm:$0xff]
        %v940 = vld [vmem:[%s853 + $0x2b0] sm:$0xff]
        %v941 = vld [vmem:[%s853 + $0x2b8] sm:$0xff]
        %v942 = vld [vmem:[%s853 + $0x2c0] sm:$0xff]
        %v943 = vld [vmem:[%s853 + $0x2c8] sm:$0xff]
        %v944 = vld [vmem:[%s853 + $0x2d0] sm:$0xff]
        %v945 = vld [vmem:[%s853 + $0x2d8] sm:$0xff]
        %v946 = vld [vmem:[%s853 + $0x2e0] sm:$0xff]
        %v947 = vld [vmem:[%s853 + $0x2e8] sm:$0xff]
        %v948 = vld [vmem:[%s853 + $0x2f0] sm:$0xff]
        %v949 = vld [vmem:[%s853 + $0x2f8] sm:$0xff]
        %v950 = vld [vmem:[%s853 + $0x300] sm:$0xff]
        %v951 = vld [vmem:[%s853 + $0x308] sm:$0xff]
        %v952 = vld [vmem:[%s853 + $0x310] sm:$0xff]
        %v953 = vld [vmem:[%s853 + $0x318] sm:$0xff]
        %v954 = vld [vmem:[%s853 + $0x320] sm:$0xff]
        %v955 = vld [vmem:[%s853 + $0x328] sm:$0xff]
        %v956 = vld [vmem:[%s853 + $0x330] sm:$0xff]
        %v957 = vld [vmem:[%s853 + $0x338] sm:$0xff]
        %v958 = vld [vmem:[%s853 + $0x340] sm:$0xff]
        %v959 = vld [vmem:[%s853 + $0x348] sm:$0xff]
        %v960 = vld [vmem:[%s853 + $0x350] sm:$0xff]
        %v961 = vld [vmem:[%s853 + $0x358] sm:$0xff]
        %v962 = vld [vmem:[%s853 + $0x360] sm:$0xff]
        %v963 = vld [vmem:[%s853 + $0x368] sm:$0xff]
        %v964 = vld [vmem:[%s853 + $0x370] sm:$0xff]
        %v965 = vld [vmem:[%s853 + $0x378] sm:$0xff]
        %v966 = vld [vmem:[%s853 + $0x380] sm:$0xff]
        %v967 = vld [vmem:[%s853 + $0x388] sm:$0xff]
        %v968 = vld [vmem:[%s853 + $0x390] sm:$0xff]
        %v969 = vld [vmem:[%s853 + $0x398] sm:$0xff]
        %v970 = vld [vmem:[%s853 + $0x3a0] sm:$0xff]
        %v971 = vld [vmem:[%s853 + $0x3a8] sm:$0xff]
        %v972 = vld [vmem:[%s853 + $0x3b0] sm:$0xff]
        %v973 = vld [vmem:[%s853 + $0x3b8] sm:$0xff]
        %v974 = vld [vmem:[%s853 + $0x3c0] sm:$0xff]
        %v975 = vld [vmem:[%s853 + $0x3c8] sm:$0xff]
        %v976 = vld [vmem:[%s853 + $0x3d0] sm:$0xff]
        %v977 = vld [vmem:[%s853 + $0x3d8] sm:$0xff]
        %v978 = vld [vmem:[%s853 + $0x3e0] sm:$0xff]
        %v979 = vld [vmem:[%s853 + $0x3e8] sm:$0xff]
        %v980 = vld [vmem:[%s853 + $0x3f0] sm:$0xff]
        %v981 = vld [vmem:[%s853 + $0x3f8] sm:$0xff]
        %982 = vmatprep.subr.mxu0 %v495
        %983 = vmatpush1.msra.mxu0 %v494
        %984 = vmatprep.subr.mxu0 %v493
        %985 = vmatpush1.msra.mxu0 %v492
        %986 = vmatprep.subr.mxu0 %v491
        %987 = vmatpush1.msra.mxu0 %v490
        %988 = vmatprep.subr.mxu0 %v489
        %989 = vmatpush1.msra.mxu0 %v488
        %990 = vmatprep.subr.mxu0 %v487
        %991 = vmatpush1.msra.mxu0 %v486
        %992 = vmatprep.subr.mxu0 %v485
        %993 = vmatpush1.msra.mxu0 %v484
        %994 = vmatprep.subr.mxu0 %v483
        %995 = vmatpush1.msra.mxu0 %v482
        %996 = vmatprep.subr.mxu0 %v481
        %997 = vmatpush1.msra.mxu0 %v480
        %998 = vmatprep.subr.mxu0 %v479
        %999 = vmatpush1.msra.mxu0 %v478
        %1000 = vmatprep.subr.mxu0 %v477
        %1001 = vmatpush1.msra.mxu0 %v476
        %1002 = vmatprep.subr.mxu0 %v475
        %1003 = vmatpush1.msra.mxu0 %v474
        %1004 = vmatprep.subr.mxu0 %v473
        %1005 = vmatpush1.msra.mxu0 %v472
        %1006 = vmatprep.subr.mxu0 %v471
        %1007 = vmatpush1.msra.mxu0 %v470
        %1008 = vmatprep.subr.mxu0 %v469
        %1009 = vmatpush1.msra.mxu0 %v468
        %1010 = vmatprep.subr.mxu0 %v467
        %1011 = vmatpush1.msra.mxu0 %v466
        %1012 = vmatprep.subr.mxu0 %v465
        %1013 = vmatpush1.msra.mxu0 %v464
        %1014 = vmatprep.subr.mxu0 %v527
        %1015 = vmatpush2.msra.mxu0 %v526
        %1016 = vmatprep.subr.mxu0 %v525
        %1017 = vmatpush2.msra.mxu0 %v524
        %1018 = vmatprep.subr.mxu0 %v523
        %1019 = vmatpush2.msra.mxu0 %v522
        %1020 = vmatprep.subr.mxu0 %v521
        %1021 = vmatpush2.msra.mxu0 %v520
        %1022 = vmatprep.subr.mxu0 %v519
        %1023 = vmatpush2.msra.mxu0 %v518
        %1024 = vmatprep.subr.mxu0 %v517
        %1025 = vmatpush2.msra.mxu0 %v516
        %1026 = vmatprep.subr.mxu0 %v515
        %1027 = vmatpush2.msra.mxu0 %v514
        %1028 = vmatprep.subr.mxu0 %v513
        %1029 = vmatpush2.msra.mxu0 %v512
        %1030 = vmatprep.subr.mxu0 %v511
        %1031 = vmatpush2.msra.mxu0 %v510
        %1032 = vmatprep.subr.mxu0 %v509
        %1033 = vmatpush2.msra.mxu0 %v508
        %1034 = vmatprep.subr.mxu0 %v507
        %1035 = vmatpush2.msra.mxu0 %v506
        %1036 = vmatprep.subr.mxu0 %v505
        %1037 = vmatpush2.msra.mxu0 %v504
        %1038 = vmatprep.subr.mxu0 %v503
        %1039 = vmatpush2.msra.mxu0 %v502
        %1040 = vmatprep.subr.mxu0 %v501
        %1041 = vmatpush2.msra.mxu0 %v500
        %1042 = vmatprep.subr.mxu0 %v499
        %1043 = vmatpush2.msra.mxu0 %v498
        %1044 = vmatprep.subr.mxu0 %v497
        %1045 = vmatpush2.msra.mxu0 %v496
        %1046 = vmatprep.mubr.f32.mxu0 %v430
        %1047 = vmatmul.mubr.f32.gmra.mxu0 %v429
        %v1048 = vpop.f32.mrf.mxu0
        %v1049 = vadd.f32 0.0, %v1048
        %v1050 = vpop.f32.mrf.mxu0
        %v1051 = vadd.f32 0.0, %v1050
        %1052 = vmatprep.mubr.f32.mxu0 %v434
        %1053 = vmatmul.mubr.f32.gmra.mxu0 %v433
        %v1054 = vpop.f32.mrf.mxu0
        %v1055 = vadd.f32 0.0, %v1054
        %v1056 = vpop.f32.mrf.mxu0
        %v1057 = vadd.f32 0.0, %v1056
        %1058 = vmatprep.mubr.f32.mxu0 %v438
        %1059 = vmatmul.mubr.f32.gmra.mxu0 %v437
        %v1060 = vpop.f32.mrf.mxu0
        %v1061 = vadd.f32 0.0, %v1060
        %v1062 = vpop.f32.mrf.mxu0
        %v1063 = vadd.f32 0.0, %v1062
        %1064 = vmatprep.mubr.f32.mxu0 %v442
        %1065 = vmatmul.mubr.f32.gmra.mxu0 %v441
        %v1066 = vpop.f32.mrf.mxu0
        %v1067 = vadd.f32 0.0, %v1066
        %v1068 = vpop.f32.mrf.mxu0
        %v1069 = vadd.f32 0.0, %v1068
        %1070 = vmatprep.mubr.f32.mxu0 %v446
        %1071 = vmatmul.mubr.f32.gmra.mxu0 %v445
        %v1072 = vpop.f32.mrf.mxu0
        %v1073 = vadd.f32 0.0, %v1072
        %v1074 = vpop.f32.mrf.mxu0
        %v1075 = vadd.f32 0.0, %v1074
        %1076 = vmatprep.mubr.f32.mxu0 %v450
        %1077 = vmatmul.mubr.f32.gmra.mxu0 %v449
        %v1078 = vpop.f32.mrf.mxu0
        %v1079 = vadd.f32 0.0, %v1078
        %v1080 = vpop.f32.mrf.mxu0
        %v1081 = vadd.f32 0.0, %v1080
        %1082 = vmatprep.mubr.f32.mxu0 %v454
        %1083 = vmatmul.mubr.f32.gmra.mxu0 %v453
        %v1084 = vpop.f32.mrf.mxu0
        %v1085 = vadd.f32 0.0, %v1084
        %v1086 = vpop.f32.mrf.mxu0
        %v1087 = vadd.f32 0.0, %v1086
        %1088 = vmatprep.mubr.f32.mxu0 %v458
        %1089 = vmatmul.mubr.f32.gmra.mxu0 %v457
        %v1090 = vpop.f32.mrf.mxu0
        %v1091 = vadd.f32 0.0, %v1090
        %v1092 = vpop.f32.mrf.mxu0
        %v1093 = vadd.f32 0.0, %v1092
        %1094 = vdwg.mxu0
        %1095 = vmatprep.subr.mxu0 %v559
        %1096 = vmatpush1.msra.mxu0 %v558
        %1097 = vmatprep.subr.mxu0 %v557
        %1098 = vmatpush1.msra.mxu0 %v556
        %1099 = vmatprep.subr.mxu0 %v555
        %1100 = vmatpush1.msra.mxu0 %v554
        %1101 = vmatprep.subr.mxu0 %v553
        %1102 = vmatpush1.msra.mxu0 %v552
        %1103 = vmatprep.subr.mxu0 %v551
        %1104 = vmatpush1.msra.mxu0 %v550
        %1105 = vmatprep.subr.mxu0 %v549
        %1106 = vmatpush1.msra.mxu0 %v548
        %1107 = vmatprep.subr.mxu0 %v547
        %1108 = vmatpush1.msra.mxu0 %v546
        %1109 = vmatprep.subr.mxu0 %v545
        %1110 = vmatpush1.msra.mxu0 %v544
        %1111 = vmatprep.subr.mxu0 %v543
        %1112 = vmatpush1.msra.mxu0 %v542
        %1113 = vmatprep.subr.mxu0 %v541
        %1114 = vmatpush1.msra.mxu0 %v540
        %1115 = vmatprep.subr.mxu0 %v539
        %1116 = vmatpush1.msra.mxu0 %v538
        %1117 = vmatprep.subr.mxu0 %v537
        %1118 = vmatpush1.msra.mxu0 %v536
        %1119 = vmatprep.subr.mxu0 %v535
        %1120 = vmatpush1.msra.mxu0 %v534
        %1121 = vmatprep.subr.mxu0 %v533
        %1122 = vmatpush1.msra.mxu0 %v532
        %1123 = vmatprep.subr.mxu0 %v531
        %1124 = vmatpush1.msra.mxu0 %v530
        %1125 = vmatprep.subr.mxu0 %v529
        %1126 = vmatpush1.msra.mxu0 %v528
        %1127 = vmatprep.subr.mxu0 %v591
        %1128 = vmatpush2.msra.mxu0 %v590
        %1129 = vmatprep.subr.mxu0 %v589
        %1130 = vmatpush2.msra.mxu0 %v588
        %1131 = vmatprep.subr.mxu0 %v587
        %1132 = vmatpush2.msra.mxu0 %v586
        %1133 = vmatprep.subr.mxu0 %v585
        %1134 = vmatpush2.msra.mxu0 %v584
        %1135 = vmatprep.subr.mxu0 %v583
        %1136 = vmatpush2.msra.mxu0 %v582
        %1137 = vmatprep.subr.mxu0 %v581
        %1138 = vmatpush2.msra.mxu0 %v580
        %1139 = vmatprep.subr.mxu0 %v579
        %1140 = vmatpush2.msra.mxu0 %v578
        %1141 = vmatprep.subr.mxu0 %v577
        %1142 = vmatpush2.msra.mxu0 %v576
        %1143 = vmatprep.subr.mxu0 %v575
        %1144 = vmatpush2.msra.mxu0 %v574
        %1145 = vmatprep.subr.mxu0 %v573
        %1146 = vmatpush2.msra.mxu0 %v572
        %1147 = vmatprep.subr.mxu0 %v571
        %1148 = vmatpush2.msra.mxu0 %v570
        %1149 = vmatprep.subr.mxu0 %v569
        %1150 = vmatpush2.msra.mxu0 %v568
        %1151 = vmatprep.subr.mxu0 %v567
        %1152 = vmatpush2.msra.mxu0 %v566
        %1153 = vmatprep.subr.mxu0 %v565
        %1154 = vmatpush2.msra.mxu0 %v564
        %1155 = vmatprep.subr.mxu0 %v563
        %1156 = vmatpush2.msra.mxu0 %v562
        %1157 = vmatprep.subr.mxu0 %v561
        %1158 = vmatpush2.msra.mxu0 %v560
        %1159 = vmatprep.mubr.f32.mxu0 %v432
        %1160 = vmatmul.mubr.f32.gmra.mxu0 %v431
        %v1161 = vpop.f32.mrf.mxu0
        %v1162 = vadd.f32 %v1049, %v1161
        %v1163 = vpop.f32.mrf.mxu0
        %v1164 = vadd.f32 %v1051, %v1163
        %1165 = vmatprep.mubr.f32.mxu0 %v436
        %1166 = vmatmul.mubr.f32.gmra.mxu0 %v435
        %v1167 = vpop.f32.mrf.mxu0
        %v1168 = vadd.f32 %v1055, %v1167
        %v1169 = vpop.f32.mrf.mxu0
        %v1170 = vadd.f32 %v1057, %v1169
        %1171 = vmatprep.mubr.f32.mxu0 %v440
        %1172 = vmatmul.mubr.f32.gmra.mxu0 %v439
        %v1173 = vpop.f32.mrf.mxu0
        %v1174 = vadd.f32 %v1061, %v1173
        %v1175 = vpop.f32.mrf.mxu0
        %v1176 = vadd.f32 %v1063, %v1175
        %1177 = vmatprep.mubr.f32.mxu0 %v444
        %1178 = vmatmul.mubr.f32.gmra.mxu0 %v443
        %v1179 = vpop.f32.mrf.mxu0
        %v1180 = vadd.f32 %v1067, %v1179
        %v1181 = vpop.f32.mrf.mxu0
        %v1182 = vadd.f32 %v1069, %v1181
        %1183 = vmatprep.mubr.f32.mxu0 %v448
        %1184 = vmatmul.mubr.f32.gmra.mxu0 %v447
        %v1185 = vpop.f32.mrf.mxu0
        %v1186 = vadd.f32 %v1073, %v1185
        %v1187 = vpop.f32.mrf.mxu0
        %v1188 = vadd.f32 %v1075, %v1187
        %1189 = vmatprep.mubr.f32.mxu0 %v452
        %1190 = vmatmul.mubr.f32.gmra.mxu0 %v451
        %v1191 = vpop.f32.mrf.mxu0
        %v1192 = vadd.f32 %v1079, %v1191
        %v1193 = vpop.f32.mrf.mxu0
        %v1194 = vadd.f32 %v1081, %v1193
        %1195 = vmatprep.mubr.f32.mxu0 %v456
        %1196 = vmatmul.mubr.f32.gmra.mxu0 %v455
        %v1197 = vpop.f32.mrf.mxu0
        %v1198 = vadd.f32 %v1085, %v1197
        %v1199 = vpop.f32.mrf.mxu0
        %v1200 = vadd.f32 %v1087, %v1199
        %1201 = vmatprep.mubr.f32.mxu0 %v460
        %1202 = vmatmul.mubr.f32.gmra.mxu0 %v459
        %v1203 = vpop.f32.mrf.mxu0
        %v1204 = vadd.f32 %v1091, %v1203
        %v1205 = vpop.f32.mrf.mxu0
        %v1206 = vadd.f32 %v1093, %v1205
        %1207 = vdwg.mxu0
        %1208 = vmatprep.subr.mxu0 %v625
        %1209 = vmatpush1.msra.mxu0 %v624
        %1210 = vmatprep.subr.mxu0 %v623
        %1211 = vmatpush1.msra.mxu0 %v622
        %1212 = vmatprep.subr.mxu0 %v621
        %1213 = vmatpush1.msra.mxu0 %v620
        %1214 = vmatprep.subr.mxu0 %v619
        %1215 = vmatpush1.msra.mxu0 %v618
        %1216 = vmatprep.subr.mxu0 %v617
        %1217 = vmatpush1.msra.mxu0 %v616
        %1218 = vmatprep.subr.mxu0 %v615
        %1219 = vmatpush1.msra.mxu0 %v614
        %1220 = vmatprep.subr.mxu0 %v613
        %1221 = vmatpush1.msra.mxu0 %v612
        %1222 = vmatprep.subr.mxu0 %v611
        %1223 = vmatpush1.msra.mxu0 %v610
        %1224 = vmatprep.subr.mxu0 %v609
        %1225 = vmatpush1.msra.mxu0 %v608
        %1226 = vmatprep.subr.mxu0 %v607
        %1227 = vmatpush1.msra.mxu0 %v606
        %1228 = vmatprep.subr.mxu0 %v605
        %1229 = vmatpush1.msra.mxu0 %v604
        %1230 = vmatprep.subr.mxu0 %v603
        %1231 = vmatpush1.msra.mxu0 %v602
        %1232 = vmatprep.subr.mxu0 %v601
        %1233 = vmatpush1.msra.mxu0 %v600
        %1234 = vmatprep.subr.mxu0 %v599
        %1235 = vmatpush1.msra.mxu0 %v598
        %1236 = vmatprep.subr.mxu0 %v597
        %1237 = vmatpush1.msra.mxu0 %v596
        %1238 = vmatprep.subr.mxu0 %v595
        %1239 = vmatpush1.msra.mxu0 %v594
        %1240 = vmatprep.subr.mxu0 %v657
        %1241 = vmatpush2.msra.mxu0 %v656
        %1242 = vmatprep.subr.mxu0 %v655
        %1243 = vmatpush2.msra.mxu0 %v654
        %1244 = vmatprep.subr.mxu0 %v653
        %1245 = vmatpush2.msra.mxu0 %v652
        %1246 = vmatprep.subr.mxu0 %v651
        %1247 = vmatpush2.msra.mxu0 %v650
        %1248 = vmatprep.subr.mxu0 %v649
        %1249 = vmatpush2.msra.mxu0 %v648
        %1250 = vmatprep.subr.mxu0 %v647
        %1251 = vmatpush2.msra.mxu0 %v646
        %1252 = vmatprep.subr.mxu0 %v645
        %1253 = vmatpush2.msra.mxu0 %v644
        %1254 = vmatprep.subr.mxu0 %v643
        %1255 = vmatpush2.msra.mxu0 %v642
        %1256 = vmatprep.subr.mxu0 %v641
        %1257 = vmatpush2.msra.mxu0 %v640
        %1258 = vmatprep.subr.mxu0 %v639
        %1259 = vmatpush2.msra.mxu0 %v638
        %1260 = vmatprep.subr.mxu0 %v637
        %1261 = vmatpush2.msra.mxu0 %v636
        %1262 = vmatprep.subr.mxu0 %v635
        %1263 = vmatpush2.msra.mxu0 %v634
        %1264 = vmatprep.subr.mxu0 %v633
        %1265 = vmatpush2.msra.mxu0 %v632
        %1266 = vmatprep.subr.mxu0 %v631
        %1267 = vmatpush2.msra.mxu0 %v630
        %1268 = vmatprep.subr.mxu0 %v629
        %1269 = vmatpush2.msra.mxu0 %v628
        %1270 = vmatprep.subr.mxu0 %v627
        %1271 = vmatpush2.msra.mxu0 %v626
        %1272 = vmatprep.mubr.f32.mxu0 %v360
        %1273 = vmatmul.mubr.f32.gmra.mxu0 %v359
        %v1274 = vpop.f32.mrf.mxu0
        %v1275 = vadd.f32 0.0, %v1274
        %v1276 = vpop.f32.mrf.mxu0
        %v1277 = vadd.f32 0.0, %v1276
        %1278 = vmatprep.mubr.f32.mxu0 %v364
        %1279 = vmatmul.mubr.f32.gmra.mxu0 %v363
        %v1280 = vpop.f32.mrf.mxu0
        %v1281 = vadd.f32 0.0, %v1280
        %v1282 = vpop.f32.mrf.mxu0
        %v1283 = vadd.f32 0.0, %v1282
        %1284 = vmatprep.mubr.f32.mxu0 %v368
        %1285 = vmatmul.mubr.f32.gmra.mxu0 %v367
        %v1286 = vpop.f32.mrf.mxu0
        %v1287 = vadd.f32 0.0, %v1286
        %v1288 = vpop.f32.mrf.mxu0
        %v1289 = vadd.f32 0.0, %v1288
        %1290 = vmatprep.mubr.f32.mxu0 %v372
        %1291 = vmatmul.mubr.f32.gmra.mxu0 %v371
        %v1292 = vpop.f32.mrf.mxu0
        %v1293 = vadd.f32 0.0, %v1292
        %v1294 = vpop.f32.mrf.mxu0
        %v1295 = vadd.f32 0.0, %v1294
        %1296 = vmatprep.mubr.f32.mxu0 %v376
        %1297 = vmatmul.mubr.f32.gmra.mxu0 %v375
        %v1298 = vpop.f32.mrf.mxu0
        %v1299 = vadd.f32 0.0, %v1298
        %v1300 = vpop.f32.mrf.mxu0
        %v1301 = vadd.f32 0.0, %v1300
        %1302 = vmatprep.mubr.f32.mxu0 %v380
        %1303 = vmatmul.mubr.f32.gmra.mxu0 %v379
        %v1304 = vpop.f32.mrf.mxu0
        %v1305 = vadd.f32 0.0, %v1304
        %v1306 = vpop.f32.mrf.mxu0
        %v1307 = vadd.f32 0.0, %v1306
        %1308 = vmatprep.mubr.f32.mxu0 %v384
        %1309 = vmatmul.mubr.f32.gmra.mxu0 %v383
        %v1310 = vpop.f32.mrf.mxu0
        %v1311 = vadd.f32 0.0, %v1310
        %v1312 = vpop.f32.mrf.mxu0
        %v1313 = vadd.f32 0.0, %v1312
        %1314 = vmatprep.mubr.f32.mxu0 %v388
        %1315 = vmatmul.mubr.f32.gmra.mxu0 %v387
        %v1316 = vpop.f32.mrf.mxu0
        %v1317 = vadd.f32 0.0, %v1316
        %v1318 = vpop.f32.mrf.mxu0
        %v1319 = vadd.f32 0.0, %v1318
        %1320 = vmatprep.mubr.f32.mxu0 %v392
        %1321 = vmatmul.mubr.f32.gmra.mxu0 %v391
        %v1322 = vpop.f32.mrf.mxu0
        %v1323 = vadd.f32 0.0, %v1322
        %v1324 = vpop.f32.mrf.mxu0
        %v1325 = vadd.f32 0.0, %v1324
        %1326 = vmatprep.mubr.f32.mxu0 %v396
        %1327 = vmatmul.mubr.f32.gmra.mxu0 %v395
        %v1328 = vpop.f32.mrf.mxu0
        %v1329 = vadd.f32 0.0, %v1328
        %v1330 = vpop.f32.mrf.mxu0
        %v1331 = vadd.f32 0.0, %v1330
        %1332 = vmatprep.mubr.f32.mxu0 %v400
        %1333 = vmatmul.mubr.f32.gmra.mxu0 %v399
        %v1334 = vpop.f32.mrf.mxu0
        %v1335 = vadd.f32 0.0, %v1334
        %v1336 = vpop.f32.mrf.mxu0
        %v1337 = vadd.f32 0.0, %v1336
        %1338 = vmatprep.mubr.f32.mxu0 %v404
        %1339 = vmatmul.mubr.f32.gmra.mxu0 %v403
        %v1340 = vpop.f32.mrf.mxu0
        %v1341 = vadd.f32 0.0, %v1340
        %v1342 = vpop.f32.mrf.mxu0
        %v1343 = vadd.f32 0.0, %v1342
        %1344 = vmatprep.mubr.f32.mxu0 %v408
        %1345 = vmatmul.mubr.f32.gmra.mxu0 %v407
        %v1346 = vpop.f32.mrf.mxu0
        %v1347 = vadd.f32 0.0, %v1346
        %v1348 = vpop.f32.mrf.mxu0
        %v1349 = vadd.f32 0.0, %v1348
        %1350 = vmatprep.mubr.f32.mxu0 %v412
        %1351 = vmatmul.mubr.f32.gmra.mxu0 %v411
        %v1352 = vpop.f32.mrf.mxu0
        %v1353 = vadd.f32 0.0, %v1352
        %v1354 = vpop.f32.mrf.mxu0
        %v1355 = vadd.f32 0.0, %v1354
        %1356 = vmatprep.mubr.f32.mxu0 %v416
        %1357 = vmatmul.mubr.f32.gmra.mxu0 %v415
        %v1358 = vpop.f32.mrf.mxu0
        %v1359 = vadd.f32 0.0, %v1358
        %v1360 = vpop.f32.mrf.mxu0
        %v1361 = vadd.f32 0.0, %v1360
        %1362 = vmatprep.mubr.f32.mxu0 %v420
        %1363 = vmatmul.mubr.f32.gmra.mxu0 %v419
        %v1364 = vpop.f32.mrf.mxu0
        %v1365 = vadd.f32 0.0, %v1364
        %v1366 = vpop.f32.mrf.mxu0
        %v1367 = vadd.f32 0.0, %v1366
        %1368 = vdwg.mxu0
        %1369 = vmatprep.subr.mxu0 %v689
        %1370 = vmatpush1.msra.mxu0 %v688
        %1371 = vmatprep.subr.mxu0 %v687
        %1372 = vmatpush1.msra.mxu0 %v686
        %1373 = vmatprep.subr.mxu0 %v685
        %1374 = vmatpush1.msra.mxu0 %v684
        %1375 = vmatprep.subr.mxu0 %v683
        %1376 = vmatpush1.msra.mxu0 %v682
        %1377 = vmatprep.subr.mxu0 %v681
        %1378 = vmatpush1.msra.mxu0 %v680
        %1379 = vmatprep.subr.mxu0 %v679
        %1380 = vmatpush1.msra.mxu0 %v678
        %1381 = vmatprep.subr.mxu0 %v677
        %1382 = vmatpush1.msra.mxu0 %v676
        %1383 = vmatprep.subr.mxu0 %v675
        %1384 = vmatpush1.msra.mxu0 %v674
        %1385 = vmatprep.subr.mxu0 %v673
        %1386 = vmatpush1.msra.mxu0 %v672
        %1387 = vmatprep.subr.mxu0 %v671
        %1388 = vmatpush1.msra.mxu0 %v670
        %1389 = vmatprep.subr.mxu0 %v669
        %1390 = vmatpush1.msra.mxu0 %v668
        %1391 = vmatprep.subr.mxu0 %v667
        %1392 = vmatpush1.msra.mxu0 %v666
        %1393 = vmatprep.subr.mxu0 %v665
        %1394 = vmatpush1.msra.mxu0 %v664
        %1395 = vmatprep.subr.mxu0 %v663
        %1396 = vmatpush1.msra.mxu0 %v662
        %1397 = vmatprep.subr.mxu0 %v661
        %1398 = vmatpush1.msra.mxu0 %v660
        %1399 = vmatprep.subr.mxu0 %v659
        %1400 = vmatpush1.msra.mxu0 %v658
        %1401 = vmatprep.subr.mxu0 %v721
        %1402 = vmatpush2.msra.mxu0 %v720
        %1403 = vmatprep.subr.mxu0 %v719
        %1404 = vmatpush2.msra.mxu0 %v718
        %1405 = vmatprep.subr.mxu0 %v717
        %1406 = vmatpush2.msra.mxu0 %v716
        %1407 = vmatprep.subr.mxu0 %v715
        %1408 = vmatpush2.msra.mxu0 %v714
        %1409 = vmatprep.subr.mxu0 %v713
        %1410 = vmatpush2.msra.mxu0 %v712
        %1411 = vmatprep.subr.mxu0 %v711
        %1412 = vmatpush2.msra.mxu0 %v710
        %1413 = vmatprep.subr.mxu0 %v709
        %1414 = vmatpush2.msra.mxu0 %v708
        %1415 = vmatprep.subr.mxu0 %v707
        %1416 = vmatpush2.msra.mxu0 %v706
        %1417 = vmatprep.subr.mxu0 %v705
        %1418 = vmatpush2.msra.mxu0 %v704
        %1419 = vmatprep.subr.mxu0 %v703
        %1420 = vmatpush2.msra.mxu0 %v702
        %1421 = vmatprep.subr.mxu0 %v701
        %1422 = vmatpush2.msra.mxu0 %v700
        %1423 = vmatprep.subr.mxu0 %v699
        %1424 = vmatpush2.msra.mxu0 %v698
        %1425 = vmatprep.subr.mxu0 %v697
        %1426 = vmatpush2.msra.mxu0 %v696
        %1427 = vmatprep.subr.mxu0 %v695
        %1428 = vmatpush2.msra.mxu0 %v694
        %1429 = vmatprep.subr.mxu0 %v693
        %1430 = vmatpush2.msra.mxu0 %v692
        %1431 = vmatprep.subr.mxu0 %v691
        %1432 = vmatpush2.msra.mxu0 %v690
        %1433 = vmatprep.mubr.f32.mxu0 %v362
        %1434 = vmatmul.mubr.f32.gmra.mxu0 %v361
        %v1435 = vpop.f32.mrf.mxu0
        %v1436 = vadd.f32 %v1275, %v1435
        %v1437 = vpop.f32.mrf.mxu0
        %v1438 = vadd.f32 %v1277, %v1437
        %1439 = vmatprep.mubr.f32.mxu0 %v366
        %1440 = vmatmul.mubr.f32.gmra.mxu0 %v365
        %v1441 = vpop.f32.mrf.mxu0
        %v1442 = vadd.f32 %v1281, %v1441
        %v1443 = vpop.f32.mrf.mxu0
        %v1444 = vadd.f32 %v1283, %v1443
        %1445 = vmatprep.mubr.f32.mxu0 %v370
        %1446 = vmatmul.mubr.f32.gmra.mxu0 %v369
        %v1447 = vpop.f32.mrf.mxu0
        %v1448 = vadd.f32 %v1287, %v1447
        %v1449 = vpop.f32.mrf.mxu0
        %v1450 = vadd.f32 %v1289, %v1449
        %1451 = vmatprep.mubr.f32.mxu0 %v374
        %1452 = vmatmul.mubr.f32.gmra.mxu0 %v373
        %v1453 = vpop.f32.mrf.mxu0
        %v1454 = vadd.f32 %v1293, %v1453
        %v1455 = vpop.f32.mrf.mxu0
        %v1456 = vadd.f32 %v1295, %v1455
        %1457 = vmatprep.mubr.f32.mxu0 %v378
        %1458 = vmatmul.mubr.f32.gmra.mxu0 %v377
        %v1459 = vpop.f32.mrf.mxu0
        %v1460 = vadd.f32 %v1299, %v1459
        %v1461 = vpop.f32.mrf.mxu0
        %v1462 = vadd.f32 %v1301, %v1461
        %1463 = vmatprep.mubr.f32.mxu0 %v382
        %1464 = vmatmul.mubr.f32.gmra.mxu0 %v381
        %v1465 = vpop.f32.mrf.mxu0
        %v1466 = vadd.f32 %v1305, %v1465
        %v1467 = vpop.f32.mrf.mxu0
        %v1468 = vadd.f32 %v1307, %v1467
        %1469 = vmatprep.mubr.f32.mxu0 %v386
        %1470 = vmatmul.mubr.f32.gmra.mxu0 %v385
        %v1471 = vpop.f32.mrf.mxu0
        %v1472 = vadd.f32 %v1311, %v1471
        %v1473 = vpop.f32.mrf.mxu0
        %v1474 = vadd.f32 %v1313, %v1473
        %1475 = vmatprep.mubr.f32.mxu0 %v390
        %1476 = vmatmul.mubr.f32.gmra.mxu0 %v389
        %v1477 = vpop.f32.mrf.mxu0
        %v1478 = vadd.f32 %v1317, %v1477
        %v1479 = vpop.f32.mrf.mxu0
        %v1480 = vadd.f32 %v1319, %v1479
        %1481 = vmatprep.mubr.f32.mxu0 %v394
        %1482 = vmatmul.mubr.f32.gmra.mxu0 %v393
        %v1483 = vpop.f32.mrf.mxu0
        %v1484 = vadd.f32 %v1323, %v1483
        %v1485 = vpop.f32.mrf.mxu0
        %v1486 = vadd.f32 %v1325, %v1485
        %1487 = vmatprep.mubr.f32.mxu0 %v398
        %1488 = vmatmul.mubr.f32.gmra.mxu0 %v397
        %v1489 = vpop.f32.mrf.mxu0
        %v1490 = vadd.f32 %v1329, %v1489
        %v1491 = vpop.f32.mrf.mxu0
        %v1492 = vadd.f32 %v1331, %v1491
        %1493 = vmatprep.mubr.f32.mxu0 %v402
        %1494 = vmatmul.mubr.f32.gmra.mxu0 %v401
        %v1495 = vpop.f32.mrf.mxu0
        %v1496 = vadd.f32 %v1335, %v1495
        %v1497 = vpop.f32.mrf.mxu0
        %v1498 = vadd.f32 %v1337, %v1497
        %1499 = vmatprep.mubr.f32.mxu0 %v406
        %1500 = vmatmul.mubr.f32.gmra.mxu0 %v405
        %v1501 = vpop.f32.mrf.mxu0
        %v1502 = vadd.f32 %v1341, %v1501
        %v1503 = vpop.f32.mrf.mxu0
        %v1504 = vadd.f32 %v1343, %v1503
        %1505 = vmatprep.mubr.f32.mxu0 %v410
        %1506 = vmatmul.mubr.f32.gmra.mxu0 %v409
        %v1507 = vpop.f32.mrf.mxu0
        %v1508 = vadd.f32 %v1347, %v1507
        %v1509 = vpop.f32.mrf.mxu0
        %v1510 = vadd.f32 %v1349, %v1509
        %1511 = vmatprep.mubr.f32.mxu0 %v414
        %1512 = vmatmul.mubr.f32.gmra.mxu0 %v413
        %v1513 = vpop.f32.mrf.mxu0
        %v1514 = vadd.f32 %v1353, %v1513
        %v1515 = vpop.f32.mrf.mxu0
        %v1516 = vadd.f32 %v1355, %v1515
        %1517 = vmatprep.mubr.f32.mxu0 %v418
        %1518 = vmatmul.mubr.f32.gmra.mxu0 %v417
        %v1519 = vpop.f32.mrf.mxu0
        %v1520 = vadd.f32 %v1359, %v1519
        %v1521 = vpop.f32.mrf.mxu0
        %v1522 = vadd.f32 %v1361, %v1521
        %1523 = vmatprep.mubr.f32.mxu0 %v422
        %1524 = vmatmul.mubr.f32.gmra.mxu0 %v421
        %v1525 = vpop.f32.mrf.mxu0
        %v1526 = vadd.f32 %v1365, %v1525
        %v1527 = vpop.f32.mrf.mxu0
        %v1528 = vadd.f32 %v1367, %v1527
        %1529 = vdwg.mxu0
        %1530 = vmatprep.subr.mxu0 %v755
        %1531 = vmatpush1.msra.mxu0 %v754
        %1532 = vmatprep.subr.mxu0 %v753
        %1533 = vmatpush1.msra.mxu0 %v752
        %1534 = vmatprep.subr.mxu0 %v751
        %1535 = vmatpush1.msra.mxu0 %v750
        %1536 = vmatprep.subr.mxu0 %v749
        %1537 = vmatpush1.msra.mxu0 %v748
        %1538 = vmatprep.subr.mxu0 %v747
        %1539 = vmatpush1.msra.mxu0 %v746
        %1540 = vmatprep.subr.mxu0 %v745
        %1541 = vmatpush1.msra.mxu0 %v744
        %1542 = vmatprep.subr.mxu0 %v743
        %1543 = vmatpush1.msra.mxu0 %v742
        %1544 = vmatprep.subr.mxu0 %v741
        %1545 = vmatpush1.msra.mxu0 %v740
        %1546 = vmatprep.subr.mxu0 %v739
        %1547 = vmatpush1.msra.mxu0 %v738
        %1548 = vmatprep.subr.mxu0 %v737
        %1549 = vmatpush1.msra.mxu0 %v736
        %1550 = vmatprep.subr.mxu0 %v735
        %1551 = vmatpush1.msra.mxu0 %v734
        %1552 = vmatprep.subr.mxu0 %v733
        %1553 = vmatpush1.msra.mxu0 %v732
        %1554 = vmatprep.subr.mxu0 %v731
        %1555 = vmatpush1.msra.mxu0 %v730
        %1556 = vmatprep.subr.mxu0 %v729
        %1557 = vmatpush1.msra.mxu0 %v728
        %1558 = vmatprep.subr.mxu0 %v727
        %1559 = vmatpush1.msra.mxu0 %v726
        %1560 = vmatprep.subr.mxu0 %v725
        %1561 = vmatpush1.msra.mxu0 %v724
        %1562 = vmatprep.subr.mxu0 %v787
        %1563 = vmatpush2.msra.mxu0 %v786
        %1564 = vmatprep.subr.mxu0 %v785
        %1565 = vmatpush2.msra.mxu0 %v784
        %1566 = vmatprep.subr.mxu0 %v783
        %1567 = vmatpush2.msra.mxu0 %v782
        %1568 = vmatprep.subr.mxu0 %v781
        %1569 = vmatpush2.msra.mxu0 %v780
        %1570 = vmatprep.subr.mxu0 %v779
        %1571 = vmatpush2.msra.mxu0 %v778
        %1572 = vmatprep.subr.mxu0 %v777
        %1573 = vmatpush2.msra.mxu0 %v776
        %1574 = vmatprep.subr.mxu0 %v775
        %1575 = vmatpush2.msra.mxu0 %v774
        %1576 = vmatprep.subr.mxu0 %v773
        %1577 = vmatpush2.msra.mxu0 %v772
        %1578 = vmatprep.subr.mxu0 %v771
        %1579 = vmatpush2.msra.mxu0 %v770
        %1580 = vmatprep.subr.mxu0 %v769
        %1581 = vmatpush2.msra.mxu0 %v768
        %1582 = vmatprep.subr.mxu0 %v767
        %1583 = vmatpush2.msra.mxu0 %v766
        %1584 = vmatprep.subr.mxu0 %v765
        %1585 = vmatpush2.msra.mxu0 %v764
        %1586 = vmatprep.subr.mxu0 %v763
        %1587 = vmatpush2.msra.mxu0 %v762
        %1588 = vmatprep.subr.mxu0 %v761
        %1589 = vmatpush2.msra.mxu0 %v760
        %1590 = vmatprep.subr.mxu0 %v759
        %1591 = vmatpush2.msra.mxu0 %v758
        %1592 = vmatprep.subr.mxu0 %v757
        %1593 = vmatpush2.msra.mxu0 %v756
        %1594 = vmatprep.mubr.f32.mxu0 %v360
        %1595 = vmatmul.mubr.f32.gmra.mxu0 %v359
        %v1596 = vpop.f32.mrf.mxu0
        %v1597 = vadd.f32 0.0, %v1596
        %v1598 = vpop.f32.mrf.mxu0
        %v1599 = vadd.f32 0.0, %v1598
        %1600 = vmatprep.mubr.f32.mxu0 %v364
        %1601 = vmatmul.mubr.f32.gmra.mxu0 %v363
        %v1602 = vpop.f32.mrf.mxu0
        %v1603 = vadd.f32 0.0, %v1602
        %v1604 = vpop.f32.mrf.mxu0
        %v1605 = vadd.f32 0.0, %v1604
        %1606 = vmatprep.mubr.f32.mxu0 %v368
        %1607 = vmatmul.mubr.f32.gmra.mxu0 %v367
        %v1608 = vpop.f32.mrf.mxu0
        %v1609 = vadd.f32 0.0, %v1608
        %v1610 = vpop.f32.mrf.mxu0
        %v1611 = vadd.f32 0.0, %v1610
        %1612 = vmatprep.mubr.f32.mxu0 %v372
        %1613 = vmatmul.mubr.f32.gmra.mxu0 %v371
        %v1614 = vpop.f32.mrf.mxu0
        %v1615 = vadd.f32 0.0, %v1614
        %v1616 = vpop.f32.mrf.mxu0
        %v1617 = vadd.f32 0.0, %v1616
        %1618 = vmatprep.mubr.f32.mxu0 %v376
        %1619 = vmatmul.mubr.f32.gmra.mxu0 %v375
        %v1620 = vpop.f32.mrf.mxu0
        %v1621 = vadd.f32 0.0, %v1620
        %v1622 = vpop.f32.mrf.mxu0
        %v1623 = vadd.f32 0.0, %v1622
        %1624 = vmatprep.mubr.f32.mxu0 %v380
        %1625 = vmatmul.mubr.f32.gmra.mxu0 %v379
        %v1626 = vpop.f32.mrf.mxu0
        %v1627 = vadd.f32 0.0, %v1626
        %v1628 = vpop.f32.mrf.mxu0
        %v1629 = vadd.f32 0.0, %v1628
        %1630 = vmatprep.mubr.f32.mxu0 %v384
        %1631 = vmatmul.mubr.f32.gmra.mxu0 %v383
        %v1632 = vpop.f32.mrf.mxu0
        %v1633 = vadd.f32 0.0, %v1632
        %v1634 = vpop.f32.mrf.mxu0
        %v1635 = vadd.f32 0.0, %v1634
        %1636 = vmatprep.mubr.f32.mxu0 %v388
        %1637 = vmatmul.mubr.f32.gmra.mxu0 %v387
        %v1638 = vpop.f32.mrf.mxu0
        %v1639 = vadd.f32 0.0, %v1638
        %v1640 = vpop.f32.mrf.mxu0
        %v1641 = vadd.f32 0.0, %v1640
        %1642 = vmatprep.mubr.f32.mxu0 %v392
        %1643 = vmatmul.mubr.f32.gmra.mxu0 %v391
        %v1644 = vpop.f32.mrf.mxu0
        %v1645 = vadd.f32 0.0, %v1644
        %v1646 = vpop.f32.mrf.mxu0
        %v1647 = vadd.f32 0.0, %v1646
        %1648 = vmatprep.mubr.f32.mxu0 %v396
        %1649 = vmatmul.mubr.f32.gmra.mxu0 %v395
        %v1650 = vpop.f32.mrf.mxu0
        %v1651 = vadd.f32 0.0, %v1650
        %v1652 = vpop.f32.mrf.mxu0
        %v1653 = vadd.f32 0.0, %v1652
        %1654 = vmatprep.mubr.f32.mxu0 %v400
        %1655 = vmatmul.mubr.f32.gmra.mxu0 %v399
        %v1656 = vpop.f32.mrf.mxu0
        %v1657 = vadd.f32 0.0, %v1656
        %v1658 = vpop.f32.mrf.mxu0
        %v1659 = vadd.f32 0.0, %v1658
        %1660 = vmatprep.mubr.f32.mxu0 %v404
        %1661 = vmatmul.mubr.f32.gmra.mxu0 %v403
        %v1662 = vpop.f32.mrf.mxu0
        %v1663 = vadd.f32 0.0, %v1662
        %v1664 = vpop.f32.mrf.mxu0
        %v1665 = vadd.f32 0.0, %v1664
        %1666 = vmatprep.mubr.f32.mxu0 %v408
        %1667 = vmatmul.mubr.f32.gmra.mxu0 %v407
        %v1668 = vpop.f32.mrf.mxu0
        %v1669 = vadd.f32 0.0, %v1668
        %v1670 = vpop.f32.mrf.mxu0
        %v1671 = vadd.f32 0.0, %v1670
        %1672 = vmatprep.mubr.f32.mxu0 %v412
        %1673 = vmatmul.mubr.f32.gmra.mxu0 %v411
        %v1674 = vpop.f32.mrf.mxu0
        %v1675 = vadd.f32 0.0, %v1674
        %v1676 = vpop.f32.mrf.mxu0
        %v1677 = vadd.f32 0.0, %v1676
        %1678 = vmatprep.mubr.f32.mxu0 %v416
        %1679 = vmatmul.mubr.f32.gmra.mxu0 %v415
        %v1680 = vpop.f32.mrf.mxu0
        %v1681 = vadd.f32 0.0, %v1680
        %v1682 = vpop.f32.mrf.mxu0
        %v1683 = vadd.f32 0.0, %v1682
        %1684 = vmatprep.mubr.f32.mxu0 %v420
        %1685 = vmatmul.mubr.f32.gmra.mxu0 %v419
        %v1686 = vpop.f32.mrf.mxu0
        %v1687 = vadd.f32 0.0, %v1686
        %v1688 = vpop.f32.mrf.mxu0
        %v1689 = vadd.f32 0.0, %v1688
        %1690 = vdwg.mxu0
        %1691 = vmatprep.subr.mxu0 %v819
        %1692 = vmatpush1.msra.mxu0 %v818
        %1693 = vmatprep.subr.mxu0 %v817
        %1694 = vmatpush1.msra.mxu0 %v816
        %1695 = vmatprep.subr.mxu0 %v815
        %1696 = vmatpush1.msra.mxu0 %v814
        %1697 = vmatprep.subr.mxu0 %v813
        %1698 = vmatpush1.msra.mxu0 %v812
        %1699 = vmatprep.subr.mxu0 %v811
        %1700 = vmatpush1.msra.mxu0 %v810
        %1701 = vmatprep.subr.mxu0 %v809
        %1702 = vmatpush1.msra.mxu0 %v808
        %1703 = vmatprep.subr.mxu0 %v807
        %1704 = vmatpush1.msra.mxu0 %v806
        %1705 = vmatprep.subr.mxu0 %v805
        %1706 = vmatpush1.msra.mxu0 %v804
        %1707 = vmatprep.subr.mxu0 %v803
        %1708 = vmatpush1.msra.mxu0 %v802
        %1709 = vmatprep.subr.mxu0 %v801
        %1710 = vmatpush1.msra.mxu0 %v800
        %1711 = vmatprep.subr.mxu0 %v799
        %1712 = vmatpush1.msra.mxu0 %v798
        %1713 = vmatprep.subr.mxu0 %v797
        %1714 = vmatpush1.msra.mxu0 %v796
        %1715 = vmatprep.subr.mxu0 %v795
        %1716 = vmatpush1.msra.mxu0 %v794
        %1717 = vmatprep.subr.mxu0 %v793
        %1718 = vmatpush1.msra.mxu0 %v792
        %1719 = vmatprep.subr.mxu0 %v791
        %1720 = vmatpush1.msra.mxu0 %v790
        %1721 = vmatprep.subr.mxu0 %v789
        %1722 = vmatpush1.msra.mxu0 %v788
        %1723 = vmatprep.subr.mxu0 %v851
        %1724 = vmatpush2.msra.mxu0 %v850
        %1725 = vmatprep.subr.mxu0 %v849
        %1726 = vmatpush2.msra.mxu0 %v848
        %1727 = vmatprep.subr.mxu0 %v847
        %1728 = vmatpush2.msra.mxu0 %v846
        %1729 = vmatprep.subr.mxu0 %v845
        %1730 = vmatpush2.msra.mxu0 %v844
        %1731 = vmatprep.subr.mxu0 %v843
        %1732 = vmatpush2.msra.mxu0 %v842
        %1733 = vmatprep.subr.mxu0 %v841
        %1734 = vmatpush2.msra.mxu0 %v840
        %1735 = vmatprep.subr.mxu0 %v839
        %1736 = vmatpush2.msra.mxu0 %v838
        %1737 = vmatprep.subr.mxu0 %v837
        %1738 = vmatpush2.msra.mxu0 %v836
        %1739 = vmatprep.subr.mxu0 %v835
        %1740 = vmatpush2.msra.mxu0 %v834
        %1741 = vmatprep.subr.mxu0 %v833
        %1742 = vmatpush2.msra.mxu0 %v832
        %1743 = vmatprep.subr.mxu0 %v831
        %1744 = vmatpush2.msra.mxu0 %v830
        %1745 = vmatprep.subr.mxu0 %v829
        %1746 = vmatpush2.msra.mxu0 %v828
        %1747 = vmatprep.subr.mxu0 %v827
        %1748 = vmatpush2.msra.mxu0 %v826
        %1749 = vmatprep.subr.mxu0 %v825
        %1750 = vmatpush2.msra.mxu0 %v824
        %1751 = vmatprep.subr.mxu0 %v823
        %1752 = vmatpush2.msra.mxu0 %v822
        %1753 = vmatprep.subr.mxu0 %v821
        %1754 = vmatpush2.msra.mxu0 %v820
        %1755 = vmatprep.mubr.f32.mxu0 %v362
        %1756 = vmatmul.mubr.f32.gmra.mxu0 %v361
        %v1757 = vpop.f32.mrf.mxu0
        %v1758 = vadd.f32 %v1597, %v1757
        %v1759 = vpop.f32.mrf.mxu0
        %v1760 = vadd.f32 %v1599, %v1759
        %1761 = vmatprep.mubr.f32.mxu0 %v366
        %1762 = vmatmul.mubr.f32.gmra.mxu0 %v365
        %v1763 = vpop.f32.mrf.mxu0
        %v1764 = vadd.f32 %v1603, %v1763
        %v1765 = vpop.f32.mrf.mxu0
        %v1766 = vadd.f32 %v1605, %v1765
        %1767 = vmatprep.mubr.f32.mxu0 %v370
        %1768 = vmatmul.mubr.f32.gmra.mxu0 %v369
        %v1769 = vpop.f32.mrf.mxu0
        %v1770 = vadd.f32 %v1609, %v1769
        %v1771 = vpop.f32.mrf.mxu0
        %v1772 = vadd.f32 %v1611, %v1771
        %1773 = vmatprep.mubr.f32.mxu0 %v374
        %1774 = vmatmul.mubr.f32.gmra.mxu0 %v373
        %v1775 = vpop.f32.mrf.mxu0
        %v1776 = vadd.f32 %v1615, %v1775
        %v1777 = vpop.f32.mrf.mxu0
        %v1778 = vadd.f32 %v1617, %v1777
        %1779 = vmatprep.mubr.f32.mxu0 %v378
        %1780 = vmatmul.mubr.f32.gmra.mxu0 %v377
        %v1781 = vpop.f32.mrf.mxu0
        %v1782 = vadd.f32 %v1621, %v1781
        %v1783 = vpop.f32.mrf.mxu0
        %v1784 = vadd.f32 %v1623, %v1783
        %1785 = vmatprep.mubr.f32.mxu0 %v382
        %1786 = vmatmul.mubr.f32.gmra.mxu0 %v381
        %v1787 = vpop.f32.mrf.mxu0
        %v1788 = vadd.f32 %v1627, %v1787
        %v1789 = vpop.f32.mrf.mxu0
        %v1790 = vadd.f32 %v1629, %v1789
        %1791 = vmatprep.mubr.f32.mxu0 %v386
        %1792 = vmatmul.mubr.f32.gmra.mxu0 %v385
        %v1793 = vpop.f32.mrf.mxu0
        %v1794 = vadd.f32 %v1633, %v1793
        %v1795 = vpop.f32.mrf.mxu0
        %v1796 = vadd.f32 %v1635, %v1795
        %1797 = vmatprep.mubr.f32.mxu0 %v390
        %1798 = vmatmul.mubr.f32.gmra.mxu0 %v389
        %v1799 = vpop.f32.mrf.mxu0
        %v1800 = vadd.f32 %v1639, %v1799
        %v1801 = vpop.f32.mrf.mxu0
        %v1802 = vadd.f32 %v1641, %v1801
        %1803 = vmatprep.mubr.f32.mxu0 %v394
        %1804 = vmatmul.mubr.f32.gmra.mxu0 %v393
        %v1805 = vpop.f32.mrf.mxu0
        %v1806 = vadd.f32 %v1645, %v1805
        %v1807 = vpop.f32.mrf.mxu0
        %v1808 = vadd.f32 %v1647, %v1807
        %1809 = vmatprep.mubr.f32.mxu0 %v398
        %1810 = vmatmul.mubr.f32.gmra.mxu0 %v397
        %v1811 = vpop.f32.mrf.mxu0
        %v1812 = vadd.f32 %v1651, %v1811
        %v1813 = vpop.f32.mrf.mxu0
        %v1814 = vadd.f32 %v1653, %v1813
        %1815 = vmatprep.mubr.f32.mxu0 %v402
        %1816 = vmatmul.mubr.f32.gmra.mxu0 %v401
        %v1817 = vpop.f32.mrf.mxu0
        %v1818 = vadd.f32 %v1657, %v1817
        %v1819 = vpop.f32.mrf.mxu0
        %v1820 = vadd.f32 %v1659, %v1819
        %1821 = vmatprep.mubr.f32.mxu0 %v406
        %1822 = vmatmul.mubr.f32.gmra.mxu0 %v405
        %v1823 = vpop.f32.mrf.mxu0
        %v1824 = vadd.f32 %v1663, %v1823
        %v1825 = vpop.f32.mrf.mxu0
        %v1826 = vadd.f32 %v1665, %v1825
        %1827 = vmatprep.mubr.f32.mxu0 %v410
        %1828 = vmatmul.mubr.f32.gmra.mxu0 %v409
        %v1829 = vpop.f32.mrf.mxu0
        %v1830 = vadd.f32 %v1669, %v1829
        %v1831 = vpop.f32.mrf.mxu0
        %v1832 = vadd.f32 %v1671, %v1831
        %1833 = vmatprep.mubr.f32.mxu0 %v414
        %1834 = vmatmul.mubr.f32.gmra.mxu0 %v413
        %v1835 = vpop.f32.mrf.mxu0
        %v1836 = vadd.f32 %v1675, %v1835
        %v1837 = vpop.f32.mrf.mxu0
        %v1838 = vadd.f32 %v1677, %v1837
        %1839 = vmatprep.mubr.f32.mxu0 %v418
        %1840 = vmatmul.mubr.f32.gmra.mxu0 %v417
        %v1841 = vpop.f32.mrf.mxu0
        %v1842 = vadd.f32 %v1681, %v1841
        %v1843 = vpop.f32.mrf.mxu0
        %v1844 = vadd.f32 %v1683, %v1843
        %1845 = vmatprep.mubr.f32.mxu0 %v422
        %1846 = vmatmul.mubr.f32.gmra.mxu0 %v421
        %v1847 = vpop.f32.mrf.mxu0
        %v1848 = vadd.f32 %v1687, %v1847
        %v1849 = vpop.f32.mrf.mxu0
        %v1850 = vadd.f32 %v1689, %v1849
        %1851 = vdwg.mxu0
        %1860 = vrot.lane.b32.xlu0 %v1162, 64
        %v1861 = vpop.permute.xlu0 %1860
        %1862 = vrot.lane.b32.xlu0 %v1168, 64
        %v1863 = vpop.permute.xlu0 %1862
        %1864 = vrot.lane.b32.xlu0 %v1174, 64
        %v1865 = vpop.permute.xlu0 %1864
        %1866 = vrot.lane.b32.xlu0 %v1180, 64
        %v1867 = vpop.permute.xlu0 %1866
        %1868 = vrot.lane.b32.xlu0 %v1186, 64
        %v1869 = vpop.permute.xlu0 %1868
        %1870 = vrot.lane.b32.xlu0 %v1192, 64
        %v1871 = vpop.permute.xlu0 %1870
        %1872 = vrot.lane.b32.xlu0 %v1198, 64
        %v1873 = vpop.permute.xlu0 %1872
        %1874 = vrot.lane.b32.xlu0 %v1204, 64
        %v1875 = vpop.permute.xlu0 %1874
        %1884 = vrot.lane.b32.xlu0 %v1164, 64
        %v1885 = vpop.permute.xlu0 %1884
        %1886 = vrot.lane.b32.xlu0 %v1170, 64
        %v1887 = vpop.permute.xlu0 %1886
        %1888 = vrot.lane.b32.xlu0 %v1176, 64
        %v1889 = vpop.permute.xlu0 %1888
        %1890 = vrot.lane.b32.xlu0 %v1182, 64
        %v1891 = vpop.permute.xlu0 %1890
        %1892 = vrot.lane.b32.xlu0 %v1188, 64
        %v1893 = vpop.permute.xlu0 %1892
        %1894 = vrot.lane.b32.xlu0 %v1194, 64
        %v1895 = vpop.permute.xlu0 %1894
        %1896 = vrot.lane.b32.xlu0 %v1200, 64
        %v1897 = vpop.permute.xlu0 %1896
        %1898 = vrot.lane.b32.xlu0 %v1206, 64
        %v1899 = vpop.permute.xlu0 %1898
        %1916 = vrot.lane.b32.xlu0 %v1436, 64
        %v1917 = vpop.permute.xlu0 %1916
        %1918 = vrot.lane.b32.xlu0 %v1442, 64
        %v1919 = vpop.permute.xlu0 %1918
        %1920 = vrot.lane.b32.xlu0 %v1448, 64
        %v1921 = vpop.permute.xlu0 %1920
        %1922 = vrot.lane.b32.xlu0 %v1454, 64
        %v1923 = vpop.permute.xlu0 %1922
        %1924 = vrot.lane.b32.xlu0 %v1460, 64
        %v1925 = vpop.permute.xlu0 %1924
        %1926 = vrot.lane.b32.xlu0 %v1466, 64
        %v1927 = vpop.permute.xlu0 %1926
        %1928 = vrot.lane.b32.xlu0 %v1472, 64
        %v1929 = vpop.permute.xlu0 %1928
        %1930 = vrot.lane.b32.xlu0 %v1478, 64
        %v1931 = vpop.permute.xlu0 %1930
        %1932 = vrot.lane.b32.xlu0 %v1484, 64
        %v1933 = vpop.permute.xlu0 %1932
        %1934 = vrot.lane.b32.xlu0 %v1490, 64
        %v1935 = vpop.permute.xlu0 %1934
        %1936 = vrot.lane.b32.xlu0 %v1496, 64
        %v1937 = vpop.permute.xlu0 %1936
        %1938 = vrot.lane.b32.xlu0 %v1502, 64
        %v1939 = vpop.permute.xlu0 %1938
        %1940 = vrot.lane.b32.xlu0 %v1508, 64
        %v1941 = vpop.permute.xlu0 %1940
        %1942 = vrot.lane.b32.xlu0 %v1514, 64
        %v1943 = vpop.permute.xlu0 %1942
        %1944 = vrot.lane.b32.xlu0 %v1520, 64
        %v1945 = vpop.permute.xlu0 %1944
        %1946 = vrot.lane.b32.xlu0 %v1526, 64
        %v1947 = vpop.permute.xlu0 %1946
        %1980 = vrot.lane.b32.xlu0 %v1438, 64
        %v1981 = vpop.permute.xlu0 %1980
        %1982 = vrot.lane.b32.xlu0 %v1444, 64
        %v1983 = vpop.permute.xlu0 %1982
        %1984 = vrot.lane.b32.xlu0 %v1450, 64
        %v1985 = vpop.permute.xlu0 %1984
        %1986 = vrot.lane.b32.xlu0 %v1456, 64
        %v1987 = vpop.permute.xlu0 %1986
        %1988 = vrot.lane.b32.xlu0 %v1462, 64
        %v1989 = vpop.permute.xlu0 %1988
        %1990 = vrot.lane.b32.xlu0 %v1468, 64
        %v1991 = vpop.permute.xlu0 %1990
        %1992 = vrot.lane.b32.xlu0 %v1474, 64
        %v1993 = vpop.permute.xlu0 %1992
        %1994 = vrot.lane.b32.xlu0 %v1480, 64
        %v1995 = vpop.permute.xlu0 %1994
        %1996 = vrot.lane.b32.xlu0 %v1486, 64
        %v1997 = vpop.permute.xlu0 %1996
        %1998 = vrot.lane.b32.xlu0 %v1492, 64
        %v1999 = vpop.permute.xlu0 %1998
        %2000 = vrot.lane.b32.xlu0 %v1498, 64
        %v2001 = vpop.permute.xlu0 %2000
        %2002 = vrot.lane.b32.xlu0 %v1504, 64
        %v2003 = vpop.permute.xlu0 %2002
        %2004 = vrot.lane.b32.xlu0 %v1510, 64
        %v2005 = vpop.permute.xlu0 %2004
        %2006 = vrot.lane.b32.xlu0 %v1516, 64
        %v2007 = vpop.permute.xlu0 %2006
        %2008 = vrot.lane.b32.xlu0 %v1522, 64
        %v2009 = vpop.permute.xlu0 %2008
        %2010 = vrot.lane.b32.xlu0 %v1528, 64
        %v2011 = vpop.permute.xlu0 %2010
        %2044 = vrot.lane.b32.xlu0 %v1758, 64
        %v2045 = vpop.permute.xlu0 %2044
        %2046 = vrot.lane.b32.xlu0 %v1764, 64
        %v2047 = vpop.permute.xlu0 %2046
        %2048 = vrot.lane.b32.xlu0 %v1770, 64
        %v2049 = vpop.permute.xlu0 %2048
        %2050 = vrot.lane.b32.xlu0 %v1776, 64
        %v2051 = vpop.permute.xlu0 %2050
        %2052 = vrot.lane.b32.xlu0 %v1782, 64
        %v2053 = vpop.permute.xlu0 %2052
        %2054 = vrot.lane.b32.xlu0 %v1788, 64
        %v2055 = vpop.permute.xlu0 %2054
        %2056 = vrot.lane.b32.xlu0 %v1794, 64
        %v2057 = vpop.permute.xlu0 %2056
        %2058 = vrot.lane.b32.xlu0 %v1800, 64
        %v2059 = vpop.permute.xlu0 %2058
        %2060 = vrot.lane.b32.xlu0 %v1806, 64
        %v2061 = vpop.permute.xlu0 %2060
        %2062 = vrot.lane.b32.xlu0 %v1812, 64
        %v2063 = vpop.permute.xlu0 %2062
        %2064 = vrot.lane.b32.xlu0 %v1818, 64
        %v2065 = vpop.permute.xlu0 %2064
        %2066 = vrot.lane.b32.xlu0 %v1824, 64
        %v2067 = vpop.permute.xlu0 %2066
        %2068 = vrot.lane.b32.xlu0 %v1830, 64
        %v2069 = vpop.permute.xlu0 %2068
        %2070 = vrot.lane.b32.xlu0 %v1836, 64
        %v2071 = vpop.permute.xlu0 %2070
        %2072 = vrot.lane.b32.xlu0 %v1842, 64
        %v2073 = vpop.permute.xlu0 %2072
        %2074 = vrot.lane.b32.xlu0 %v1848, 64
        %v2075 = vpop.permute.xlu0 %2074
        %2108 = vrot.lane.b32.xlu0 %v1760, 64
        %v2109 = vpop.permute.xlu0 %2108
        %2110 = vrot.lane.b32.xlu0 %v1766, 64
        %v2111 = vpop.permute.xlu0 %2110
        %2112 = vrot.lane.b32.xlu0 %v1772, 64
        %v2113 = vpop.permute.xlu0 %2112
        %2114 = vrot.lane.b32.xlu0 %v1778, 64
        %v2115 = vpop.permute.xlu0 %2114
        %2116 = vrot.lane.b32.xlu0 %v1784, 64
        %v2117 = vpop.permute.xlu0 %2116
        %2118 = vrot.lane.b32.xlu0 %v1790, 64
        %v2119 = vpop.permute.xlu0 %2118
        %2120 = vrot.lane.b32.xlu0 %v1796, 64
        %v2121 = vpop.permute.xlu0 %2120
        %2122 = vrot.lane.b32.xlu0 %v1802, 64
        %v2123 = vpop.permute.xlu0 %2122
        %2124 = vrot.lane.b32.xlu0 %v1808, 64
        %v2125 = vpop.permute.xlu0 %2124
        %2126 = vrot.lane.b32.xlu0 %v1814, 64
        %v2127 = vpop.permute.xlu0 %2126
        %2128 = vrot.lane.b32.xlu0 %v1820, 64
        %v2129 = vpop.permute.xlu0 %2128
        %2130 = vrot.lane.b32.xlu0 %v1826, 64
        %v2131 = vpop.permute.xlu0 %2130
        %2132 = vrot.lane.b32.xlu0 %v1832, 64
        %v2133 = vpop.permute.xlu0 %2132
        %2134 = vrot.lane.b32.xlu0 %v1838, 64
        %v2135 = vpop.permute.xlu0 %2134
        %2136 = vrot.lane.b32.xlu0 %v1844, 64
        %v2137 = vpop.permute.xlu0 %2136
        %2138 = vrot.lane.b32.xlu0 %v1850, 64
        %v2139 = vpop.permute.xlu0 %2138
        %2156 = vxpose.xlu0.b32.start [1/16] %v1436, 128
        %2157 = vxpose.xlu0.b32.cont [2/16] %v1442, 128
        %2158 = vxpose.xlu0.b32.cont [3/16] %v1448, 128
        %2159 = vxpose.xlu0.b32.cont [4/16] %v1454, 128
        %2160 = vxpose.xlu0.b32.cont [5/16] %v1460, 128
        %2161 = vxpose.xlu0.b32.cont [6/16] %v1466, 128
        %2162 = vxpose.xlu0.b32.cont [7/16] %v1472, 128
        %2163 = vxpose.xlu0.b32.cont [8/16] %v1478, 128
        %2164 = vxpose.xlu0.b32.cont [9/16] %v1484, 128
        %2165 = vxpose.xlu0.b32.cont [10/16] %v1490, 128
        %2166 = vxpose.xlu0.b32.cont [11/16] %v1496, 128
        %2167 = vxpose.xlu0.b32.cont [12/16] %v1502, 128
        %2168 = vxpose.xlu0.b32.cont [13/16] %v1508, 128
        %2169 = vxpose.xlu0.b32.cont [14/16] %v1514, 128
        %2170 = vxpose.xlu0.b32.cont [15/16] %v1520, 128
        %2171 = vxpose.xlu0.b32.end [16/16] %v1526, 128
        %v2172 = vpop.trf.xlu0
        %v2173 = vpop.trf.xlu0
        %v2174 = vpop.trf.xlu0
        %v2175 = vpop.trf.xlu0
        %v2176 = vpop.trf.xlu0
        %v2177 = vpop.trf.xlu0
        %v2178 = vpop.trf.xlu0
        %v2179 = vpop.trf.xlu0
        %v2180 = vpop.trf.xlu0
        %v2181 = vpop.trf.xlu0
        %v2182 = vpop.trf.xlu0
        %v2183 = vpop.trf.xlu0
        %v2184 = vpop.trf.xlu0
        %v2185 = vpop.trf.xlu0
        %v2186 = vpop.trf.xlu0
        %v2187 = vpop.trf.xlu0
        %2188 = vxpose.xlu0.b32.start [1/16] %v1917, 128
        %2189 = vxpose.xlu0.b32.cont [2/16] %v1919, 128
        %2190 = vxpose.xlu0.b32.cont [3/16] %v1921, 128
        %2191 = vxpose.xlu0.b32.cont [4/16] %v1923, 128
        %2192 = vxpose.xlu0.b32.cont [5/16] %v1925, 128
        %2193 = vxpose.xlu0.b32.cont [6/16] %v1927, 128
        %2194 = vxpose.xlu0.b32.cont [7/16] %v1929, 128
        %2195 = vxpose.xlu0.b32.cont [8/16] %v1931, 128
        %2196 = vxpose.xlu0.b32.cont [9/16] %v1933, 128
        %2197 = vxpose.xlu0.b32.cont [10/16] %v1935, 128
        %2198 = vxpose.xlu0.b32.cont [11/16] %v1937, 128
        %2199 = vxpose.xlu0.b32.cont [12/16] %v1939, 128
        %2200 = vxpose.xlu0.b32.cont [13/16] %v1941, 128
        %2201 = vxpose.xlu0.b32.cont [14/16] %v1943, 128
        %2202 = vxpose.xlu0.b32.cont [15/16] %v1945, 128
        %2203 = vxpose.xlu0.b32.end [16/16] %v1947, 128
        %v2204 = vpop.trf.xlu0
        %v2205 = vpop.trf.xlu0
        %v2206 = vpop.trf.xlu0
        %v2207 = vpop.trf.xlu0
        %v2208 = vpop.trf.xlu0
        %v2209 = vpop.trf.xlu0
        %v2210 = vpop.trf.xlu0
        %v2211 = vpop.trf.xlu0
        %v2212 = vpop.trf.xlu0
        %v2213 = vpop.trf.xlu0
        %v2214 = vpop.trf.xlu0
        %v2215 = vpop.trf.xlu0
        %v2216 = vpop.trf.xlu0
        %v2217 = vpop.trf.xlu0
        %v2218 = vpop.trf.xlu0
        %v2219 = vpop.trf.xlu0
        %2220 = vxpose.xlu0.b32.start [1/16] %v1438, 128
        %2221 = vxpose.xlu0.b32.cont [2/16] %v1444, 128
        %2222 = vxpose.xlu0.b32.cont [3/16] %v1450, 128
        %2223 = vxpose.xlu0.b32.cont [4/16] %v1456, 128
        %2224 = vxpose.xlu0.b32.cont [5/16] %v1462, 128
        %2225 = vxpose.xlu0.b32.cont [6/16] %v1468, 128
        %2226 = vxpose.xlu0.b32.cont [7/16] %v1474, 128
        %2227 = vxpose.xlu0.b32.cont [8/16] %v1480, 128
        %2228 = vxpose.xlu0.b32.cont [9/16] %v1486, 128
        %2229 = vxpose.xlu0.b32.cont [10/16] %v1492, 128
        %2230 = vxpose.xlu0.b32.cont [11/16] %v1498, 128
        %2231 = vxpose.xlu0.b32.cont [12/16] %v1504, 128
        %2232 = vxpose.xlu0.b32.cont [13/16] %v1510, 128
        %2233 = vxpose.xlu0.b32.cont [14/16] %v1516, 128
        %2234 = vxpose.xlu0.b32.cont [15/16] %v1522, 128
        %2235 = vxpose.xlu0.b32.end [16/16] %v1528, 128
        %v2236 = vpop.trf.xlu0
        %v2237 = vpop.trf.xlu0
        %v2238 = vpop.trf.xlu0
        %v2239 = vpop.trf.xlu0
        %v2240 = vpop.trf.xlu0
        %v2241 = vpop.trf.xlu0
        %v2242 = vpop.trf.xlu0
        %v2243 = vpop.trf.xlu0
        %v2244 = vpop.trf.xlu0
        %v2245 = vpop.trf.xlu0
        %v2246 = vpop.trf.xlu0
        %v2247 = vpop.trf.xlu0
        %v2248 = vpop.trf.xlu0
        %v2249 = vpop.trf.xlu0
        %v2250 = vpop.trf.xlu0
        %v2251 = vpop.trf.xlu0
        %2252 = vxpose.xlu0.b32.start [1/16] %v1981, 128
        %2253 = vxpose.xlu0.b32.cont [2/16] %v1983, 128
        %2254 = vxpose.xlu0.b32.cont [3/16] %v1985, 128
        %2255 = vxpose.xlu0.b32.cont [4/16] %v1987, 128
        %2256 = vxpose.xlu0.b32.cont [5/16] %v1989, 128
        %2257 = vxpose.xlu0.b32.cont [6/16] %v1991, 128
        %2258 = vxpose.xlu0.b32.cont [7/16] %v1993, 128
        %2259 = vxpose.xlu0.b32.cont [8/16] %v1995, 128
        %2260 = vxpose.xlu0.b32.cont [9/16] %v1997, 128
        %2261 = vxpose.xlu0.b32.cont [10/16] %v1999, 128
        %2262 = vxpose.xlu0.b32.cont [11/16] %v2001, 128
        %2263 = vxpose.xlu0.b32.cont [12/16] %v2003, 128
        %2264 = vxpose.xlu0.b32.cont [13/16] %v2005, 128
        %2265 = vxpose.xlu0.b32.cont [14/16] %v2007, 128
        %2266 = vxpose.xlu0.b32.cont [15/16] %v2009, 128
        %2267 = vxpose.xlu0.b32.end [16/16] %v2011, 128
        %v2268 = vpop.trf.xlu0
        %v2269 = vpop.trf.xlu0
        %v2270 = vpop.trf.xlu0
        %v2271 = vpop.trf.xlu0
        %v2272 = vpop.trf.xlu0
        %v2273 = vpop.trf.xlu0
        %v2274 = vpop.trf.xlu0
        %v2275 = vpop.trf.xlu0
        %v2276 = vpop.trf.xlu0
        %v2277 = vpop.trf.xlu0
        %v2278 = vpop.trf.xlu0
        %v2279 = vpop.trf.xlu0
        %v2280 = vpop.trf.xlu0
        %v2281 = vpop.trf.xlu0
        %v2282 = vpop.trf.xlu0
        %v2283 = vpop.trf.xlu0
        %vm2284 = vcmask 523264
        %v2285 = vsel %vm2284, %v1162, 0
        %v2287 = vsel %vm2284, %v1168, 0
        %v2289 = vsel %vm2284, %v1174, 0
        %v2291 = vsel %vm2284, %v1180, 0
        %v2293 = vsel %vm2284, %v1186, 0
        %v2295 = vsel %vm2284, %v1192, 0
        %v2297 = vsel %vm2284, %v1198, 0
        %v2299 = vsel %vm2284, %v1204, 0
        %2301 = vmatprep.subr.mxu0 0.0
        %2302 = vmatpush1.msra.mxu0 0.0
        %2303 = vmatprep.subr.mxu0 0.0
        %2304 = vmatpush1.msra.mxu0 0.0
        %2305 = vmatprep.subr.mxu0 0.0
        %2306 = vmatpush1.msra.mxu0 0.0
        %2307 = vmatprep.subr.mxu0 0.0
        %2308 = vmatpush1.msra.mxu0 0.0
        %2309 = vmatprep.subr.mxu0 0.0
        %2310 = vmatpush1.msra.mxu0 0.0
        %2311 = vmatprep.subr.mxu0 0.0
        %2312 = vmatpush1.msra.mxu0 0.0
        %2313 = vmatprep.subr.mxu0 0.0
        %2314 = vmatpush1.msra.mxu0 0.0
        %2315 = vmatprep.subr.mxu0 0.0
        %2316 = vmatpush1.msra.mxu0 0.0
        %2317 = vmatprep.subr.mxu0 0.0
        %2318 = vmatpush1.msra.mxu0 %v2179
        %2319 = vmatprep.subr.mxu0 0.0
        %2320 = vmatpush1.msra.mxu0 %v2178
        %2321 = vmatprep.subr.mxu0 0.0
        %2322 = vmatpush1.msra.mxu0 %v2177
        %2323 = vmatprep.subr.mxu0 0.0
        %2324 = vmatpush1.msra.mxu0 %v2176
        %2325 = vmatprep.subr.mxu0 0.0
        %2326 = vmatpush1.msra.mxu0 %v2175
        %2327 = vmatprep.subr.mxu0 0.0
        %2328 = vmatpush1.msra.mxu0 %v2174
        %2329 = vmatprep.subr.mxu0 0.0
        %2330 = vmatpush1.msra.mxu0 %v2173
        %2331 = vmatprep.subr.mxu0 0.0
        %2332 = vmatpush1.msra.mxu0 %v2172
        %2333 = vmatprep.subr.mxu0 0.0
        %2334 = vmatpush2.msra.mxu0 0.0
        %2335 = vmatprep.subr.mxu0 0.0
        %2336 = vmatpush2.msra.mxu0 0.0
        %2337 = vmatprep.subr.mxu0 0.0
        %2338 = vmatpush2.msra.mxu0 0.0
        %2339 = vmatprep.subr.mxu0 0.0
        %2340 = vmatpush2.msra.mxu0 0.0
        %2341 = vmatprep.subr.mxu0 0.0
        %2342 = vmatpush2.msra.mxu0 0.0
        %2343 = vmatprep.subr.mxu0 0.0
        %2344 = vmatpush2.msra.mxu0 0.0
        %2345 = vmatprep.subr.mxu0 0.0
        %2346 = vmatpush2.msra.mxu0 0.0
        %2347 = vmatprep.subr.mxu0 0.0
        %2348 = vmatpush2.msra.mxu0 0.0
        %2349 = vmatprep.subr.mxu0 0.0
        %2350 = vmatpush2.msra.mxu0 0.0
        %2351 = vmatprep.subr.mxu0 0.0
        %2352 = vmatpush2.msra.mxu0 0.0
        %2353 = vmatprep.subr.mxu0 0.0
        %2354 = vmatpush2.msra.mxu0 0.0
        %2355 = vmatprep.subr.mxu0 0.0
        %2356 = vmatpush2.msra.mxu0 0.0
        %2357 = vmatprep.subr.mxu0 0.0
        %2358 = vmatpush2.msra.mxu0 0.0
        %2359 = vmatprep.subr.mxu0 0.0
        %2360 = vmatpush2.msra.mxu0 0.0
        %2361 = vmatprep.subr.mxu0 0.0
        %2362 = vmatpush2.msra.mxu0 0.0
        %2363 = vmatprep.subr.mxu0 0.0
        %2364 = vmatpush2.msra.mxu0 0.0
        %2365 = vmatprep.mubr.f32.mxu0 0.0
        %2366 = vmatmul.mubr.f32.gmra.mxu0 %v2285
        %v2367 = vpop.f32.mrf.mxu0
        %v2368 = vadd.f32 0.0, %v2367
        %v2369 = vpop.f32.mrf.mxu0
        %2370 = vmatprep.mubr.f32.mxu0 0.0
        %2371 = vmatmul.mubr.f32.gmra.mxu0 %v2287
        %v2372 = vpop.f32.mrf.mxu0
        %v2373 = vadd.f32 0.0, %v2372
        %v2374 = vpop.f32.mrf.mxu0
        %2375 = vmatprep.mubr.f32.mxu0 0.0
        %2376 = vmatmul.mubr.f32.gmra.mxu0 %v2289
        %v2377 = vpop.f32.mrf.mxu0
        %v2378 = vadd.f32 0.0, %v2377
        %v2379 = vpop.f32.mrf.mxu0
        %2380 = vmatprep.mubr.f32.mxu0 0.0
        %2381 = vmatmul.mubr.f32.gmra.mxu0 %v2291
        %v2382 = vpop.f32.mrf.mxu0
        %v2383 = vadd.f32 0.0, %v2382
        %v2384 = vpop.f32.mrf.mxu0
        %2385 = vmatprep.mubr.f32.mxu0 0.0
        %2386 = vmatmul.mubr.f32.gmra.mxu0 %v2293
        %v2387 = vpop.f32.mrf.mxu0
        %v2388 = vadd.f32 0.0, %v2387
        %v2389 = vpop.f32.mrf.mxu0
        %2390 = vmatprep.mubr.f32.mxu0 0.0
        %2391 = vmatmul.mubr.f32.gmra.mxu0 %v2295
        %v2392 = vpop.f32.mrf.mxu0
        %v2393 = vadd.f32 0.0, %v2392
        %v2394 = vpop.f32.mrf.mxu0
        %2395 = vmatprep.mubr.f32.mxu0 0.0
        %2396 = vmatmul.mubr.f32.gmra.mxu0 %v2297
        %v2397 = vpop.f32.mrf.mxu0
        %v2398 = vadd.f32 0.0, %v2397
        %v2399 = vpop.f32.mrf.mxu0
        %2400 = vmatprep.mubr.f32.mxu0 0.0
        %2401 = vmatmul.mubr.f32.gmra.mxu0 %v2299
        %v2402 = vpop.f32.mrf.mxu0
        %v2403 = vadd.f32 0.0, %v2402
        %v2404 = vpop.f32.mrf.mxu0
        %2405 = vdwg.mxu0
        %v2406 = vsel %vm2284, %v1861, 0
        %v2408 = vsel %vm2284, %v1863, 0
        %v2410 = vsel %vm2284, %v1865, 0
        %v2412 = vsel %vm2284, %v1867, 0
        %v2414 = vsel %vm2284, %v1869, 0
        %v2416 = vsel %vm2284, %v1871, 0
        %v2418 = vsel %vm2284, %v1873, 0
        %v2420 = vsel %vm2284, %v1875, 0
        %2422 = vmatprep.subr.mxu0 0.0
        %2423 = vmatpush1.msra.mxu0 0.0
        %2424 = vmatprep.subr.mxu0 0.0
        %2425 = vmatpush1.msra.mxu0 0.0
        %2426 = vmatprep.subr.mxu0 0.0
        %2427 = vmatpush1.msra.mxu0 0.0
        %2428 = vmatprep.subr.mxu0 0.0
        %2429 = vmatpush1.msra.mxu0 0.0
        %2430 = vmatprep.subr.mxu0 0.0
        %2431 = vmatpush1.msra.mxu0 0.0
        %2432 = vmatprep.subr.mxu0 0.0
        %2433 = vmatpush1.msra.mxu0 0.0
        %2434 = vmatprep.subr.mxu0 0.0
        %2435 = vmatpush1.msra.mxu0 0.0
        %2436 = vmatprep.subr.mxu0 0.0
        %2437 = vmatpush1.msra.mxu0 0.0
        %2438 = vmatprep.subr.mxu0 0.0
        %2439 = vmatpush1.msra.mxu0 %v2211
        %2440 = vmatprep.subr.mxu0 0.0
        %2441 = vmatpush1.msra.mxu0 %v2210
        %2442 = vmatprep.subr.mxu0 0.0
        %2443 = vmatpush1.msra.mxu0 %v2209
        %2444 = vmatprep.subr.mxu0 0.0
        %2445 = vmatpush1.msra.mxu0 %v2208
        %2446 = vmatprep.subr.mxu0 0.0
        %2447 = vmatpush1.msra.mxu0 %v2207
        %2448 = vmatprep.subr.mxu0 0.0
        %2449 = vmatpush1.msra.mxu0 %v2206
        %2450 = vmatprep.subr.mxu0 0.0
        %2451 = vmatpush1.msra.mxu0 %v2205
        %2452 = vmatprep.subr.mxu0 0.0
        %2453 = vmatpush1.msra.mxu0 %v2204
        %2454 = vmatprep.subr.mxu0 0.0
        %2455 = vmatpush2.msra.mxu0 0.0
        %2456 = vmatprep.subr.mxu0 0.0
        %2457 = vmatpush2.msra.mxu0 0.0
        %2458 = vmatprep.subr.mxu0 0.0
        %2459 = vmatpush2.msra.mxu0 0.0
        %2460 = vmatprep.subr.mxu0 0.0
        %2461 = vmatpush2.msra.mxu0 0.0
        %2462 = vmatprep.subr.mxu0 0.0
        %2463 = vmatpush2.msra.mxu0 0.0
        %2464 = vmatprep.subr.mxu0 0.0
        %2465 = vmatpush2.msra.mxu0 0.0
        %2466 = vmatprep.subr.mxu0 0.0
        %2467 = vmatpush2.msra.mxu0 0.0
        %2468 = vmatprep.subr.mxu0 0.0
        %2469 = vmatpush2.msra.mxu0 0.0
        %2470 = vmatprep.subr.mxu0 0.0
        %2471 = vmatpush2.msra.mxu0 0.0
        %2472 = vmatprep.subr.mxu0 0.0
        %2473 = vmatpush2.msra.mxu0 0.0
        %2474 = vmatprep.subr.mxu0 0.0
        %2475 = vmatpush2.msra.mxu0 0.0
        %2476 = vmatprep.subr.mxu0 0.0
        %2477 = vmatpush2.msra.mxu0 0.0
        %2478 = vmatprep.subr.mxu0 0.0
        %2479 = vmatpush2.msra.mxu0 0.0
        %2480 = vmatprep.subr.mxu0 0.0
        %2481 = vmatpush2.msra.mxu0 0.0
        %2482 = vmatprep.subr.mxu0 0.0
        %2483 = vmatpush2.msra.mxu0 0.0
        %2484 = vmatprep.subr.mxu0 0.0
        %2485 = vmatpush2.msra.mxu0 0.0
        %2486 = vmatprep.mubr.f32.mxu0 0.0
        %2487 = vmatmul.mubr.f32.gmra.mxu0 %v2406
        %v2488 = vpop.f32.mrf.mxu0
        %v2489 = vadd.f32 0.0, %v2488
        %v2490 = vpop.f32.mrf.mxu0
        %2491 = vmatprep.mubr.f32.mxu0 0.0
        %2492 = vmatmul.mubr.f32.gmra.mxu0 %v2408
        %v2493 = vpop.f32.mrf.mxu0
        %v2494 = vadd.f32 0.0, %v2493
        %v2495 = vpop.f32.mrf.mxu0
        %2496 = vmatprep.mubr.f32.mxu0 0.0
        %2497 = vmatmul.mubr.f32.gmra.mxu0 %v2410
        %v2498 = vpop.f32.mrf.mxu0
        %v2499 = vadd.f32 0.0, %v2498
        %v2500 = vpop.f32.mrf.mxu0
        %2501 = vmatprep.mubr.f32.mxu0 0.0
        %2502 = vmatmul.mubr.f32.gmra.mxu0 %v2412
        %v2503 = vpop.f32.mrf.mxu0
        %v2504 = vadd.f32 0.0, %v2503
        %v2505 = vpop.f32.mrf.mxu0
        %2506 = vmatprep.mubr.f32.mxu0 0.0
        %2507 = vmatmul.mubr.f32.gmra.mxu0 %v2414
        %v2508 = vpop.f32.mrf.mxu0
        %v2509 = vadd.f32 0.0, %v2508
        %v2510 = vpop.f32.mrf.mxu0
        %2511 = vmatprep.mubr.f32.mxu0 0.0
        %2512 = vmatmul.mubr.f32.gmra.mxu0 %v2416
        %v2513 = vpop.f32.mrf.mxu0
        %v2514 = vadd.f32 0.0, %v2513
        %v2515 = vpop.f32.mrf.mxu0
        %2516 = vmatprep.mubr.f32.mxu0 0.0
        %2517 = vmatmul.mubr.f32.gmra.mxu0 %v2418
        %v2518 = vpop.f32.mrf.mxu0
        %v2519 = vadd.f32 0.0, %v2518
        %v2520 = vpop.f32.mrf.mxu0
        %2521 = vmatprep.mubr.f32.mxu0 0.0
        %2522 = vmatmul.mubr.f32.gmra.mxu0 %v2420
        %v2523 = vpop.f32.mrf.mxu0
        %v2524 = vadd.f32 0.0, %v2523
        %v2525 = vpop.f32.mrf.mxu0
        %2526 = vdwg.mxu0
        %v2527 = vsel %vm2284, %v1164, 0
        %v2529 = vsel %vm2284, %v1170, 0
        %v2531 = vsel %vm2284, %v1176, 0
        %v2533 = vsel %vm2284, %v1182, 0
        %v2535 = vsel %vm2284, %v1188, 0
        %v2537 = vsel %vm2284, %v1194, 0
        %v2539 = vsel %vm2284, %v1200, 0
        %v2541 = vsel %vm2284, %v1206, 0
        %2543 = vmatprep.subr.mxu0 0.0
        %2544 = vmatpush1.msra.mxu0 0.0
        %2545 = vmatprep.subr.mxu0 0.0
        %2546 = vmatpush1.msra.mxu0 0.0
        %2547 = vmatprep.subr.mxu0 0.0
        %2548 = vmatpush1.msra.mxu0 0.0
        %2549 = vmatprep.subr.mxu0 0.0
        %2550 = vmatpush1.msra.mxu0 0.0
        %2551 = vmatprep.subr.mxu0 0.0
        %2552 = vmatpush1.msra.mxu0 0.0
        %2553 = vmatprep.subr.mxu0 0.0
        %2554 = vmatpush1.msra.mxu0 0.0
        %2555 = vmatprep.subr.mxu0 0.0
        %2556 = vmatpush1.msra.mxu0 0.0
        %2557 = vmatprep.subr.mxu0 0.0
        %2558 = vmatpush1.msra.mxu0 0.0
        %2559 = vmatprep.subr.mxu0 0.0
        %2560 = vmatpush1.msra.mxu0 %v2243
        %2561 = vmatprep.subr.mxu0 0.0
        %2562 = vmatpush1.msra.mxu0 %v2242
        %2563 = vmatprep.subr.mxu0 0.0
        %2564 = vmatpush1.msra.mxu0 %v2241
        %2565 = vmatprep.subr.mxu0 0.0
        %2566 = vmatpush1.msra.mxu0 %v2240
        %2567 = vmatprep.subr.mxu0 0.0
        %2568 = vmatpush1.msra.mxu0 %v2239
        %2569 = vmatprep.subr.mxu0 0.0
        %2570 = vmatpush1.msra.mxu0 %v2238
        %2571 = vmatprep.subr.mxu0 0.0
        %2572 = vmatpush1.msra.mxu0 %v2237
        %2573 = vmatprep.subr.mxu0 0.0
        %2574 = vmatpush1.msra.mxu0 %v2236
        %2575 = vmatprep.subr.mxu0 0.0
        %2576 = vmatpush2.msra.mxu0 0.0
        %2577 = vmatprep.subr.mxu0 0.0
        %2578 = vmatpush2.msra.mxu0 0.0
        %2579 = vmatprep.subr.mxu0 0.0
        %2580 = vmatpush2.msra.mxu0 0.0
        %2581 = vmatprep.subr.mxu0 0.0
        %2582 = vmatpush2.msra.mxu0 0.0
        %2583 = vmatprep.subr.mxu0 0.0
        %2584 = vmatpush2.msra.mxu0 0.0
        %2585 = vmatprep.subr.mxu0 0.0
        %2586 = vmatpush2.msra.mxu0 0.0
        %2587 = vmatprep.subr.mxu0 0.0
        %2588 = vmatpush2.msra.mxu0 0.0
        %2589 = vmatprep.subr.mxu0 0.0
        %2590 = vmatpush2.msra.mxu0 0.0
        %2591 = vmatprep.subr.mxu0 0.0
        %2592 = vmatpush2.msra.mxu0 0.0
        %2593 = vmatprep.subr.mxu0 0.0
        %2594 = vmatpush2.msra.mxu0 0.0
        %2595 = vmatprep.subr.mxu0 0.0
        %2596 = vmatpush2.msra.mxu0 0.0
        %2597 = vmatprep.subr.mxu0 0.0
        %2598 = vmatpush2.msra.mxu0 0.0
        %2599 = vmatprep.subr.mxu0 0.0
        %2600 = vmatpush2.msra.mxu0 0.0
        %2601 = vmatprep.subr.mxu0 0.0
        %2602 = vmatpush2.msra.mxu0 0.0
        %2603 = vmatprep.subr.mxu0 0.0
        %2604 = vmatpush2.msra.mxu0 0.0
        %2605 = vmatprep.subr.mxu0 0.0
        %2606 = vmatpush2.msra.mxu0 0.0
        %2607 = vmatprep.mubr.f32.mxu0 0.0
        %2608 = vmatmul.mubr.f32.gmra.mxu0 %v2527
        %v2609 = vpop.f32.mrf.mxu0
        %v2610 = vadd.f32 0.0, %v2609
        %v2611 = vpop.f32.mrf.mxu0
        %2612 = vmatprep.mubr.f32.mxu0 0.0
        %2613 = vmatmul.mubr.f32.gmra.mxu0 %v2529
        %v2614 = vpop.f32.mrf.mxu0
        %v2615 = vadd.f32 0.0, %v2614
        %v2616 = vpop.f32.mrf.mxu0
        %2617 = vmatprep.mubr.f32.mxu0 0.0
        %2618 = vmatmul.mubr.f32.gmra.mxu0 %v2531
        %v2619 = vpop.f32.mrf.mxu0
        %v2620 = vadd.f32 0.0, %v2619
        %v2621 = vpop.f32.mrf.mxu0
        %2622 = vmatprep.mubr.f32.mxu0 0.0
        %2623 = vmatmul.mubr.f32.gmra.mxu0 %v2533
        %v2624 = vpop.f32.mrf.mxu0
        %v2625 = vadd.f32 0.0, %v2624
        %v2626 = vpop.f32.mrf.mxu0
        %2627 = vmatprep.mubr.f32.mxu0 0.0
        %2628 = vmatmul.mubr.f32.gmra.mxu0 %v2535
        %v2629 = vpop.f32.mrf.mxu0
        %v2630 = vadd.f32 0.0, %v2629
        %v2631 = vpop.f32.mrf.mxu0
        %2632 = vmatprep.mubr.f32.mxu0 0.0
        %2633 = vmatmul.mubr.f32.gmra.mxu0 %v2537
        %v2634 = vpop.f32.mrf.mxu0
        %v2635 = vadd.f32 0.0, %v2634
        %v2636 = vpop.f32.mrf.mxu0
        %2637 = vmatprep.mubr.f32.mxu0 0.0
        %2638 = vmatmul.mubr.f32.gmra.mxu0 %v2539
        %v2639 = vpop.f32.mrf.mxu0
        %v2640 = vadd.f32 0.0, %v2639
        %v2641 = vpop.f32.mrf.mxu0
        %2642 = vmatprep.mubr.f32.mxu0 0.0
        %2643 = vmatmul.mubr.f32.gmra.mxu0 %v2541
        %v2644 = vpop.f32.mrf.mxu0
        %v2645 = vadd.f32 0.0, %v2644
        %v2646 = vpop.f32.mrf.mxu0
        %2647 = vdwg.mxu0
        %v2648 = vsel %vm2284, %v1885, 0
        %v2650 = vsel %vm2284, %v1887, 0
        %v2652 = vsel %vm2284, %v1889, 0
        %v2654 = vsel %vm2284, %v1891, 0
        %v2656 = vsel %vm2284, %v1893, 0
        %v2658 = vsel %vm2284, %v1895, 0
        %v2660 = vsel %vm2284, %v1897, 0
        %v2662 = vsel %vm2284, %v1899, 0
        %2664 = vmatprep.subr.mxu0 0.0
        %2665 = vmatpush1.msra.mxu0 0.0
        %2666 = vmatprep.subr.mxu0 0.0
        %2667 = vmatpush1.msra.mxu0 0.0
        %2668 = vmatprep.subr.mxu0 0.0
        %2669 = vmatpush1.msra.mxu0 0.0
        %2670 = vmatprep.subr.mxu0 0.0
        %2671 = vmatpush1.msra.mxu0 0.0
        %2672 = vmatprep.subr.mxu0 0.0
        %2673 = vmatpush1.msra.mxu0 0.0
        %2674 = vmatprep.subr.mxu0 0.0
        %2675 = vmatpush1.msra.mxu0 0.0
        %2676 = vmatprep.subr.mxu0 0.0
        %2677 = vmatpush1.msra.mxu0 0.0
        %2678 = vmatprep.subr.mxu0 0.0
        %2679 = vmatpush1.msra.mxu0 0.0
        %2680 = vmatprep.subr.mxu0 0.0
        %2681 = vmatpush1.msra.mxu0 %v2275
        %2682 = vmatprep.subr.mxu0 0.0
        %2683 = vmatpush1.msra.mxu0 %v2274
        %2684 = vmatprep.subr.mxu0 0.0
        %2685 = vmatpush1.msra.mxu0 %v2273
        %2686 = vmatprep.subr.mxu0 0.0
        %2687 = vmatpush1.msra.mxu0 %v2272
        %2688 = vmatprep.subr.mxu0 0.0
        %2689 = vmatpush1.msra.mxu0 %v2271
        %2690 = vmatprep.subr.mxu0 0.0
        %2691 = vmatpush1.msra.mxu0 %v2270
        %2692 = vmatprep.subr.mxu0 0.0
        %2693 = vmatpush1.msra.mxu0 %v2269
        %2694 = vmatprep.subr.mxu0 0.0
        %2695 = vmatpush1.msra.mxu0 %v2268
        %2696 = vmatprep.subr.mxu0 0.0
        %2697 = vmatpush2.msra.mxu0 0.0
        %2698 = vmatprep.subr.mxu0 0.0
        %2699 = vmatpush2.msra.mxu0 0.0
        %2700 = vmatprep.subr.mxu0 0.0
        %2701 = vmatpush2.msra.mxu0 0.0
        %2702 = vmatprep.subr.mxu0 0.0
        %2703 = vmatpush2.msra.mxu0 0.0
        %2704 = vmatprep.subr.mxu0 0.0
        %2705 = vmatpush2.msra.mxu0 0.0
        %2706 = vmatprep.subr.mxu0 0.0
        %2707 = vmatpush2.msra.mxu0 0.0
        %2708 = vmatprep.subr.mxu0 0.0
        %2709 = vmatpush2.msra.mxu0 0.0
        %2710 = vmatprep.subr.mxu0 0.0
        %2711 = vmatpush2.msra.mxu0 0.0
        %2712 = vmatprep.subr.mxu0 0.0
        %2713 = vmatpush2.msra.mxu0 0.0
        %2714 = vmatprep.subr.mxu0 0.0
        %2715 = vmatpush2.msra.mxu0 0.0
        %2716 = vmatprep.subr.mxu0 0.0
        %2717 = vmatpush2.msra.mxu0 0.0
        %2718 = vmatprep.subr.mxu0 0.0
        %2719 = vmatpush2.msra.mxu0 0.0
        %2720 = vmatprep.subr.mxu0 0.0
        %2721 = vmatpush2.msra.mxu0 0.0
        %2722 = vmatprep.subr.mxu0 0.0
        %2723 = vmatpush2.msra.mxu0 0.0
        %2724 = vmatprep.subr.mxu0 0.0
        %2725 = vmatpush2.msra.mxu0 0.0
        %2726 = vmatprep.subr.mxu0 0.0
        %2727 = vmatpush2.msra.mxu0 0.0
        %2728 = vmatprep.mubr.f32.mxu0 0.0
        %2729 = vmatmul.mubr.f32.gmra.mxu0 %v2648
        %v2730 = vpop.f32.mrf.mxu0
        %v2731 = vadd.f32 0.0, %v2730
        %v2732 = vpop.f32.mrf.mxu0
        %2733 = vmatprep.mubr.f32.mxu0 0.0
        %2734 = vmatmul.mubr.f32.gmra.mxu0 %v2650
        %v2735 = vpop.f32.mrf.mxu0
        %v2736 = vadd.f32 0.0, %v2735
        %v2737 = vpop.f32.mrf.mxu0
        %2738 = vmatprep.mubr.f32.mxu0 0.0
        %2739 = vmatmul.mubr.f32.gmra.mxu0 %v2652
        %v2740 = vpop.f32.mrf.mxu0
        %v2741 = vadd.f32 0.0, %v2740
        %v2742 = vpop.f32.mrf.mxu0
        %2743 = vmatprep.mubr.f32.mxu0 0.0
        %2744 = vmatmul.mubr.f32.gmra.mxu0 %v2654
        %v2745 = vpop.f32.mrf.mxu0
        %v2746 = vadd.f32 0.0, %v2745
        %v2747 = vpop.f32.mrf.mxu0
        %2748 = vmatprep.mubr.f32.mxu0 0.0
        %2749 = vmatmul.mubr.f32.gmra.mxu0 %v2656
        %v2750 = vpop.f32.mrf.mxu0
        %v2751 = vadd.f32 0.0, %v2750
        %v2752 = vpop.f32.mrf.mxu0
        %2753 = vmatprep.mubr.f32.mxu0 0.0
        %2754 = vmatmul.mubr.f32.gmra.mxu0 %v2658
        %v2755 = vpop.f32.mrf.mxu0
        %v2756 = vadd.f32 0.0, %v2755
        %v2757 = vpop.f32.mrf.mxu0
        %2758 = vmatprep.mubr.f32.mxu0 0.0
        %2759 = vmatmul.mubr.f32.gmra.mxu0 %v2660
        %v2760 = vpop.f32.mrf.mxu0
        %v2761 = vadd.f32 0.0, %v2760
        %v2762 = vpop.f32.mrf.mxu0
        %2763 = vmatprep.mubr.f32.mxu0 0.0
        %2764 = vmatmul.mubr.f32.gmra.mxu0 %v2662
        %v2765 = vpop.f32.mrf.mxu0
        %v2766 = vadd.f32 0.0, %v2765
        %v2767 = vpop.f32.mrf.mxu0
        %2768 = vdwg.mxu0
        %v2769 = vlaneseq
        %v2770 = vshrl.u32 %v2769, 7
        %v2771 = vadd.s32 %v2770, 8
        %v2772 = vadd.s32 %v2770, 16
        %v2773 = vadd.s32 %v2770, 24
        %v2774 = vadd.s32 %v2770, 32
        %v2775 = vadd.s32 %v2770, 40
        %v2776 = vadd.s32 %v2770, 48
        %v2777 = vadd.s32 %v2770, 56
        %v2778 = vstv %s423
        %v2779 = vadd.s32 %v2778, %v2770
        %v2780 = vadd.s32 %v2778, %v2771
        %v2781 = vadd.s32 %v2778, %v2772
        %v2782 = vadd.s32 %v2778, %v2773
        %v2783 = vadd.s32 %v2778, %v2774
        %v2784 = vadd.s32 %v2778, %v2775
        %v2785 = vadd.s32 %v2778, %v2776
        %v2786 = vadd.s32 %v2778, %v2777
        %v2787 = vlaneseq
        %v2788 = vand.u32 %v2787, 127
        %vm2789 = vcmp.gt.s32.totalorder %v2788, %v2779
        %vm2790 = vcmp.gt.s32.totalorder %v2788, %v2780
        %vm2791 = vcmp.gt.s32.totalorder %v2788, %v2781
        %vm2792 = vcmp.gt.s32.totalorder %v2788, %v2782
        %vm2793 = vcmp.gt.s32.totalorder %v2788, %v2783
        %vm2794 = vcmp.gt.s32.totalorder %v2788, %v2784
        %vm2795 = vcmp.gt.s32.totalorder %v2788, %v2785
        %vm2796 = vcmp.gt.s32.totalorder %v2788, %v2786
        %v2797 = vsel %vm2789, 1, 0
        %v2798 = vsel %vm2790, 1, 0
        %v2799 = vsel %vm2791, 1, 0
        %v2800 = vsel %vm2792, 1, 0
        %v2801 = vsel %vm2793, 1, 0
        %v2802 = vsel %vm2794, 1, 0
        %v2803 = vsel %vm2795, 1, 0
        %v2804 = vsel %vm2796, 1, 0
        %vm2805 = vcmp.eq.s32.totalorder %v2797, 1
        %vm2806 = vcmp.eq.s32.totalorder %v2798, 1
        %vm2807 = vcmp.eq.s32.totalorder %v2799, 1
        %vm2808 = vcmp.eq.s32.totalorder %v2800, 1
        %vm2809 = vcmp.eq.s32.totalorder %v2801, 1
        %vm2810 = vcmp.eq.s32.totalorder %v2802, 1
        %vm2811 = vcmp.eq.s32.totalorder %v2803, 1
        %vm2812 = vcmp.eq.s32.totalorder %v2804, 1
        %v2813 = vsel %vm2805, -1e+30, %v2368
        %v2814 = vsel %vm2806, -1e+30, %v2373
        %v2815 = vsel %vm2807, -1e+30, %v2378
        %v2816 = vsel %vm2808, -1e+30, %v2383
        %v2817 = vsel %vm2809, -1e+30, %v2388
        %v2818 = vsel %vm2810, -1e+30, %v2393
        %v2819 = vsel %vm2811, -1e+30, %v2398
        %v2820 = vsel %vm2812, -1e+30, %v2403
        %v2821 = vsel %vm2805, -1e+30, %v2489
        %v2822 = vsel %vm2806, -1e+30, %v2494
        %v2823 = vsel %vm2807, -1e+30, %v2499
        %v2824 = vsel %vm2808, -1e+30, %v2504
        %v2825 = vsel %vm2809, -1e+30, %v2509
        %v2826 = vsel %vm2810, -1e+30, %v2514
        %v2827 = vsel %vm2811, -1e+30, %v2519
        %v2828 = vsel %vm2812, -1e+30, %v2524
        %v2829 = vsel %vm2805, -1e+30, %v2610
        %v2830 = vsel %vm2806, -1e+30, %v2615
        %v2831 = vsel %vm2807, -1e+30, %v2620
        %v2832 = vsel %vm2808, -1e+30, %v2625
        %v2833 = vsel %vm2809, -1e+30, %v2630
        %v2834 = vsel %vm2810, -1e+30, %v2635
        %v2835 = vsel %vm2811, -1e+30, %v2640
        %v2836 = vsel %vm2812, -1e+30, %v2645
        %v2837 = vsel %vm2805, -1e+30, %v2731
        %v2838 = vsel %vm2806, -1e+30, %v2736
        %v2839 = vsel %vm2807, -1e+30, %v2741
        %v2840 = vsel %vm2808, -1e+30, %v2746
        %v2841 = vsel %vm2809, -1e+30, %v2751
        %v2842 = vsel %vm2810, -1e+30, %v2756
        %v2843 = vsel %vm2811, -1e+30, %v2761
        %v2844 = vsel %vm2812, -1e+30, %v2766
        %2845 = vmax.xlane.f32.xlu0 %v2813
        %v2846 = vpop.xlane.xlu0 %2845
        %2847 = vmax.xlane.f32.xlu0 %v2814
        %v2848 = vpop.xlane.xlu0 %2847
        %2849 = vmax.xlane.f32.xlu0 %v2815
        %v2850 = vpop.xlane.xlu0 %2849
        %2851 = vmax.xlane.f32.xlu0 %v2816
        %v2852 = vpop.xlane.xlu0 %2851
        %2853 = vmax.xlane.f32.xlu0 %v2817
        %v2854 = vpop.xlane.xlu0 %2853
        %2855 = vmax.xlane.f32.xlu0 %v2818
        %v2856 = vpop.xlane.xlu0 %2855
        %2857 = vmax.xlane.f32.xlu0 %v2819
        %v2858 = vpop.xlane.xlu0 %2857
        %2859 = vmax.xlane.f32.xlu0 %v2820
        %v2860 = vpop.xlane.xlu0 %2859
        %2861 = vmax.xlane.f32.xlu0 %v2821
        %v2862 = vpop.xlane.xlu0 %2861
        %2863 = vmax.xlane.f32.xlu0 %v2822
        %v2864 = vpop.xlane.xlu0 %2863
        %2865 = vmax.xlane.f32.xlu0 %v2823
        %v2866 = vpop.xlane.xlu0 %2865
        %2867 = vmax.xlane.f32.xlu0 %v2824
        %v2868 = vpop.xlane.xlu0 %2867
        %2869 = vmax.xlane.f32.xlu0 %v2825
        %v2870 = vpop.xlane.xlu0 %2869
        %2871 = vmax.xlane.f32.xlu0 %v2826
        %v2872 = vpop.xlane.xlu0 %2871
        %2873 = vmax.xlane.f32.xlu0 %v2827
        %v2874 = vpop.xlane.xlu0 %2873
        %2875 = vmax.xlane.f32.xlu0 %v2828
        %v2876 = vpop.xlane.xlu0 %2875
        %2877 = vmax.xlane.f32.xlu0 %v2829
        %v2878 = vpop.xlane.xlu0 %2877
        %2879 = vmax.xlane.f32.xlu0 %v2830
        %v2880 = vpop.xlane.xlu0 %2879
        %2881 = vmax.xlane.f32.xlu0 %v2831
        %v2882 = vpop.xlane.xlu0 %2881
        %2883 = vmax.xlane.f32.xlu0 %v2832
        %v2884 = vpop.xlane.xlu0 %2883
        %2885 = vmax.xlane.f32.xlu0 %v2833
        %v2886 = vpop.xlane.xlu0 %2885
        %2887 = vmax.xlane.f32.xlu0 %v2834
        %v2888 = vpop.xlane.xlu0 %2887
        %2889 = vmax.xlane.f32.xlu0 %v2835
        %v2890 = vpop.xlane.xlu0 %2889
        %2891 = vmax.xlane.f32.xlu0 %v2836
        %v2892 = vpop.xlane.xlu0 %2891
        %2893 = vmax.xlane.f32.xlu0 %v2837
        %v2894 = vpop.xlane.xlu0 %2893
        %2895 = vmax.xlane.f32.xlu0 %v2838
        %v2896 = vpop.xlane.xlu0 %2895
        %2897 = vmax.xlane.f32.xlu0 %v2839
        %v2898 = vpop.xlane.xlu0 %2897
        %2899 = vmax.xlane.f32.xlu0 %v2840
        %v2900 = vpop.xlane.xlu0 %2899
        %2901 = vmax.xlane.f32.xlu0 %v2841
        %v2902 = vpop.xlane.xlu0 %2901
        %2903 = vmax.xlane.f32.xlu0 %v2842
        %v2904 = vpop.xlane.xlu0 %2903
        %2905 = vmax.xlane.f32.xlu0 %v2843
        %v2906 = vpop.xlane.xlu0 %2905
        %2907 = vmax.xlane.f32.xlu0 %v2844
        %v2908 = vpop.xlane.xlu0 %2907
        %v2909 = vsub.f32 %v2813, %v2846
        %v2910 = vsub.f32 %v2814, %v2848
        %v2911 = vsub.f32 %v2815, %v2850
        %v2912 = vsub.f32 %v2816, %v2852
        %v2913 = vsub.f32 %v2817, %v2854
        %v2914 = vsub.f32 %v2818, %v2856
        %v2915 = vsub.f32 %v2819, %v2858
        %v2916 = vsub.f32 %v2820, %v2860
        %v2917 = vsub.f32 %v2821, %v2862
        %v2918 = vsub.f32 %v2822, %v2864
        %v2919 = vsub.f32 %v2823, %v2866
        %v2920 = vsub.f32 %v2824, %v2868
        %v2921 = vsub.f32 %v2825, %v2870
        %v2922 = vsub.f32 %v2826, %v2872
        %v2923 = vsub.f32 %v2827, %v2874
        %v2924 = vsub.f32 %v2828, %v2876
        %v2925 = vsub.f32 %v2829, %v2878
        %v2926 = vsub.f32 %v2830, %v2880
        %v2927 = vsub.f32 %v2831, %v2882
        %v2928 = vsub.f32 %v2832, %v2884
        %v2929 = vsub.f32 %v2833, %v2886
        %v2930 = vsub.f32 %v2834, %v2888
        %v2931 = vsub.f32 %v2835, %v2890
        %v2932 = vsub.f32 %v2836, %v2892
        %v2933 = vsub.f32 %v2837, %v2894
        %v2934 = vsub.f32 %v2838, %v2896
        %v2935 = vsub.f32 %v2839, %v2898
        %v2936 = vsub.f32 %v2840, %v2900
        %v2937 = vsub.f32 %v2841, %v2902
        %v2938 = vsub.f32 %v2842, %v2904
        %v2939 = vsub.f32 %v2843, %v2906
        %v2940 = vsub.f32 %v2844, %v2908
        %v2941 = vmul.f32 %v2909, 1.442695
        %v2942 = vpow.pop %v2941
        %v2943 = vmul.f32 %v2910, 1.442695
        %v2944 = vpow.pop %v2943
        %v2945 = vmul.f32 %v2911, 1.442695
        %v2946 = vpow.pop %v2945
        %v2947 = vmul.f32 %v2912, 1.442695
        %v2948 = vpow.pop %v2947
        %v2949 = vmul.f32 %v2913, 1.442695
        %v2950 = vpow.pop %v2949
        %v2951 = vmul.f32 %v2914, 1.442695
        %v2952 = vpow.pop %v2951
        %v2953 = vmul.f32 %v2915, 1.442695
        %v2954 = vpow.pop %v2953
        %v2955 = vmul.f32 %v2916, 1.442695
        %v2956 = vpow.pop %v2955
        %v2957 = vmul.f32 %v2917, 1.442695
        %v2958 = vpow.pop %v2957
        %v2959 = vmul.f32 %v2918, 1.442695
        %v2960 = vpow.pop %v2959
        %v2961 = vmul.f32 %v2919, 1.442695
        %v2962 = vpow.pop %v2961
        %v2963 = vmul.f32 %v2920, 1.442695
        %v2964 = vpow.pop %v2963
        %v2965 = vmul.f32 %v2921, 1.442695
        %v2966 = vpow.pop %v2965
        %v2967 = vmul.f32 %v2922, 1.442695
        %v2968 = vpow.pop %v2967
        %v2969 = vmul.f32 %v2923, 1.442695
        %v2970 = vpow.pop %v2969
        %v2971 = vmul.f32 %v2924, 1.442695
        %v2972 = vpow.pop %v2971
        %v2973 = vmul.f32 %v2925, 1.442695
        %v2974 = vpow.pop %v2973
        %v2975 = vmul.f32 %v2926, 1.442695
        %v2976 = vpow.pop %v2975
        %v2977 = vmul.f32 %v2927, 1.442695
        %v2978 = vpow.pop %v2977
        %v2979 = vmul.f32 %v2928, 1.442695
        %v2980 = vpow.pop %v2979
        %v2981 = vmul.f32 %v2929, 1.442695
        %v2982 = vpow.pop %v2981
        %v2983 = vmul.f32 %v2930, 1.442695
        %v2984 = vpow.pop %v2983
        %v2985 = vmul.f32 %v2931, 1.442695
        %v2986 = vpow.pop %v2985
        %v2987 = vmul.f32 %v2932, 1.442695
        %v2988 = vpow.pop %v2987
        %v2989 = vmul.f32 %v2933, 1.442695
        %v2990 = vpow.pop %v2989
        %v2991 = vmul.f32 %v2934, 1.442695
        %v2992 = vpow.pop %v2991
        %v2993 = vmul.f32 %v2935, 1.442695
        %v2994 = vpow.pop %v2993
        %v2995 = vmul.f32 %v2936, 1.442695
        %v2996 = vpow.pop %v2995
        %v2997 = vmul.f32 %v2937, 1.442695
        %v2998 = vpow.pop %v2997
        %v2999 = vmul.f32 %v2938, 1.442695
        %v3000 = vpow.pop %v2999
        %v3001 = vmul.f32 %v2939, 1.442695
        %v3002 = vpow.pop %v3001
        %v3003 = vmul.f32 %v2940, 1.442695
        %v3004 = vpow.pop %v3003
        %3005 = vadd.xlane.f32.xlu0 %v2942
        %v3006 = vpop.xlane.xlu0 %3005
        %3007 = vadd.xlane.f32.xlu0 %v2944
        %v3008 = vpop.xlane.xlu0 %3007
        %3009 = vadd.xlane.f32.xlu0 %v2946
        %v3010 = vpop.xlane.xlu0 %3009
        %3011 = vadd.xlane.f32.xlu0 %v2948
        %v3012 = vpop.xlane.xlu0 %3011
        %3013 = vadd.xlane.f32.xlu0 %v2950
        %v3014 = vpop.xlane.xlu0 %3013
        %3015 = vadd.xlane.f32.xlu0 %v2952
        %v3016 = vpop.xlane.xlu0 %3015
        %3017 = vadd.xlane.f32.xlu0 %v2954
        %v3018 = vpop.xlane.xlu0 %3017
        %3019 = vadd.xlane.f32.xlu0 %v2956
        %v3020 = vpop.xlane.xlu0 %3019
        %3021 = vadd.xlane.f32.xlu0 %v2958
        %v3022 = vpop.xlane.xlu0 %3021
        %3023 = vadd.xlane.f32.xlu0 %v2960
        %v3024 = vpop.xlane.xlu0 %3023
        %3025 = vadd.xlane.f32.xlu0 %v2962
        %v3026 = vpop.xlane.xlu0 %3025
        %3027 = vadd.xlane.f32.xlu0 %v2964
        %v3028 = vpop.xlane.xlu0 %3027
        %3029 = vadd.xlane.f32.xlu0 %v2966
        %v3030 = vpop.xlane.xlu0 %3029
        %3031 = vadd.xlane.f32.xlu0 %v2968
        %v3032 = vpop.xlane.xlu0 %3031
        %3033 = vadd.xlane.f32.xlu0 %v2970
        %v3034 = vpop.xlane.xlu0 %3033
        %3035 = vadd.xlane.f32.xlu0 %v2972
        %v3036 = vpop.xlane.xlu0 %3035
        %3037 = vadd.xlane.f32.xlu0 %v2974
        %v3038 = vpop.xlane.xlu0 %3037
        %3039 = vadd.xlane.f32.xlu0 %v2976
        %v3040 = vpop.xlane.xlu0 %3039
        %3041 = vadd.xlane.f32.xlu0 %v2978
        %v3042 = vpop.xlane.xlu0 %3041
        %3043 = vadd.xlane.f32.xlu0 %v2980
        %v3044 = vpop.xlane.xlu0 %3043
        %3045 = vadd.xlane.f32.xlu0 %v2982
        %v3046 = vpop.xlane.xlu0 %3045
        %3047 = vadd.xlane.f32.xlu0 %v2984
        %v3048 = vpop.xlane.xlu0 %3047
        %3049 = vadd.xlane.f32.xlu0 %v2986
        %v3050 = vpop.xlane.xlu0 %3049
        %3051 = vadd.xlane.f32.xlu0 %v2988
        %v3052 = vpop.xlane.xlu0 %3051
        %3053 = vadd.xlane.f32.xlu0 %v2990
        %v3054 = vpop.xlane.xlu0 %3053
        %3055 = vadd.xlane.f32.xlu0 %v2992
        %v3056 = vpop.xlane.xlu0 %3055
        %3057 = vadd.xlane.f32.xlu0 %v2994
        %v3058 = vpop.xlane.xlu0 %3057
        %3059 = vadd.xlane.f32.xlu0 %v2996
        %v3060 = vpop.xlane.xlu0 %3059
        %3061 = vadd.xlane.f32.xlu0 %v2998
        %v3062 = vpop.xlane.xlu0 %3061
        %3063 = vadd.xlane.f32.xlu0 %v3000
        %v3064 = vpop.xlane.xlu0 %3063
        %3065 = vadd.xlane.f32.xlu0 %v3002
        %v3066 = vpop.xlane.xlu0 %3065
        %3067 = vadd.xlane.f32.xlu0 %v3004
        %v3068 = vpop.xlane.xlu0 %3067
        %3069 = vmatprep.subr.mxu0 0.0
        %3070 = vmatpush1.msra.mxu0 %v1848
        %3071 = vmatprep.subr.mxu0 0.0
        %3072 = vmatpush1.msra.mxu0 %v1842
        %3073 = vmatprep.subr.mxu0 0.0
        %3074 = vmatpush1.msra.mxu0 %v1836
        %3075 = vmatprep.subr.mxu0 0.0
        %3076 = vmatpush1.msra.mxu0 %v1830
        %3077 = vmatprep.subr.mxu0 0.0
        %3078 = vmatpush1.msra.mxu0 %v1824
        %3079 = vmatprep.subr.mxu0 0.0
        %3080 = vmatpush1.msra.mxu0 %v1818
        %3081 = vmatprep.subr.mxu0 0.0
        %3082 = vmatpush1.msra.mxu0 %v1812
        %3083 = vmatprep.subr.mxu0 0.0
        %3084 = vmatpush1.msra.mxu0 %v1806
        %3085 = vmatprep.subr.mxu0 0.0
        %3086 = vmatpush1.msra.mxu0 %v1800
        %3087 = vmatprep.subr.mxu0 0.0
        %3088 = vmatpush1.msra.mxu0 %v1794
        %3089 = vmatprep.subr.mxu0 0.0
        %3090 = vmatpush1.msra.mxu0 %v1788
        %3091 = vmatprep.subr.mxu0 0.0
        %3092 = vmatpush1.msra.mxu0 %v1782
        %3093 = vmatprep.subr.mxu0 0.0
        %3094 = vmatpush1.msra.mxu0 %v1776
        %3095 = vmatprep.subr.mxu0 0.0
        %3096 = vmatpush1.msra.mxu0 %v1770
        %3097 = vmatprep.subr.mxu0 0.0
        %3098 = vmatpush1.msra.mxu0 %v1764
        %3099 = vmatprep.subr.mxu0 0.0
        %3100 = vmatpush1.msra.mxu0 %v1758
        %3101 = vmatprep.subr.mxu0 0.0
        %3102 = vmatpush2.msra.mxu0 0.0
        %3103 = vmatprep.subr.mxu0 0.0
        %3104 = vmatpush2.msra.mxu0 0.0
        %3105 = vmatprep.subr.mxu0 0.0
        %3106 = vmatpush2.msra.mxu0 0.0
        %3107 = vmatprep.subr.mxu0 0.0
        %3108 = vmatpush2.msra.mxu0 0.0
        %3109 = vmatprep.subr.mxu0 0.0
        %3110 = vmatpush2.msra.mxu0 0.0
        %3111 = vmatprep.subr.mxu0 0.0
        %3112 = vmatpush2.msra.mxu0 0.0
        %3113 = vmatprep.subr.mxu0 0.0
        %3114 = vmatpush2.msra.mxu0 0.0
        %3115 = vmatprep.subr.mxu0 0.0
        %3116 = vmatpush2.msra.mxu0 0.0
        %3117 = vmatprep.subr.mxu0 0.0
        %3118 = vmatpush2.msra.mxu0 0.0
        %3119 = vmatprep.subr.mxu0 0.0
        %3120 = vmatpush2.msra.mxu0 0.0
        %3121 = vmatprep.subr.mxu0 0.0
        %3122 = vmatpush2.msra.mxu0 0.0
        %3123 = vmatprep.subr.mxu0 0.0
        %3124 = vmatpush2.msra.mxu0 0.0
        %3125 = vmatprep.subr.mxu0 0.0
        %3126 = vmatpush2.msra.mxu0 0.0
        %3127 = vmatprep.subr.mxu0 0.0
        %3128 = vmatpush2.msra.mxu0 0.0
        %3129 = vmatprep.subr.mxu0 0.0
        %3130 = vmatpush2.msra.mxu0 0.0
        %3131 = vmatprep.subr.mxu0 0.0
        %3132 = vmatpush2.msra.mxu0 0.0
        %3133 = vmatprep.mubr.f32.mxu0 0.0
        %3134 = vmatmul.mubr.f32.gmra.mxu0 %v2942
        %v3135 = vpop.f32.mrf.mxu0
        %v3136 = vadd.f32 0.0, %v3135
        %v3137 = vpop.f32.mrf.mxu0
        %3138 = vmatprep.mubr.f32.mxu0 0.0
        %3139 = vmatmul.mubr.f32.gmra.mxu0 %v2944
        %v3140 = vpop.f32.mrf.mxu0
        %v3141 = vadd.f32 0.0, %v3140
        %v3142 = vpop.f32.mrf.mxu0
        %3143 = vmatprep.mubr.f32.mxu0 0.0
        %3144 = vmatmul.mubr.f32.gmra.mxu0 %v2946
        %v3145 = vpop.f32.mrf.mxu0
        %v3146 = vadd.f32 0.0, %v3145
        %v3147 = vpop.f32.mrf.mxu0
        %3148 = vmatprep.mubr.f32.mxu0 0.0
        %3149 = vmatmul.mubr.f32.gmra.mxu0 %v2948
        %v3150 = vpop.f32.mrf.mxu0
        %v3151 = vadd.f32 0.0, %v3150
        %v3152 = vpop.f32.mrf.mxu0
        %3153 = vmatprep.mubr.f32.mxu0 0.0
        %3154 = vmatmul.mubr.f32.gmra.mxu0 %v2950
        %v3155 = vpop.f32.mrf.mxu0
        %v3156 = vadd.f32 0.0, %v3155
        %v3157 = vpop.f32.mrf.mxu0
        %3158 = vmatprep.mubr.f32.mxu0 0.0
        %3159 = vmatmul.mubr.f32.gmra.mxu0 %v2952
        %v3160 = vpop.f32.mrf.mxu0
        %v3161 = vadd.f32 0.0, %v3160
        %v3162 = vpop.f32.mrf.mxu0
        %3163 = vmatprep.mubr.f32.mxu0 0.0
        %3164 = vmatmul.mubr.f32.gmra.mxu0 %v2954
        %v3165 = vpop.f32.mrf.mxu0
        %v3166 = vadd.f32 0.0, %v3165
        %v3167 = vpop.f32.mrf.mxu0
        %3168 = vmatprep.mubr.f32.mxu0 0.0
        %3169 = vmatmul.mubr.f32.gmra.mxu0 %v2956
        %v3170 = vpop.f32.mrf.mxu0
        %v3171 = vadd.f32 0.0, %v3170
        %v3172 = vpop.f32.mrf.mxu0
        %3173 = vdwg.mxu0
        %3174 = vmatprep.subr.mxu0 0.0
        %3175 = vmatpush1.msra.mxu0 %v2075
        %3176 = vmatprep.subr.mxu0 0.0
        %3177 = vmatpush1.msra.mxu0 %v2073
        %3178 = vmatprep.subr.mxu0 0.0
        %3179 = vmatpush1.msra.mxu0 %v2071
        %3180 = vmatprep.subr.mxu0 0.0
        %3181 = vmatpush1.msra.mxu0 %v2069
        %3182 = vmatprep.subr.mxu0 0.0
        %3183 = vmatpush1.msra.mxu0 %v2067
        %3184 = vmatprep.subr.mxu0 0.0
        %3185 = vmatpush1.msra.mxu0 %v2065
        %3186 = vmatprep.subr.mxu0 0.0
        %3187 = vmatpush1.msra.mxu0 %v2063
        %3188 = vmatprep.subr.mxu0 0.0
        %3189 = vmatpush1.msra.mxu0 %v2061
        %3190 = vmatprep.subr.mxu0 0.0
        %3191 = vmatpush1.msra.mxu0 %v2059
        %3192 = vmatprep.subr.mxu0 0.0
        %3193 = vmatpush1.msra.mxu0 %v2057
        %3194 = vmatprep.subr.mxu0 0.0
        %3195 = vmatpush1.msra.mxu0 %v2055
        %3196 = vmatprep.subr.mxu0 0.0
        %3197 = vmatpush1.msra.mxu0 %v2053
        %3198 = vmatprep.subr.mxu0 0.0
        %3199 = vmatpush1.msra.mxu0 %v2051
        %3200 = vmatprep.subr.mxu0 0.0
        %3201 = vmatpush1.msra.mxu0 %v2049
        %3202 = vmatprep.subr.mxu0 0.0
        %3203 = vmatpush1.msra.mxu0 %v2047
        %3204 = vmatprep.subr.mxu0 0.0
        %3205 = vmatpush1.msra.mxu0 %v2045
        %3206 = vmatprep.subr.mxu0 0.0
        %3207 = vmatpush2.msra.mxu0 0.0
        %3208 = vmatprep.subr.mxu0 0.0
        %3209 = vmatpush2.msra.mxu0 0.0
        %3210 = vmatprep.subr.mxu0 0.0
        %3211 = vmatpush2.msra.mxu0 0.0
        %3212 = vmatprep.subr.mxu0 0.0
        %3213 = vmatpush2.msra.mxu0 0.0
        %3214 = vmatprep.subr.mxu0 0.0
        %3215 = vmatpush2.msra.mxu0 0.0
        %3216 = vmatprep.subr.mxu0 0.0
        %3217 = vmatpush2.msra.mxu0 0.0
        %3218 = vmatprep.subr.mxu0 0.0
        %3219 = vmatpush2.msra.mxu0 0.0
        %3220 = vmatprep.subr.mxu0 0.0
        %3221 = vmatpush2.msra.mxu0 0.0
        %3222 = vmatprep.subr.mxu0 0.0
        %3223 = vmatpush2.msra.mxu0 0.0
        %3224 = vmatprep.subr.mxu0 0.0
        %3225 = vmatpush2.msra.mxu0 0.0
        %3226 = vmatprep.subr.mxu0 0.0
        %3227 = vmatpush2.msra.mxu0 0.0
        %3228 = vmatprep.subr.mxu0 0.0
        %3229 = vmatpush2.msra.mxu0 0.0
        %3230 = vmatprep.subr.mxu0 0.0
        %3231 = vmatpush2.msra.mxu0 0.0
        %3232 = vmatprep.subr.mxu0 0.0
        %3233 = vmatpush2.msra.mxu0 0.0
        %3234 = vmatprep.subr.mxu0 0.0
        %3235 = vmatpush2.msra.mxu0 0.0
        %3236 = vmatprep.subr.mxu0 0.0
        %3237 = vmatpush2.msra.mxu0 0.0
        %3238 = vmatprep.mubr.f32.mxu0 0.0
        %3239 = vmatmul.mubr.f32.gmra.mxu0 %v2958
        %v3240 = vpop.f32.mrf.mxu0
        %v3241 = vadd.f32 0.0, %v3240
        %v3242 = vpop.f32.mrf.mxu0
        %3243 = vmatprep.mubr.f32.mxu0 0.0
        %3244 = vmatmul.mubr.f32.gmra.mxu0 %v2960
        %v3245 = vpop.f32.mrf.mxu0
        %v3246 = vadd.f32 0.0, %v3245
        %v3247 = vpop.f32.mrf.mxu0
        %3248 = vmatprep.mubr.f32.mxu0 0.0
        %3249 = vmatmul.mubr.f32.gmra.mxu0 %v2962
        %v3250 = vpop.f32.mrf.mxu0
        %v3251 = vadd.f32 0.0, %v3250
        %v3252 = vpop.f32.mrf.mxu0
        %3253 = vmatprep.mubr.f32.mxu0 0.0
        %3254 = vmatmul.mubr.f32.gmra.mxu0 %v2964
        %v3255 = vpop.f32.mrf.mxu0
        %v3256 = vadd.f32 0.0, %v3255
        %v3257 = vpop.f32.mrf.mxu0
        %3258 = vmatprep.mubr.f32.mxu0 0.0
        %3259 = vmatmul.mubr.f32.gmra.mxu0 %v2966
        %v3260 = vpop.f32.mrf.mxu0
        %v3261 = vadd.f32 0.0, %v3260
        %v3262 = vpop.f32.mrf.mxu0
        %3263 = vmatprep.mubr.f32.mxu0 0.0
        %3264 = vmatmul.mubr.f32.gmra.mxu0 %v2968
        %v3265 = vpop.f32.mrf.mxu0
        %v3266 = vadd.f32 0.0, %v3265
        %v3267 = vpop.f32.mrf.mxu0
        %3268 = vmatprep.mubr.f32.mxu0 0.0
        %3269 = vmatmul.mubr.f32.gmra.mxu0 %v2970
        %v3270 = vpop.f32.mrf.mxu0
        %v3271 = vadd.f32 0.0, %v3270
        %v3272 = vpop.f32.mrf.mxu0
        %3273 = vmatprep.mubr.f32.mxu0 0.0
        %3274 = vmatmul.mubr.f32.gmra.mxu0 %v2972
        %v3275 = vpop.f32.mrf.mxu0
        %v3276 = vadd.f32 0.0, %v3275
        %v3277 = vpop.f32.mrf.mxu0
        %3278 = vdwg.mxu0
        %3279 = vmatprep.subr.mxu0 0.0
        %3280 = vmatpush1.msra.mxu0 %v1850
        %3281 = vmatprep.subr.mxu0 0.0
        %3282 = vmatpush1.msra.mxu0 %v1844
        %3283 = vmatprep.subr.mxu0 0.0
        %3284 = vmatpush1.msra.mxu0 %v1838
        %3285 = vmatprep.subr.mxu0 0.0
        %3286 = vmatpush1.msra.mxu0 %v1832
        %3287 = vmatprep.subr.mxu0 0.0
        %3288 = vmatpush1.msra.mxu0 %v1826
        %3289 = vmatprep.subr.mxu0 0.0
        %3290 = vmatpush1.msra.mxu0 %v1820
        %3291 = vmatprep.subr.mxu0 0.0
        %3292 = vmatpush1.msra.mxu0 %v1814
        %3293 = vmatprep.subr.mxu0 0.0
        %3294 = vmatpush1.msra.mxu0 %v1808
        %3295 = vmatprep.subr.mxu0 0.0
        %3296 = vmatpush1.msra.mxu0 %v1802
        %3297 = vmatprep.subr.mxu0 0.0
        %3298 = vmatpush1.msra.mxu0 %v1796
        %3299 = vmatprep.subr.mxu0 0.0
        %3300 = vmatpush1.msra.mxu0 %v1790
        %3301 = vmatprep.subr.mxu0 0.0
        %3302 = vmatpush1.msra.mxu0 %v1784
        %3303 = vmatprep.subr.mxu0 0.0
        %3304 = vmatpush1.msra.mxu0 %v1778
        %3305 = vmatprep.subr.mxu0 0.0
        %3306 = vmatpush1.msra.mxu0 %v1772
        %3307 = vmatprep.subr.mxu0 0.0
        %3308 = vmatpush1.msra.mxu0 %v1766
        %3309 = vmatprep.subr.mxu0 0.0
        %3310 = vmatpush1.msra.mxu0 %v1760
        %3311 = vmatprep.subr.mxu0 0.0
        %3312 = vmatpush2.msra.mxu0 0.0
        %3313 = vmatprep.subr.mxu0 0.0
        %3314 = vmatpush2.msra.mxu0 0.0
        %3315 = vmatprep.subr.mxu0 0.0
        %3316 = vmatpush2.msra.mxu0 0.0
        %3317 = vmatprep.subr.mxu0 0.0
        %3318 = vmatpush2.msra.mxu0 0.0
        %3319 = vmatprep.subr.mxu0 0.0
        %3320 = vmatpush2.msra.mxu0 0.0
        %3321 = vmatprep.subr.mxu0 0.0
        %3322 = vmatpush2.msra.mxu0 0.0
        %3323 = vmatprep.subr.mxu0 0.0
        %3324 = vmatpush2.msra.mxu0 0.0
        %3325 = vmatprep.subr.mxu0 0.0
        %3326 = vmatpush2.msra.mxu0 0.0
        %3327 = vmatprep.subr.mxu0 0.0
        %3328 = vmatpush2.msra.mxu0 0.0
        %3329 = vmatprep.subr.mxu0 0.0
        %3330 = vmatpush2.msra.mxu0 0.0
        %3331 = vmatprep.subr.mxu0 0.0
        %3332 = vmatpush2.msra.mxu0 0.0
        %3333 = vmatprep.subr.mxu0 0.0
        %3334 = vmatpush2.msra.mxu0 0.0
        %3335 = vmatprep.subr.mxu0 0.0
        %3336 = vmatpush2.msra.mxu0 0.0
        %3337 = vmatprep.subr.mxu0 0.0
        %3338 = vmatpush2.msra.mxu0 0.0
        %3339 = vmatprep.subr.mxu0 0.0
        %3340 = vmatpush2.msra.mxu0 0.0
        %3341 = vmatprep.subr.mxu0 0.0
        %3342 = vmatpush2.msra.mxu0 0.0
        %3343 = vmatprep.mubr.f32.mxu0 0.0
        %3344 = vmatmul.mubr.f32.gmra.mxu0 %v2974
        %v3345 = vpop.f32.mrf.mxu0
        %v3346 = vadd.f32 0.0, %v3345
        %v3347 = vpop.f32.mrf.mxu0
        %3348 = vmatprep.mubr.f32.mxu0 0.0
        %3349 = vmatmul.mubr.f32.gmra.mxu0 %v2976
        %v3350 = vpop.f32.mrf.mxu0
        %v3351 = vadd.f32 0.0, %v3350
        %v3352 = vpop.f32.mrf.mxu0
        %3353 = vmatprep.mubr.f32.mxu0 0.0
        %3354 = vmatmul.mubr.f32.gmra.mxu0 %v2978
        %v3355 = vpop.f32.mrf.mxu0
        %v3356 = vadd.f32 0.0, %v3355
        %v3357 = vpop.f32.mrf.mxu0
        %3358 = vmatprep.mubr.f32.mxu0 0.0
        %3359 = vmatmul.mubr.f32.gmra.mxu0 %v2980
        %v3360 = vpop.f32.mrf.mxu0
        %v3361 = vadd.f32 0.0, %v3360
        %v3362 = vpop.f32.mrf.mxu0
        %3363 = vmatprep.mubr.f32.mxu0 0.0
        %3364 = vmatmul.mubr.f32.gmra.mxu0 %v2982
        %v3365 = vpop.f32.mrf.mxu0
        %v3366 = vadd.f32 0.0, %v3365
        %v3367 = vpop.f32.mrf.mxu0
        %3368 = vmatprep.mubr.f32.mxu0 0.0
        %3369 = vmatmul.mubr.f32.gmra.mxu0 %v2984
        %v3370 = vpop.f32.mrf.mxu0
        %v3371 = vadd.f32 0.0, %v3370
        %v3372 = vpop.f32.mrf.mxu0
        %3373 = vmatprep.mubr.f32.mxu0 0.0
        %3374 = vmatmul.mubr.f32.gmra.mxu0 %v2986
        %v3375 = vpop.f32.mrf.mxu0
        %v3376 = vadd.f32 0.0, %v3375
        %v3377 = vpop.f32.mrf.mxu0
        %3378 = vmatprep.mubr.f32.mxu0 0.0
        %3379 = vmatmul.mubr.f32.gmra.mxu0 %v2988
        %v3380 = vpop.f32.mrf.mxu0
        %v3381 = vadd.f32 0.0, %v3380
        %v3382 = vpop.f32.mrf.mxu0
        %3383 = vdwg.mxu0
        %3384 = vmatprep.subr.mxu0 0.0
        %3385 = vmatpush1.msra.mxu0 %v2139
        %3386 = vmatprep.subr.mxu0 0.0
        %3387 = vmatpush1.msra.mxu0 %v2137
        %3388 = vmatprep.subr.mxu0 0.0
        %3389 = vmatpush1.msra.mxu0 %v2135
        %3390 = vmatprep.subr.mxu0 0.0
        %3391 = vmatpush1.msra.mxu0 %v2133
        %3392 = vmatprep.subr.mxu0 0.0
        %3393 = vmatpush1.msra.mxu0 %v2131
        %3394 = vmatprep.subr.mxu0 0.0
        %3395 = vmatpush1.msra.mxu0 %v2129
        %3396 = vmatprep.subr.mxu0 0.0
        %3397 = vmatpush1.msra.mxu0 %v2127
        %3398 = vmatprep.subr.mxu0 0.0
        %3399 = vmatpush1.msra.mxu0 %v2125
        %3400 = vmatprep.subr.mxu0 0.0
        %3401 = vmatpush1.msra.mxu0 %v2123
        %3402 = vmatprep.subr.mxu0 0.0
        %3403 = vmatpush1.msra.mxu0 %v2121
        %3404 = vmatprep.subr.mxu0 0.0
        %3405 = vmatpush1.msra.mxu0 %v2119
        %3406 = vmatprep.subr.mxu0 0.0
        %3407 = vmatpush1.msra.mxu0 %v2117
        %3408 = vmatprep.subr.mxu0 0.0
        %3409 = vmatpush1.msra.mxu0 %v2115
        %3410 = vmatprep.subr.mxu0 0.0
        %3411 = vmatpush1.msra.mxu0 %v2113
        %3412 = vmatprep.subr.mxu0 0.0
        %3413 = vmatpush1.msra.mxu0 %v2111
        %3414 = vmatprep.subr.mxu0 0.0
        %3415 = vmatpush1.msra.mxu0 %v2109
        %3416 = vmatprep.subr.mxu0 0.0
        %3417 = vmatpush2.msra.mxu0 0.0
        %3418 = vmatprep.subr.mxu0 0.0
        %3419 = vmatpush2.msra.mxu0 0.0
        %3420 = vmatprep.subr.mxu0 0.0
        %3421 = vmatpush2.msra.mxu0 0.0
        %3422 = vmatprep.subr.mxu0 0.0
        %3423 = vmatpush2.msra.mxu0 0.0
        %3424 = vmatprep.subr.mxu0 0.0
        %3425 = vmatpush2.msra.mxu0 0.0
        %3426 = vmatprep.subr.mxu0 0.0
        %3427 = vmatpush2.msra.mxu0 0.0
        %3428 = vmatprep.subr.mxu0 0.0
        %3429 = vmatpush2.msra.mxu0 0.0
        %3430 = vmatprep.subr.mxu0 0.0
        %3431 = vmatpush2.msra.mxu0 0.0
        %3432 = vmatprep.subr.mxu0 0.0
        %3433 = vmatpush2.msra.mxu0 0.0
        %3434 = vmatprep.subr.mxu0 0.0
        %3435 = vmatpush2.msra.mxu0 0.0
        %3436 = vmatprep.subr.mxu0 0.0
        %3437 = vmatpush2.msra.mxu0 0.0
        %3438 = vmatprep.subr.mxu0 0.0
        %3439 = vmatpush2.msra.mxu0 0.0
        %3440 = vmatprep.subr.mxu0 0.0
        %3441 = vmatpush2.msra.mxu0 0.0
        %3442 = vmatprep.subr.mxu0 0.0
        %3443 = vmatpush2.msra.mxu0 0.0
        %3444 = vmatprep.subr.mxu0 0.0
        %3445 = vmatpush2.msra.mxu0 0.0
        %3446 = vmatprep.subr.mxu0 0.0
        %3447 = vmatpush2.msra.mxu0 0.0
        %3448 = vmatprep.mubr.f32.mxu0 0.0
        %3449 = vmatmul.mubr.f32.gmra.mxu0 %v2990
        %v3450 = vpop.f32.mrf.mxu0
        %v3451 = vadd.f32 0.0, %v3450
        %v3452 = vpop.f32.mrf.mxu0
        %3453 = vmatprep.mubr.f32.mxu0 0.0
        %3454 = vmatmul.mubr.f32.gmra.mxu0 %v2992
        %v3455 = vpop.f32.mrf.mxu0
        %v3456 = vadd.f32 0.0, %v3455
        %v3457 = vpop.f32.mrf.mxu0
        %3458 = vmatprep.mubr.f32.mxu0 0.0
        %3459 = vmatmul.mubr.f32.gmra.mxu0 %v2994
        %v3460 = vpop.f32.mrf.mxu0
        %v3461 = vadd.f32 0.0, %v3460
        %v3462 = vpop.f32.mrf.mxu0
        %3463 = vmatprep.mubr.f32.mxu0 0.0
        %3464 = vmatmul.mubr.f32.gmra.mxu0 %v2996
        %v3465 = vpop.f32.mrf.mxu0
        %v3466 = vadd.f32 0.0, %v3465
        %v3467 = vpop.f32.mrf.mxu0
        %3468 = vmatprep.mubr.f32.mxu0 0.0
        %3469 = vmatmul.mubr.f32.gmra.mxu0 %v2998
        %v3470 = vpop.f32.mrf.mxu0
        %v3471 = vadd.f32 0.0, %v3470
        %v3472 = vpop.f32.mrf.mxu0
        %3473 = vmatprep.mubr.f32.mxu0 0.0
        %3474 = vmatmul.mubr.f32.gmra.mxu0 %v3000
        %v3475 = vpop.f32.mrf.mxu0
        %v3476 = vadd.f32 0.0, %v3475
        %v3477 = vpop.f32.mrf.mxu0
        %3478 = vmatprep.mubr.f32.mxu0 0.0
        %3479 = vmatmul.mubr.f32.gmra.mxu0 %v3002
        %v3480 = vpop.f32.mrf.mxu0
        %v3481 = vadd.f32 0.0, %v3480
        %v3482 = vpop.f32.mrf.mxu0
        %3483 = vmatprep.mubr.f32.mxu0 0.0
        %3484 = vmatmul.mubr.f32.gmra.mxu0 %v3004
        %v3485 = vpop.f32.mrf.mxu0
        %v3486 = vadd.f32 0.0, %v3485
        %v3487 = vpop.f32.mrf.mxu0
        %3488 = vdwg.mxu0
        %v3489 = vrcp.pop %v3006
        %v3490 = vmul.f32 1.0, %v3489
        %v3491 = vrcp.pop %v3008
        %v3492 = vmul.f32 1.0, %v3491
        %v3493 = vrcp.pop %v3010
        %v3494 = vmul.f32 1.0, %v3493
        %v3495 = vrcp.pop %v3012
        %v3496 = vmul.f32 1.0, %v3495
        %v3497 = vrcp.pop %v3014
        %v3498 = vmul.f32 1.0, %v3497
        %v3499 = vrcp.pop %v3016
        %v3500 = vmul.f32 1.0, %v3499
        %v3501 = vrcp.pop %v3018
        %v3502 = vmul.f32 1.0, %v3501
        %v3503 = vrcp.pop %v3020
        %v3504 = vmul.f32 1.0, %v3503
        %v3505 = vrcp.pop %v3022
        %v3506 = vmul.f32 1.0, %v3505
        %v3507 = vrcp.pop %v3024
        %v3508 = vmul.f32 1.0, %v3507
        %v3509 = vrcp.pop %v3026
        %v3510 = vmul.f32 1.0, %v3509
        %v3511 = vrcp.pop %v3028
        %v3512 = vmul.f32 1.0, %v3511
        %v3513 = vrcp.pop %v3030
        %v3514 = vmul.f32 1.0, %v3513
        %v3515 = vrcp.pop %v3032
        %v3516 = vmul.f32 1.0, %v3515
        %v3517 = vrcp.pop %v3034
        %v3518 = vmul.f32 1.0, %v3517
        %v3519 = vrcp.pop %v3036
        %v3520 = vmul.f32 1.0, %v3519
        %v3521 = vrcp.pop %v3038
        %v3522 = vmul.f32 1.0, %v3521
        %v3523 = vrcp.pop %v3040
        %v3524 = vmul.f32 1.0, %v3523
        %v3525 = vrcp.pop %v3042
        %v3526 = vmul.f32 1.0, %v3525
        %v3527 = vrcp.pop %v3044
        %v3528 = vmul.f32 1.0, %v3527
        %v3529 = vrcp.pop %v3046
        %v3530 = vmul.f32 1.0, %v3529
        %v3531 = vrcp.pop %v3048
        %v3532 = vmul.f32 1.0, %v3531
        %v3533 = vrcp.pop %v3050
        %v3534 = vmul.f32 1.0, %v3533
        %v3535 = vrcp.pop %v3052
        %v3536 = vmul.f32 1.0, %v3535
        %v3537 = vrcp.pop %v3054
        %v3538 = vmul.f32 1.0, %v3537
        %v3539 = vrcp.pop %v3056
        %v3540 = vmul.f32 1.0, %v3539
        %v3541 = vrcp.pop %v3058
        %v3542 = vmul.f32 1.0, %v3541
        %v3543 = vrcp.pop %v3060
        %v3544 = vmul.f32 1.0, %v3543
        %v3545 = vrcp.pop %v3062
        %v3546 = vmul.f32 1.0, %v3545
        %v3547 = vrcp.pop %v3064
        %v3548 = vmul.f32 1.0, %v3547
        %v3549 = vrcp.pop %v3066
        %v3550 = vmul.f32 1.0, %v3549
        %v3551 = vrcp.pop %v3068
        %v3552 = vmul.f32 1.0, %v3551
        %v3553 = vmul.f32 %v3136, %v3490
        %v3554 = vmul.f32 %v3141, %v3492
        %v3555 = vmul.f32 %v3146, %v3494
        %v3556 = vmul.f32 %v3151, %v3496
        %v3557 = vmul.f32 %v3156, %v3498
        %v3558 = vmul.f32 %v3161, %v3500
        %v3559 = vmul.f32 %v3166, %v3502
        %v3560 = vmul.f32 %v3171, %v3504
        %v3561 = vmul.f32 %v3241, %v3506
        %v3562 = vmul.f32 %v3246, %v3508
        %v3563 = vmul.f32 %v3251, %v3510
        %v3564 = vmul.f32 %v3256, %v3512
        %v3565 = vmul.f32 %v3261, %v3514
        %v3566 = vmul.f32 %v3266, %v3516
        %v3567 = vmul.f32 %v3271, %v3518
        %v3568 = vmul.f32 %v3276, %v3520
        %v3569 = vmul.f32 %v3346, %v3522
        %v3570 = vmul.f32 %v3351, %v3524
        %v3571 = vmul.f32 %v3356, %v3526
        %v3572 = vmul.f32 %v3361, %v3528
        %v3573 = vmul.f32 %v3366, %v3530
        %v3574 = vmul.f32 %v3371, %v3532
        %v3575 = vmul.f32 %v3376, %v3534
        %v3576 = vmul.f32 %v3381, %v3536
        %v3577 = vmul.f32 %v3451, %v3538
        %v3578 = vmul.f32 %v3456, %v3540
        %v3579 = vmul.f32 %v3461, %v3542
        %v3580 = vmul.f32 %v3466, %v3544
        %v3581 = vmul.f32 %v3471, %v3546
        %v3582 = vmul.f32 %v3476, %v3548
        %v3583 = vmul.f32 %v3481, %v3550
        %v3584 = vmul.f32 %v3486, %v3552
        %v3585 = vcombine.low %v3553, %v3569
        %v3586 = vcombine.high %v3553, %v3569
        %v3588 = vunpack.c.l.s4 1983009808
        %v3589 = vunpack.c.0.s8 %v3588
        %v3590 = vlaneseq
        %v3591 = vshrl.u32 %v3590, 7
        %v3592 = vsub.s32 %v3589, %v3591
        %v3593 = vrot.slane %v3585, %v3592
        %v3595 = vunpack.c.l.s4 1983009808
        %v3596 = vunpack.c.0.s8 %v3595
        %v3597 = vlaneseq
        %v3598 = vshrl.u32 %v3597, 7
        %v3599 = vsub.s32 %v3596, %v3598
        %v3600 = vrot.slane %v3586, %v3599
        %v3601 = vcombine.low %v3561, %v3577
        %v3602 = vcombine.high %v3561, %v3577
        %v3604 = vunpack.c.l.s4 1983009808
        %v3605 = vunpack.c.0.s8 %v3604
        %v3606 = vlaneseq
        %v3607 = vshrl.u32 %v3606, 7
        %v3608 = vsub.s32 %v3605, %v3607
        %v3609 = vrot.slane %v3601, %v3608
        %v3611 = vunpack.c.l.s4 1983009808
        %v3612 = vunpack.c.0.s8 %v3611
        %v3613 = vlaneseq
        %v3614 = vshrl.u32 %v3613, 7
        %v3615 = vsub.s32 %v3612, %v3614
        %v3616 = vrot.slane %v3602, %v3615
        %v3617 = vcombine.low %v3593, %v3609
        %v3618 = vcombine.high %v3593, %v3609
        %v3620 = vunpack.c.l.s4 1934713408
        %v3621 = vunpack.c.0.s8 %v3620
        %v3622 = vlaneseq
        %v3623 = vshrl.u32 %v3622, 7
        %v3624 = vsub.s32 %v3621, %v3623
        %v3625 = vrot.slane %v3617, %v3624
        %v3627 = vunpack.c.l.s4 1934713408
        %v3628 = vunpack.c.0.s8 %v3627
        %v3629 = vlaneseq
        %v3630 = vshrl.u32 %v3629, 7
        %v3631 = vsub.s32 %v3628, %v3630
        %v3632 = vrot.slane %v3618, %v3631
        %v3633 = vcombine.low %v3600, %v3616
        %v3634 = vcombine.high %v3600, %v3616
        %v3636 = vunpack.c.l.s4 1934713408
        %v3637 = vunpack.c.0.s8 %v3636
        %v3638 = vlaneseq
        %v3639 = vshrl.u32 %v3638, 7
        %v3640 = vsub.s32 %v3637, %v3639
        %v3641 = vrot.slane %v3633, %v3640
        %v3643 = vunpack.c.l.s4 1934713408
        %v3644 = vunpack.c.0.s8 %v3643
        %v3645 = vlaneseq
        %v3646 = vshrl.u32 %v3645, 7
        %v3647 = vsub.s32 %v3644, %v3646
        %v3648 = vrot.slane %v3634, %v3647
        %v3649 = vcombine.high %v3625, 0.0
        %v3650 = vcombine.high %v3632, 0.0
        %v3651 = vcombine.high %v3641, 0.0
        %v3652 = vcombine.high %v3648, 0.0
        %v3653 = vcombine.low %v3554, %v3570
        %v3654 = vcombine.high %v3554, %v3570
        %v3656 = vunpack.c.l.s4 1983009808
        %v3657 = vunpack.c.0.s8 %v3656
        %v3658 = vlaneseq
        %v3659 = vshrl.u32 %v3658, 7
        %v3660 = vsub.s32 %v3657, %v3659
        %v3661 = vrot.slane %v3653, %v3660
        %v3663 = vunpack.c.l.s4 1983009808
        %v3664 = vunpack.c.0.s8 %v3663
        %v3665 = vlaneseq
        %v3666 = vshrl.u32 %v3665, 7
        %v3667 = vsub.s32 %v3664, %v3666
        %v3668 = vrot.slane %v3654, %v3667
        %v3669 = vcombine.low %v3562, %v3578
        %v3670 = vcombine.high %v3562, %v3578
        %v3672 = vunpack.c.l.s4 1983009808
        %v3673 = vunpack.c.0.s8 %v3672
        %v3674 = vlaneseq
        %v3675 = vshrl.u32 %v3674, 7
        %v3676 = vsub.s32 %v3673, %v3675
        %v3677 = vrot.slane %v3669, %v3676
        %v3679 = vunpack.c.l.s4 1983009808
        %v3680 = vunpack.c.0.s8 %v3679
        %v3681 = vlaneseq
        %v3682 = vshrl.u32 %v3681, 7
        %v3683 = vsub.s32 %v3680, %v3682
        %v3684 = vrot.slane %v3670, %v3683
        %v3685 = vcombine.low %v3661, %v3677
        %v3686 = vcombine.high %v3661, %v3677
        %v3688 = vunpack.c.l.s4 1934713408
        %v3689 = vunpack.c.0.s8 %v3688
        %v3690 = vlaneseq
        %v3691 = vshrl.u32 %v3690, 7
        %v3692 = vsub.s32 %v3689, %v3691
        %v3693 = vrot.slane %v3685, %v3692
        %v3695 = vunpack.c.l.s4 1934713408
        %v3696 = vunpack.c.0.s8 %v3695
        %v3697 = vlaneseq
        %v3698 = vshrl.u32 %v3697, 7
        %v3699 = vsub.s32 %v3696, %v3698
        %v3700 = vrot.slane %v3686, %v3699
        %v3701 = vcombine.low %v3668, %v3684
        %v3702 = vcombine.high %v3668, %v3684
        %v3704 = vunpack.c.l.s4 1934713408
        %v3705 = vunpack.c.0.s8 %v3704
        %v3706 = vlaneseq
        %v3707 = vshrl.u32 %v3706, 7
        %v3708 = vsub.s32 %v3705, %v3707
        %v3709 = vrot.slane %v3701, %v3708
        %v3711 = vunpack.c.l.s4 1934713408
        %v3712 = vunpack.c.0.s8 %v3711
        %v3713 = vlaneseq
        %v3714 = vshrl.u32 %v3713, 7
        %v3715 = vsub.s32 %v3712, %v3714
        %v3716 = vrot.slane %v3702, %v3715
        %v3717 = vcombine.high %v3693, 0.0
        %v3718 = vcombine.high %v3700, 0.0
        %v3719 = vcombine.high %v3709, 0.0
        %v3720 = vcombine.high %v3716, 0.0
        %v3721 = vcombine.low %v3555, %v3571
        %v3722 = vcombine.high %v3555, %v3571
        %v3724 = vunpack.c.l.s4 1983009808
        %v3725 = vunpack.c.0.s8 %v3724
        %v3726 = vlaneseq
        %v3727 = vshrl.u32 %v3726, 7
        %v3728 = vsub.s32 %v3725, %v3727
        %v3729 = vrot.slane %v3721, %v3728
        %v3731 = vunpack.c.l.s4 1983009808
        %v3732 = vunpack.c.0.s8 %v3731
        %v3733 = vlaneseq
        %v3734 = vshrl.u32 %v3733, 7
        %v3735 = vsub.s32 %v3732, %v3734
        %v3736 = vrot.slane %v3722, %v3735
        %v3737 = vcombine.low %v3563, %v3579
        %v3738 = vcombine.high %v3563, %v3579
        %v3740 = vunpack.c.l.s4 1983009808
        %v3741 = vunpack.c.0.s8 %v3740
        %v3742 = vlaneseq
        %v3743 = vshrl.u32 %v3742, 7
        %v3744 = vsub.s32 %v3741, %v3743
        %v3745 = vrot.slane %v3737, %v3744
        %v3747 = vunpack.c.l.s4 1983009808
        %v3748 = vunpack.c.0.s8 %v3747
        %v3749 = vlaneseq
        %v3750 = vshrl.u32 %v3749, 7
        %v3751 = vsub.s32 %v3748, %v3750
        %v3752 = vrot.slane %v3738, %v3751
        %v3753 = vcombine.low %v3729, %v3745
        %v3754 = vcombine.high %v3729, %v3745
        %v3756 = vunpack.c.l.s4 1934713408
        %v3757 = vunpack.c.0.s8 %v3756
        %v3758 = vlaneseq
        %v3759 = vshrl.u32 %v3758, 7
        %v3760 = vsub.s32 %v3757, %v3759
        %v3761 = vrot.slane %v3753, %v3760
        %v3763 = vunpack.c.l.s4 1934713408
        %v3764 = vunpack.c.0.s8 %v3763
        %v3765 = vlaneseq
        %v3766 = vshrl.u32 %v3765, 7
        %v3767 = vsub.s32 %v3764, %v3766
        %v3768 = vrot.slane %v3754, %v3767
        %v3769 = vcombine.low %v3736, %v3752
        %v3770 = vcombine.high %v3736, %v3752
        %v3772 = vunpack.c.l.s4 1934713408
        %v3773 = vunpack.c.0.s8 %v3772
        %v3774 = vlaneseq
        %v3775 = vshrl.u32 %v3774, 7
        %v3776 = vsub.s32 %v3773, %v3775
        %v3777 = vrot.slane %v3769, %v3776
        %v3779 = vunpack.c.l.s4 1934713408
        %v3780 = vunpack.c.0.s8 %v3779
        %v3781 = vlaneseq
        %v3782 = vshrl.u32 %v3781, 7
        %v3783 = vsub.s32 %v3780, %v3782
        %v3784 = vrot.slane %v3770, %v3783
        %v3785 = vcombine.high %v3761, 0.0
        %v3786 = vcombine.high %v3768, 0.0
        %v3787 = vcombine.high %v3777, 0.0
        %v3788 = vcombine.high %v3784, 0.0
        %v3789 = vcombine.low %v3556, %v3572
        %v3790 = vcombine.high %v3556, %v3572
        %v3792 = vunpack.c.l.s4 1983009808
        %v3793 = vunpack.c.0.s8 %v3792
        %v3794 = vlaneseq
        %v3795 = vshrl.u32 %v3794, 7
        %v3796 = vsub.s32 %v3793, %v3795
        %v3797 = vrot.slane %v3789, %v3796
        %v3799 = vunpack.c.l.s4 1983009808
        %v3800 = vunpack.c.0.s8 %v3799
        %v3801 = vlaneseq
        %v3802 = vshrl.u32 %v3801, 7
        %v3803 = vsub.s32 %v3800, %v3802
        %v3804 = vrot.slane %v3790, %v3803
        %v3805 = vcombine.low %v3564, %v3580
        %v3806 = vcombine.high %v3564, %v3580
        %v3808 = vunpack.c.l.s4 1983009808
        %v3809 = vunpack.c.0.s8 %v3808
        %v3810 = vlaneseq
        %v3811 = vshrl.u32 %v3810, 7
        %v3812 = vsub.s32 %v3809, %v3811
        %v3813 = vrot.slane %v3805, %v3812
        %v3815 = vunpack.c.l.s4 1983009808
        %v3816 = vunpack.c.0.s8 %v3815
        %v3817 = vlaneseq
        %v3818 = vshrl.u32 %v3817, 7
        %v3819 = vsub.s32 %v3816, %v3818
        %v3820 = vrot.slane %v3806, %v3819
        %v3821 = vcombine.low %v3797, %v3813
        %v3822 = vcombine.high %v3797, %v3813
        %v3824 = vunpack.c.l.s4 1934713408
        %v3825 = vunpack.c.0.s8 %v3824
        %v3826 = vlaneseq
        %v3827 = vshrl.u32 %v3826, 7
        %v3828 = vsub.s32 %v3825, %v3827
        %v3829 = vrot.slane %v3821, %v3828
        %v3831 = vunpack.c.l.s4 1934713408
        %v3832 = vunpack.c.0.s8 %v3831
        %v3833 = vlaneseq
        %v3834 = vshrl.u32 %v3833, 7
        %v3835 = vsub.s32 %v3832, %v3834
        %v3836 = vrot.slane %v3822, %v3835
        %v3837 = vcombine.low %v3804, %v3820
        %v3838 = vcombine.high %v3804, %v3820
        %v3840 = vunpack.c.l.s4 1934713408
        %v3841 = vunpack.c.0.s8 %v3840
        %v3842 = vlaneseq
        %v3843 = vshrl.u32 %v3842, 7
        %v3844 = vsub.s32 %v3841, %v3843
        %v3845 = vrot.slane %v3837, %v3844
        %v3847 = vunpack.c.l.s4 1934713408
        %v3848 = vunpack.c.0.s8 %v3847
        %v3849 = vlaneseq
        %v3850 = vshrl.u32 %v3849, 7
        %v3851 = vsub.s32 %v3848, %v3850
        %v3852 = vrot.slane %v3838, %v3851
        %v3853 = vcombine.high %v3829, 0.0
        %v3854 = vcombine.high %v3836, 0.0
        %v3855 = vcombine.high %v3845, 0.0
        %v3856 = vcombine.high %v3852, 0.0
        %v3857 = vcombine.low %v3557, %v3573
        %v3858 = vcombine.high %v3557, %v3573
        %v3860 = vunpack.c.l.s4 1983009808
        %v3861 = vunpack.c.0.s8 %v3860
        %v3862 = vlaneseq
        %v3863 = vshrl.u32 %v3862, 7
        %v3864 = vsub.s32 %v3861, %v3863
        %v3865 = vrot.slane %v3857, %v3864
        %v3867 = vunpack.c.l.s4 1983009808
        %v3868 = vunpack.c.0.s8 %v3867
        %v3869 = vlaneseq
        %v3870 = vshrl.u32 %v3869, 7
        %v3871 = vsub.s32 %v3868, %v3870
        %v3872 = vrot.slane %v3858, %v3871
        %v3873 = vcombine.low %v3565, %v3581
        %v3874 = vcombine.high %v3565, %v3581
        %v3876 = vunpack.c.l.s4 1983009808
        %v3877 = vunpack.c.0.s8 %v3876
        %v3878 = vlaneseq
        %v3879 = vshrl.u32 %v3878, 7
        %v3880 = vsub.s32 %v3877, %v3879
        %v3881 = vrot.slane %v3873, %v3880
        %v3883 = vunpack.c.l.s4 1983009808
        %v3884 = vunpack.c.0.s8 %v3883
        %v3885 = vlaneseq
        %v3886 = vshrl.u32 %v3885, 7
        %v3887 = vsub.s32 %v3884, %v3886
        %v3888 = vrot.slane %v3874, %v3887
        %v3889 = vcombine.low %v3865, %v3881
        %v3890 = vcombine.high %v3865, %v3881
        %v3892 = vunpack.c.l.s4 1934713408
        %v3893 = vunpack.c.0.s8 %v3892
        %v3894 = vlaneseq
        %v3895 = vshrl.u32 %v3894, 7
        %v3896 = vsub.s32 %v3893, %v3895
        %v3897 = vrot.slane %v3889, %v3896
        %v3899 = vunpack.c.l.s4 1934713408
        %v3900 = vunpack.c.0.s8 %v3899
        %v3901 = vlaneseq
        %v3902 = vshrl.u32 %v3901, 7
        %v3903 = vsub.s32 %v3900, %v3902
        %v3904 = vrot.slane %v3890, %v3903
        %v3905 = vcombine.low %v3872, %v3888
        %v3906 = vcombine.high %v3872, %v3888
        %v3908 = vunpack.c.l.s4 1934713408
        %v3909 = vunpack.c.0.s8 %v3908
        %v3910 = vlaneseq
        %v3911 = vshrl.u32 %v3910, 7
        %v3912 = vsub.s32 %v3909, %v3911
        %v3913 = vrot.slane %v3905, %v3912
        %v3915 = vunpack.c.l.s4 1934713408
        %v3916 = vunpack.c.0.s8 %v3915
        %v3917 = vlaneseq
        %v3918 = vshrl.u32 %v3917, 7
        %v3919 = vsub.s32 %v3916, %v3918
        %v3920 = vrot.slane %v3906, %v3919
        %v3921 = vcombine.high %v3897, 0.0
        %v3922 = vcombine.high %v3904, 0.0
        %v3923 = vcombine.high %v3913, 0.0
        %v3924 = vcombine.high %v3920, 0.0
        %v3925 = vcombine.low %v3558, %v3574
        %v3926 = vcombine.high %v3558, %v3574
        %v3928 = vunpack.c.l.s4 1983009808
        %v3929 = vunpack.c.0.s8 %v3928
        %v3930 = vlaneseq
        %v3931 = vshrl.u32 %v3930, 7
        %v3932 = vsub.s32 %v3929, %v3931
        %v3933 = vrot.slane %v3925, %v3932
        %v3935 = vunpack.c.l.s4 1983009808
        %v3936 = vunpack.c.0.s8 %v3935
        %v3937 = vlaneseq
        %v3938 = vshrl.u32 %v3937, 7
        %v3939 = vsub.s32 %v3936, %v3938
        %v3940 = vrot.slane %v3926, %v3939
        %v3941 = vcombine.low %v3566, %v3582
        %v3942 = vcombine.high %v3566, %v3582
        %v3944 = vunpack.c.l.s4 1983009808
        %v3945 = vunpack.c.0.s8 %v3944
        %v3946 = vlaneseq
        %v3947 = vshrl.u32 %v3946, 7
        %v3948 = vsub.s32 %v3945, %v3947
        %v3949 = vrot.slane %v3941, %v3948
        %v3951 = vunpack.c.l.s4 1983009808
        %v3952 = vunpack.c.0.s8 %v3951
        %v3953 = vlaneseq
        %v3954 = vshrl.u32 %v3953, 7
        %v3955 = vsub.s32 %v3952, %v3954
        %v3956 = vrot.slane %v3942, %v3955
        %v3957 = vcombine.low %v3933, %v3949
        %v3958 = vcombine.high %v3933, %v3949
        %v3960 = vunpack.c.l.s4 1934713408
        %v3961 = vunpack.c.0.s8 %v3960
        %v3962 = vlaneseq
        %v3963 = vshrl.u32 %v3962, 7
        %v3964 = vsub.s32 %v3961, %v3963
        %v3965 = vrot.slane %v3957, %v3964
        %v3967 = vunpack.c.l.s4 1934713408
        %v3968 = vunpack.c.0.s8 %v3967
        %v3969 = vlaneseq
        %v3970 = vshrl.u32 %v3969, 7
        %v3971 = vsub.s32 %v3968, %v3970
        %v3972 = vrot.slane %v3958, %v3971
        %v3973 = vcombine.low %v3940, %v3956
        %v3974 = vcombine.high %v3940, %v3956
        %v3976 = vunpack.c.l.s4 1934713408
        %v3977 = vunpack.c.0.s8 %v3976
        %v3978 = vlaneseq
        %v3979 = vshrl.u32 %v3978, 7
        %v3980 = vsub.s32 %v3977, %v3979
        %v3981 = vrot.slane %v3973, %v3980
        %v3983 = vunpack.c.l.s4 1934713408
        %v3984 = vunpack.c.0.s8 %v3983
        %v3985 = vlaneseq
        %v3986 = vshrl.u32 %v3985, 7
        %v3987 = vsub.s32 %v3984, %v3986
        %v3988 = vrot.slane %v3974, %v3987
        %v3989 = vcombine.high %v3965, 0.0
        %v3990 = vcombine.high %v3972, 0.0
        %v3991 = vcombine.high %v3981, 0.0
        %v3992 = vcombine.high %v3988, 0.0
        %v3993 = vcombine.low %v3559, %v3575
        %v3994 = vcombine.high %v3559, %v3575
        %v3996 = vunpack.c.l.s4 1983009808
        %v3997 = vunpack.c.0.s8 %v3996
        %v3998 = vlaneseq
        %v3999 = vshrl.u32 %v3998, 7
        %v4000 = vsub.s32 %v3997, %v3999
        %v4001 = vrot.slane %v3993, %v4000
        %v4003 = vunpack.c.l.s4 1983009808
        %v4004 = vunpack.c.0.s8 %v4003
        %v4005 = vlaneseq
        %v4006 = vshrl.u32 %v4005, 7
        %v4007 = vsub.s32 %v4004, %v4006
        %v4008 = vrot.slane %v3994, %v4007
        %v4009 = vcombine.low %v3567, %v3583
        %v4010 = vcombine.high %v3567, %v3583
        %v4012 = vunpack.c.l.s4 1983009808
        %v4013 = vunpack.c.0.s8 %v4012
        %v4014 = vlaneseq
        %v4015 = vshrl.u32 %v4014, 7
        %v4016 = vsub.s32 %v4013, %v4015
        %v4017 = vrot.slane %v4009, %v4016
        %v4019 = vunpack.c.l.s4 1983009808
        %v4020 = vunpack.c.0.s8 %v4019
        %v4021 = vlaneseq
        %v4022 = vshrl.u32 %v4021, 7
        %v4023 = vsub.s32 %v4020, %v4022
        %v4024 = vrot.slane %v4010, %v4023
        %v4025 = vcombine.low %v4001, %v4017
        %v4026 = vcombine.high %v4001, %v4017
        %v4028 = vunpack.c.l.s4 1934713408
        %v4029 = vunpack.c.0.s8 %v4028
        %v4030 = vlaneseq
        %v4031 = vshrl.u32 %v4030, 7
        %v4032 = vsub.s32 %v4029, %v4031
        %v4033 = vrot.slane %v4025, %v4032
        %v4035 = vunpack.c.l.s4 1934713408
        %v4036 = vunpack.c.0.s8 %v4035
        %v4037 = vlaneseq
        %v4038 = vshrl.u32 %v4037, 7
        %v4039 = vsub.s32 %v4036, %v4038
        %v4040 = vrot.slane %v4026, %v4039
        %v4041 = vcombine.low %v4008, %v4024
        %v4042 = vcombine.high %v4008, %v4024
        %v4044 = vunpack.c.l.s4 1934713408
        %v4045 = vunpack.c.0.s8 %v4044
        %v4046 = vlaneseq
        %v4047 = vshrl.u32 %v4046, 7
        %v4048 = vsub.s32 %v4045, %v4047
        %v4049 = vrot.slane %v4041, %v4048
        %v4051 = vunpack.c.l.s4 1934713408
        %v4052 = vunpack.c.0.s8 %v4051
        %v4053 = vlaneseq
        %v4054 = vshrl.u32 %v4053, 7
        %v4055 = vsub.s32 %v4052, %v4054
        %v4056 = vrot.slane %v4042, %v4055
        %v4057 = vcombine.high %v4033, 0.0
        %v4058 = vcombine.high %v4040, 0.0
        %v4059 = vcombine.high %v4049, 0.0
        %v4060 = vcombine.high %v4056, 0.0
        %v4061 = vcombine.low %v3560, %v3576
        %v4062 = vcombine.high %v3560, %v3576
        %v4064 = vunpack.c.l.s4 1983009808
        %v4065 = vunpack.c.0.s8 %v4064
        %v4066 = vlaneseq
        %v4067 = vshrl.u32 %v4066, 7
        %v4068 = vsub.s32 %v4065, %v4067
        %v4069 = vrot.slane %v4061, %v4068
        %v4071 = vunpack.c.l.s4 1983009808
        %v4072 = vunpack.c.0.s8 %v4071
        %v4073 = vlaneseq
        %v4074 = vshrl.u32 %v4073, 7
        %v4075 = vsub.s32 %v4072, %v4074
        %v4076 = vrot.slane %v4062, %v4075
        %v4077 = vcombine.low %v3568, %v3584
        %v4078 = vcombine.high %v3568, %v3584
        %v4080 = vunpack.c.l.s4 1983009808
        %v4081 = vunpack.c.0.s8 %v4080
        %v4082 = vlaneseq
        %v4083 = vshrl.u32 %v4082, 7
        %v4084 = vsub.s32 %v4081, %v4083
        %v4085 = vrot.slane %v4077, %v4084
        %v4087 = vunpack.c.l.s4 1983009808
        %v4088 = vunpack.c.0.s8 %v4087
        %v4089 = vlaneseq
        %v4090 = vshrl.u32 %v4089, 7
        %v4091 = vsub.s32 %v4088, %v4090
        %v4092 = vrot.slane %v4078, %v4091
        %v4093 = vcombine.low %v4069, %v4085
        %v4094 = vcombine.high %v4069, %v4085
        %v4096 = vunpack.c.l.s4 1934713408
        %v4097 = vunpack.c.0.s8 %v4096
        %v4098 = vlaneseq
        %v4099 = vshrl.u32 %v4098, 7
        %v4100 = vsub.s32 %v4097, %v4099
        %v4101 = vrot.slane %v4093, %v4100
        %v4103 = vunpack.c.l.s4 1934713408
        %v4104 = vunpack.c.0.s8 %v4103
        %v4105 = vlaneseq
        %v4106 = vshrl.u32 %v4105, 7
        %v4107 = vsub.s32 %v4104, %v4106
        %v4108 = vrot.slane %v4094, %v4107
        %v4109 = vcombine.low %v4076, %v4092
        %v4110 = vcombine.high %v4076, %v4092
        %v4112 = vunpack.c.l.s4 1934713408
        %v4113 = vunpack.c.0.s8 %v4112
        %v4114 = vlaneseq
        %v4115 = vshrl.u32 %v4114, 7
        %v4116 = vsub.s32 %v4113, %v4115
        %v4117 = vrot.slane %v4109, %v4116
        %v4119 = vunpack.c.l.s4 1934713408
        %v4120 = vunpack.c.0.s8 %v4119
        %v4121 = vlaneseq
        %v4122 = vshrl.u32 %v4121, 7
        %v4123 = vsub.s32 %v4120, %v4122
        %v4124 = vrot.slane %v4110, %v4123
        %v4125 = vcombine.high %v4101, 0.0
        %v4126 = vcombine.high %v4108, 0.0
        %v4127 = vcombine.high %v4117, 0.0
        %v4128 = vcombine.high %v4124, 0.0
        %v4129 = vcombine.low %v3625, %v3632
        %v4131 = vunpack.c.l.s4 1983009808
        %v4132 = vunpack.c.0.s8 %v4131
        %v4133 = vlaneseq
        %v4134 = vshrl.u32 %v4133, 7
        %v4135 = vsub.s32 %v4132, %v4134
        %v4136 = vrot.slane %v4129, %v4135
        %v4137 = vcombine.low %v3649, %v3650
        %v4139 = vunpack.c.l.s4 1983009808
        %v4140 = vunpack.c.0.s8 %v4139
        %v4141 = vlaneseq
        %v4142 = vshrl.u32 %v4141, 7
        %v4143 = vsub.s32 %v4140, %v4142
        %v4144 = vrot.slane %v4137, %v4143
        %v4145 = vcombine.low %v3641, %v3648
        %v4147 = vunpack.c.l.s4 1983009808
        %v4148 = vunpack.c.0.s8 %v4147
        %v4149 = vlaneseq
        %v4150 = vshrl.u32 %v4149, 7
        %v4151 = vsub.s32 %v4148, %v4150
        %v4152 = vrot.slane %v4145, %v4151
        %v4153 = vcombine.low %v3651, %v3652
        %v4155 = vunpack.c.l.s4 1983009808
        %v4156 = vunpack.c.0.s8 %v4155
        %v4157 = vlaneseq
        %v4158 = vshrl.u32 %v4157, 7
        %v4159 = vsub.s32 %v4156, %v4158
        %v4160 = vrot.slane %v4153, %v4159
        %v4161 = vcombine.low %v4136, %v4144
        %v4162 = vcombine.high %v4136, %v4144
        %v4164 = vunpack.c.l.s4 1934713408
        %v4165 = vunpack.c.0.s8 %v4164
        %v4166 = vlaneseq
        %v4167 = vshrl.u32 %v4166, 7
        %v4168 = vsub.s32 %v4165, %v4167
        %v4169 = vrot.slane %v4161, %v4168
        %v4171 = vunpack.c.l.s4 1934713408
        %v4172 = vunpack.c.0.s8 %v4171
        %v4173 = vlaneseq
        %v4174 = vshrl.u32 %v4173, 7
        %v4175 = vsub.s32 %v4172, %v4174
        %v4176 = vrot.slane %v4162, %v4175
        %v4177 = vcombine.low %v4152, %v4160
        %v4178 = vcombine.high %v4152, %v4160
        %v4180 = vunpack.c.l.s4 1934713408
        %v4181 = vunpack.c.0.s8 %v4180
        %v4182 = vlaneseq
        %v4183 = vshrl.u32 %v4182, 7
        %v4184 = vsub.s32 %v4181, %v4183
        %v4185 = vrot.slane %v4177, %v4184
        %v4187 = vunpack.c.l.s4 1934713408
        %v4188 = vunpack.c.0.s8 %v4187
        %v4189 = vlaneseq
        %v4190 = vshrl.u32 %v4189, 7
        %v4191 = vsub.s32 %v4188, %v4190
        %v4192 = vrot.slane %v4178, %v4191
        %v4193 = vcombine.low %v4169, %v4185
        %v4194 = vcombine.high %v4169, %v4185
        %v4195 = vcombine.low %v4176, %v4192
        %v4196 = vcombine.high %v4176, %v4192
        %v4197 = vcombine.low %v3693, %v3700
        %v4199 = vunpack.c.l.s4 1983009808
        %v4200 = vunpack.c.0.s8 %v4199
        %v4201 = vlaneseq
        %v4202 = vshrl.u32 %v4201, 7
        %v4203 = vsub.s32 %v4200, %v4202
        %v4204 = vrot.slane %v4197, %v4203
        %v4205 = vcombine.low %v3717, %v3718
        %v4207 = vunpack.c.l.s4 1983009808
        %v4208 = vunpack.c.0.s8 %v4207
        %v4209 = vlaneseq
        %v4210 = vshrl.u32 %v4209, 7
        %v4211 = vsub.s32 %v4208, %v4210
        %v4212 = vrot.slane %v4205, %v4211
        %v4213 = vcombine.low %v3709, %v3716
        %v4215 = vunpack.c.l.s4 1983009808
        %v4216 = vunpack.c.0.s8 %v4215
        %v4217 = vlaneseq
        %v4218 = vshrl.u32 %v4217, 7
        %v4219 = vsub.s32 %v4216, %v4218
        %v4220 = vrot.slane %v4213, %v4219
        %v4221 = vcombine.low %v3719, %v3720
        %v4223 = vunpack.c.l.s4 1983009808
        %v4224 = vunpack.c.0.s8 %v4223
        %v4225 = vlaneseq
        %v4226 = vshrl.u32 %v4225, 7
        %v4227 = vsub.s32 %v4224, %v4226
        %v4228 = vrot.slane %v4221, %v4227
        %v4229 = vcombine.low %v4204, %v4212
        %v4230 = vcombine.high %v4204, %v4212
        %v4232 = vunpack.c.l.s4 1934713408
        %v4233 = vunpack.c.0.s8 %v4232
        %v4234 = vlaneseq
        %v4235 = vshrl.u32 %v4234, 7
        %v4236 = vsub.s32 %v4233, %v4235
        %v4237 = vrot.slane %v4229, %v4236
        %v4239 = vunpack.c.l.s4 1934713408
        %v4240 = vunpack.c.0.s8 %v4239
        %v4241 = vlaneseq
        %v4242 = vshrl.u32 %v4241, 7
        %v4243 = vsub.s32 %v4240, %v4242
        %v4244 = vrot.slane %v4230, %v4243
        %v4245 = vcombine.low %v4220, %v4228
        %v4246 = vcombine.high %v4220, %v4228
        %v4248 = vunpack.c.l.s4 1934713408
        %v4249 = vunpack.c.0.s8 %v4248
        %v4250 = vlaneseq
        %v4251 = vshrl.u32 %v4250, 7
        %v4252 = vsub.s32 %v4249, %v4251
        %v4253 = vrot.slane %v4245, %v4252
        %v4255 = vunpack.c.l.s4 1934713408
        %v4256 = vunpack.c.0.s8 %v4255
        %v4257 = vlaneseq
        %v4258 = vshrl.u32 %v4257, 7
        %v4259 = vsub.s32 %v4256, %v4258
        %v4260 = vrot.slane %v4246, %v4259
        %v4261 = vcombine.low %v4237, %v4253
        %v4262 = vcombine.high %v4237, %v4253
        %v4263 = vcombine.low %v4244, %v4260
        %v4264 = vcombine.high %v4244, %v4260
        %v4265 = vcombine.low %v3761, %v3768
        %v4267 = vunpack.c.l.s4 1983009808
        %v4268 = vunpack.c.0.s8 %v4267
        %v4269 = vlaneseq
        %v4270 = vshrl.u32 %v4269, 7
        %v4271 = vsub.s32 %v4268, %v4270
        %v4272 = vrot.slane %v4265, %v4271
        %v4273 = vcombine.low %v3785, %v3786
        %v4275 = vunpack.c.l.s4 1983009808
        %v4276 = vunpack.c.0.s8 %v4275
        %v4277 = vlaneseq
        %v4278 = vshrl.u32 %v4277, 7
        %v4279 = vsub.s32 %v4276, %v4278
        %v4280 = vrot.slane %v4273, %v4279
        %v4281 = vcombine.low %v3777, %v3784
        %v4283 = vunpack.c.l.s4 1983009808
        %v4284 = vunpack.c.0.s8 %v4283
        %v4285 = vlaneseq
        %v4286 = vshrl.u32 %v4285, 7
        %v4287 = vsub.s32 %v4284, %v4286
        %v4288 = vrot.slane %v4281, %v4287
        %v4289 = vcombine.low %v3787, %v3788
        %v4291 = vunpack.c.l.s4 1983009808
        %v4292 = vunpack.c.0.s8 %v4291
        %v4293 = vlaneseq
        %v4294 = vshrl.u32 %v4293, 7
        %v4295 = vsub.s32 %v4292, %v4294
        %v4296 = vrot.slane %v4289, %v4295
        %v4297 = vcombine.low %v4272, %v4280
        %v4298 = vcombine.high %v4272, %v4280
        %v4300 = vunpack.c.l.s4 1934713408
        %v4301 = vunpack.c.0.s8 %v4300
        %v4302 = vlaneseq
        %v4303 = vshrl.u32 %v4302, 7
        %v4304 = vsub.s32 %v4301, %v4303
        %v4305 = vrot.slane %v4297, %v4304
        %v4307 = vunpack.c.l.s4 1934713408
        %v4308 = vunpack.c.0.s8 %v4307
        %v4309 = vlaneseq
        %v4310 = vshrl.u32 %v4309, 7
        %v4311 = vsub.s32 %v4308, %v4310
        %v4312 = vrot.slane %v4298, %v4311
        %v4313 = vcombine.low %v4288, %v4296
        %v4314 = vcombine.high %v4288, %v4296
        %v4316 = vunpack.c.l.s4 1934713408
        %v4317 = vunpack.c.0.s8 %v4316
        %v4318 = vlaneseq
        %v4319 = vshrl.u32 %v4318, 7
        %v4320 = vsub.s32 %v4317, %v4319
        %v4321 = vrot.slane %v4313, %v4320
        %v4323 = vunpack.c.l.s4 1934713408
        %v4324 = vunpack.c.0.s8 %v4323
        %v4325 = vlaneseq
        %v4326 = vshrl.u32 %v4325, 7
        %v4327 = vsub.s32 %v4324, %v4326
        %v4328 = vrot.slane %v4314, %v4327
        %v4329 = vcombine.low %v4305, %v4321
        %v4330 = vcombine.high %v4305, %v4321
        %v4331 = vcombine.low %v4312, %v4328
        %v4332 = vcombine.high %v4312, %v4328
        %v4333 = vcombine.low %v3829, %v3836
        %v4335 = vunpack.c.l.s4 1983009808
        %v4336 = vunpack.c.0.s8 %v4335
        %v4337 = vlaneseq
        %v4338 = vshrl.u32 %v4337, 7
        %v4339 = vsub.s32 %v4336, %v4338
        %v4340 = vrot.slane %v4333, %v4339
        %v4341 = vcombine.low %v3853, %v3854
        %v4343 = vunpack.c.l.s4 1983009808
        %v4344 = vunpack.c.0.s8 %v4343
        %v4345 = vlaneseq
        %v4346 = vshrl.u32 %v4345, 7
        %v4347 = vsub.s32 %v4344, %v4346
        %v4348 = vrot.slane %v4341, %v4347
        %v4349 = vcombine.low %v3845, %v3852
        %v4351 = vunpack.c.l.s4 1983009808
        %v4352 = vunpack.c.0.s8 %v4351
        %v4353 = vlaneseq
        %v4354 = vshrl.u32 %v4353, 7
        %v4355 = vsub.s32 %v4352, %v4354
        %v4356 = vrot.slane %v4349, %v4355
        %v4357 = vcombine.low %v3855, %v3856
        %v4359 = vunpack.c.l.s4 1983009808
        %v4360 = vunpack.c.0.s8 %v4359
        %v4361 = vlaneseq
        %v4362 = vshrl.u32 %v4361, 7
        %v4363 = vsub.s32 %v4360, %v4362
        %v4364 = vrot.slane %v4357, %v4363
        %v4365 = vcombine.low %v4340, %v4348
        %v4366 = vcombine.high %v4340, %v4348
        %v4368 = vunpack.c.l.s4 1934713408
        %v4369 = vunpack.c.0.s8 %v4368
        %v4370 = vlaneseq
        %v4371 = vshrl.u32 %v4370, 7
        %v4372 = vsub.s32 %v4369, %v4371
        %v4373 = vrot.slane %v4365, %v4372
        %v4375 = vunpack.c.l.s4 1934713408
        %v4376 = vunpack.c.0.s8 %v4375
        %v4377 = vlaneseq
        %v4378 = vshrl.u32 %v4377, 7
        %v4379 = vsub.s32 %v4376, %v4378
        %v4380 = vrot.slane %v4366, %v4379
        %v4381 = vcombine.low %v4356, %v4364
        %v4382 = vcombine.high %v4356, %v4364
        %v4384 = vunpack.c.l.s4 1934713408
        %v4385 = vunpack.c.0.s8 %v4384
        %v4386 = vlaneseq
        %v4387 = vshrl.u32 %v4386, 7
        %v4388 = vsub.s32 %v4385, %v4387
        %v4389 = vrot.slane %v4381, %v4388
        %v4391 = vunpack.c.l.s4 1934713408
        %v4392 = vunpack.c.0.s8 %v4391
        %v4393 = vlaneseq
        %v4394 = vshrl.u32 %v4393, 7
        %v4395 = vsub.s32 %v4392, %v4394
        %v4396 = vrot.slane %v4382, %v4395
        %v4397 = vcombine.low %v4373, %v4389
        %v4398 = vcombine.high %v4373, %v4389
        %v4399 = vcombine.low %v4380, %v4396
        %v4400 = vcombine.high %v4380, %v4396
        %v4401 = vcombine.low %v3897, %v3904
        %v4403 = vunpack.c.l.s4 1983009808
        %v4404 = vunpack.c.0.s8 %v4403
        %v4405 = vlaneseq
        %v4406 = vshrl.u32 %v4405, 7
        %v4407 = vsub.s32 %v4404, %v4406
        %v4408 = vrot.slane %v4401, %v4407
        %v4409 = vcombine.low %v3921, %v3922
        %v4411 = vunpack.c.l.s4 1983009808
        %v4412 = vunpack.c.0.s8 %v4411
        %v4413 = vlaneseq
        %v4414 = vshrl.u32 %v4413, 7
        %v4415 = vsub.s32 %v4412, %v4414
        %v4416 = vrot.slane %v4409, %v4415
        %v4417 = vcombine.low %v3913, %v3920
        %v4419 = vunpack.c.l.s4 1983009808
        %v4420 = vunpack.c.0.s8 %v4419
        %v4421 = vlaneseq
        %v4422 = vshrl.u32 %v4421, 7
        %v4423 = vsub.s32 %v4420, %v4422
        %v4424 = vrot.slane %v4417, %v4423
        %v4425 = vcombine.low %v3923, %v3924
        %v4427 = vunpack.c.l.s4 1983009808
        %v4428 = vunpack.c.0.s8 %v4427
        %v4429 = vlaneseq
        %v4430 = vshrl.u32 %v4429, 7
        %v4431 = vsub.s32 %v4428, %v4430
        %v4432 = vrot.slane %v4425, %v4431
        %v4433 = vcombine.low %v4408, %v4416
        %v4434 = vcombine.high %v4408, %v4416
        %v4436 = vunpack.c.l.s4 1934713408
        %v4437 = vunpack.c.0.s8 %v4436
        %v4438 = vlaneseq
        %v4439 = vshrl.u32 %v4438, 7
        %v4440 = vsub.s32 %v4437, %v4439
        %v4441 = vrot.slane %v4433, %v4440
        %v4443 = vunpack.c.l.s4 1934713408
        %v4444 = vunpack.c.0.s8 %v4443
        %v4445 = vlaneseq
        %v4446 = vshrl.u32 %v4445, 7
        %v4447 = vsub.s32 %v4444, %v4446
        %v4448 = vrot.slane %v4434, %v4447
        %v4449 = vcombine.low %v4424, %v4432
        %v4450 = vcombine.high %v4424, %v4432
        %v4452 = vunpack.c.l.s4 1934713408
        %v4453 = vunpack.c.0.s8 %v4452
        %v4454 = vlaneseq
        %v4455 = vshrl.u32 %v4454, 7
        %v4456 = vsub.s32 %v4453, %v4455
        %v4457 = vrot.slane %v4449, %v4456
        %v4459 = vunpack.c.l.s4 1934713408
        %v4460 = vunpack.c.0.s8 %v4459
        %v4461 = vlaneseq
        %v4462 = vshrl.u32 %v4461, 7
        %v4463 = vsub.s32 %v4460, %v4462
        %v4464 = vrot.slane %v4450, %v4463
        %v4465 = vcombine.low %v4441, %v4457
        %v4466 = vcombine.high %v4441, %v4457
        %v4467 = vcombine.low %v4448, %v4464
        %v4468 = vcombine.high %v4448, %v4464
        %v4469 = vcombine.low %v3965, %v3972
        %v4471 = vunpack.c.l.s4 1983009808
        %v4472 = vunpack.c.0.s8 %v4471
        %v4473 = vlaneseq
        %v4474 = vshrl.u32 %v4473, 7
        %v4475 = vsub.s32 %v4472, %v4474
        %v4476 = vrot.slane %v4469, %v4475
        %v4477 = vcombine.low %v3989, %v3990
        %v4479 = vunpack.c.l.s4 1983009808
        %v4480 = vunpack.c.0.s8 %v4479
        %v4481 = vlaneseq
        %v4482 = vshrl.u32 %v4481, 7
        %v4483 = vsub.s32 %v4480, %v4482
        %v4484 = vrot.slane %v4477, %v4483
        %v4485 = vcombine.low %v3981, %v3988
        %v4487 = vunpack.c.l.s4 1983009808
        %v4488 = vunpack.c.0.s8 %v4487
        %v4489 = vlaneseq
        %v4490 = vshrl.u32 %v4489, 7
        %v4491 = vsub.s32 %v4488, %v4490
        %v4492 = vrot.slane %v4485, %v4491
        %v4493 = vcombine.low %v3991, %v3992
        %v4495 = vunpack.c.l.s4 1983009808
        %v4496 = vunpack.c.0.s8 %v4495
        %v4497 = vlaneseq
        %v4498 = vshrl.u32 %v4497, 7
        %v4499 = vsub.s32 %v4496, %v4498
        %v4500 = vrot.slane %v4493, %v4499
        %v4501 = vcombine.low %v4476, %v4484
        %v4502 = vcombine.high %v4476, %v4484
        %v4504 = vunpack.c.l.s4 1934713408
        %v4505 = vunpack.c.0.s8 %v4504
        %v4506 = vlaneseq
        %v4507 = vshrl.u32 %v4506, 7
        %v4508 = vsub.s32 %v4505, %v4507
        %v4509 = vrot.slane %v4501, %v4508
        %v4511 = vunpack.c.l.s4 1934713408
        %v4512 = vunpack.c.0.s8 %v4511
        %v4513 = vlaneseq
        %v4514 = vshrl.u32 %v4513, 7
        %v4515 = vsub.s32 %v4512, %v4514
        %v4516 = vrot.slane %v4502, %v4515
        %v4517 = vcombine.low %v4492, %v4500
        %v4518 = vcombine.high %v4492, %v4500
        %v4520 = vunpack.c.l.s4 1934713408
        %v4521 = vunpack.c.0.s8 %v4520
        %v4522 = vlaneseq
        %v4523 = vshrl.u32 %v4522, 7
        %v4524 = vsub.s32 %v4521, %v4523
        %v4525 = vrot.slane %v4517, %v4524
        %v4527 = vunpack.c.l.s4 1934713408
        %v4528 = vunpack.c.0.s8 %v4527
        %v4529 = vlaneseq
        %v4530 = vshrl.u32 %v4529, 7
        %v4531 = vsub.s32 %v4528, %v4530
        %v4532 = vrot.slane %v4518, %v4531
        %v4533 = vcombine.low %v4509, %v4525
        %v4534 = vcombine.high %v4509, %v4525
        %v4535 = vcombine.low %v4516, %v4532
        %v4536 = vcombine.high %v4516, %v4532
        %v4537 = vcombine.low %v4033, %v4040
        %v4539 = vunpack.c.l.s4 1983009808
        %v4540 = vunpack.c.0.s8 %v4539
        %v4541 = vlaneseq
        %v4542 = vshrl.u32 %v4541, 7
        %v4543 = vsub.s32 %v4540, %v4542
        %v4544 = vrot.slane %v4537, %v4543
        %v4545 = vcombine.low %v4057, %v4058
        %v4547 = vunpack.c.l.s4 1983009808
        %v4548 = vunpack.c.0.s8 %v4547
        %v4549 = vlaneseq
        %v4550 = vshrl.u32 %v4549, 7
        %v4551 = vsub.s32 %v4548, %v4550
        %v4552 = vrot.slane %v4545, %v4551
        %v4553 = vcombine.low %v4049, %v4056
        %v4555 = vunpack.c.l.s4 1983009808
        %v4556 = vunpack.c.0.s8 %v4555
        %v4557 = vlaneseq
        %v4558 = vshrl.u32 %v4557, 7
        %v4559 = vsub.s32 %v4556, %v4558
        %v4560 = vrot.slane %v4553, %v4559
        %v4561 = vcombine.low %v4059, %v4060
        %v4563 = vunpack.c.l.s4 1983009808
        %v4564 = vunpack.c.0.s8 %v4563
        %v4565 = vlaneseq
        %v4566 = vshrl.u32 %v4565, 7
        %v4567 = vsub.s32 %v4564, %v4566
        %v4568 = vrot.slane %v4561, %v4567
        %v4569 = vcombine.low %v4544, %v4552
        %v4570 = vcombine.high %v4544, %v4552
        %v4572 = vunpack.c.l.s4 1934713408
        %v4573 = vunpack.c.0.s8 %v4572
        %v4574 = vlaneseq
        %v4575 = vshrl.u32 %v4574, 7
        %v4576 = vsub.s32 %v4573, %v4575
        %v4577 = vrot.slane %v4569, %v4576
        %v4579 = vunpack.c.l.s4 1934713408
        %v4580 = vunpack.c.0.s8 %v4579
        %v4581 = vlaneseq
        %v4582 = vshrl.u32 %v4581, 7
        %v4583 = vsub.s32 %v4580, %v4582
        %v4584 = vrot.slane %v4570, %v4583
        %v4585 = vcombine.low %v4560, %v4568
        %v4586 = vcombine.high %v4560, %v4568
        %v4588 = vunpack.c.l.s4 1934713408
        %v4589 = vunpack.c.0.s8 %v4588
        %v4590 = vlaneseq
        %v4591 = vshrl.u32 %v4590, 7
        %v4592 = vsub.s32 %v4589, %v4591
        %v4593 = vrot.slane %v4585, %v4592
        %v4595 = vunpack.c.l.s4 1934713408
        %v4596 = vunpack.c.0.s8 %v4595
        %v4597 = vlaneseq
        %v4598 = vshrl.u32 %v4597, 7
        %v4599 = vsub.s32 %v4596, %v4598
        %v4600 = vrot.slane %v4586, %v4599
        %v4601 = vcombine.low %v4577, %v4593
        %v4602 = vcombine.high %v4577, %v4593
        %v4603 = vcombine.low %v4584, %v4600
        %v4604 = vcombine.high %v4584, %v4600
        %v4605 = vcombine.low %v4101, %v4108
        %v4607 = vunpack.c.l.s4 1983009808
        %v4608 = vunpack.c.0.s8 %v4607
        %v4609 = vlaneseq
        %v4610 = vshrl.u32 %v4609, 7
        %v4611 = vsub.s32 %v4608, %v4610
        %v4612 = vrot.slane %v4605, %v4611
        %v4613 = vcombine.low %v4125, %v4126
        %v4615 = vunpack.c.l.s4 1983009808
        %v4616 = vunpack.c.0.s8 %v4615
        %v4617 = vlaneseq
        %v4618 = vshrl.u32 %v4617, 7
        %v4619 = vsub.s32 %v4616, %v4618
        %v4620 = vrot.slane %v4613, %v4619
        %v4621 = vcombine.low %v4117, %v4124
        %v4623 = vunpack.c.l.s4 1983009808
        %v4624 = vunpack.c.0.s8 %v4623
        %v4625 = vlaneseq
        %v4626 = vshrl.u32 %v4625, 7
        %v4627 = vsub.s32 %v4624, %v4626
        %v4628 = vrot.slane %v4621, %v4627
        %v4629 = vcombine.low %v4127, %v4128
        %v4631 = vunpack.c.l.s4 1983009808
        %v4632 = vunpack.c.0.s8 %v4631
        %v4633 = vlaneseq
        %v4634 = vshrl.u32 %v4633, 7
        %v4635 = vsub.s32 %v4632, %v4634
        %v4636 = vrot.slane %v4629, %v4635
        %v4637 = vcombine.low %v4612, %v4620
        %v4638 = vcombine.high %v4612, %v4620
        %v4640 = vunpack.c.l.s4 1934713408
        %v4641 = vunpack.c.0.s8 %v4640
        %v4642 = vlaneseq
        %v4643 = vshrl.u32 %v4642, 7
        %v4644 = vsub.s32 %v4641, %v4643
        %v4645 = vrot.slane %v4637, %v4644
        %v4647 = vunpack.c.l.s4 1934713408
        %v4648 = vunpack.c.0.s8 %v4647
        %v4649 = vlaneseq
        %v4650 = vshrl.u32 %v4649, 7
        %v4651 = vsub.s32 %v4648, %v4650
        %v4652 = vrot.slane %v4638, %v4651
        %v4653 = vcombine.low %v4628, %v4636
        %v4654 = vcombine.high %v4628, %v4636
        %v4656 = vunpack.c.l.s4 1934713408
        %v4657 = vunpack.c.0.s8 %v4656
        %v4658 = vlaneseq
        %v4659 = vshrl.u32 %v4658, 7
        %v4660 = vsub.s32 %v4657, %v4659
        %v4661 = vrot.slane %v4653, %v4660
        %v4663 = vunpack.c.l.s4 1934713408
        %v4664 = vunpack.c.0.s8 %v4663
        %v4665 = vlaneseq
        %v4666 = vshrl.u32 %v4665, 7
        %v4667 = vsub.s32 %v4664, %v4666
        %v4668 = vrot.slane %v4654, %v4667
        %v4669 = vcombine.low %v4645, %v4661
        %v4670 = vcombine.high %v4645, %v4661
        %v4671 = vcombine.low %v4652, %v4668
        %v4672 = vcombine.high %v4652, %v4668
        %4681 = vrot.lane.b32.xlu0 %v4194, 64
        %v4682 = vpop.permute.xlu0 %4681
        %4683 = vrot.lane.b32.xlu0 %v4262, 64
        %v4684 = vpop.permute.xlu0 %4683
        %4685 = vrot.lane.b32.xlu0 %v4330, 64
        %v4686 = vpop.permute.xlu0 %4685
        %4687 = vrot.lane.b32.xlu0 %v4398, 64
        %v4688 = vpop.permute.xlu0 %4687
        %4689 = vrot.lane.b32.xlu0 %v4466, 64
        %v4690 = vpop.permute.xlu0 %4689
        %4691 = vrot.lane.b32.xlu0 %v4534, 64
        %v4692 = vpop.permute.xlu0 %4691
        %4693 = vrot.lane.b32.xlu0 %v4602, 64
        %v4694 = vpop.permute.xlu0 %4693
        %4695 = vrot.lane.b32.xlu0 %v4670, 64
        %v4696 = vpop.permute.xlu0 %4695
        %4713 = vrot.lane.b32.xlu0 %v4196, 64
        %v4714 = vpop.permute.xlu0 %4713
        %4715 = vrot.lane.b32.xlu0 %v4264, 64
        %v4716 = vpop.permute.xlu0 %4715
        %4717 = vrot.lane.b32.xlu0 %v4332, 64
        %v4718 = vpop.permute.xlu0 %4717
        %4719 = vrot.lane.b32.xlu0 %v4400, 64
        %v4720 = vpop.permute.xlu0 %4719
        %4721 = vrot.lane.b32.xlu0 %v4468, 64
        %v4722 = vpop.permute.xlu0 %4721
        %4723 = vrot.lane.b32.xlu0 %v4536, 64
        %v4724 = vpop.permute.xlu0 %4723
        %4725 = vrot.lane.b32.xlu0 %v4604, 64
        %v4726 = vpop.permute.xlu0 %4725
        %4727 = vrot.lane.b32.xlu0 %v4672, 64
        %v4728 = vpop.permute.xlu0 %4727
        %v4737 = vsel %vm2284, %v4193, %v4682
        %v4738 = vsel %vm2284, %v4261, %v4684
        %v4739 = vsel %vm2284, %v4329, %v4686
        %v4740 = vsel %vm2284, %v4397, %v4688
        %v4741 = vsel %vm2284, %v4465, %v4690
        %v4742 = vsel %vm2284, %v4533, %v4692
        %v4743 = vsel %vm2284, %v4601, %v4694
        %v4744 = vsel %vm2284, %v4669, %v4696
        %v4745 = vsel %vm2284, %v4195, %v4714
        %v4746 = vsel %vm2284, %v4263, %v4716
        %v4747 = vsel %vm2284, %v4331, %v4718
        %v4748 = vsel %vm2284, %v4399, %v4720
        %v4749 = vsel %vm2284, %v4467, %v4722
        %v4750 = vsel %vm2284, %v4535, %v4724
        %v4751 = vsel %vm2284, %v4603, %v4726
        %v4752 = vsel %vm2284, %v4671, %v4728
        %v4753 = vld [vmem:[#allocation2] sm:$0xff]
        %v4754 = vld [vmem:[#allocation2 + $0x8] sm:$0xff]
        %v4755 = vld [vmem:[#allocation2 + $0x10] sm:$0xff]
        %v4756 = vld [vmem:[#allocation2 + $0x18] sm:$0xff]
        %v4757 = vld [vmem:[#allocation2 + $0x20] sm:$0xff]
        %v4758 = vld [vmem:[#allocation2 + $0x28] sm:$0xff]
        %v4759 = vld [vmem:[#allocation2 + $0x30] sm:$0xff]
        %v4760 = vld [vmem:[#allocation2 + $0x38] sm:$0xff]
        %v4761 = vld [vmem:[#allocation2 + $0x40] sm:$0xff]
        %v4762 = vld [vmem:[#allocation2 + $0x48] sm:$0xff]
        %v4763 = vld [vmem:[#allocation2 + $0x50] sm:$0xff]
        %v4764 = vld [vmem:[#allocation2 + $0x58] sm:$0xff]
        %v4765 = vld [vmem:[#allocation2 + $0x60] sm:$0xff]
        %v4766 = vld [vmem:[#allocation2 + $0x68] sm:$0xff]
        %v4767 = vld [vmem:[#allocation2 + $0x70] sm:$0xff]
        %v4768 = vld [vmem:[#allocation2 + $0x78] sm:$0xff]
        %v4769 = vld [vmem:[#allocation2 + $0x80] sm:$0xff]
        %v4770 = vld [vmem:[#allocation2 + $0x88] sm:$0xff]
        %v4771 = vld [vmem:[#allocation2 + $0x90] sm:$0xff]
        %v4772 = vld [vmem:[#allocation2 + $0x98] sm:$0xff]
        %v4773 = vld [vmem:[#allocation2 + $0xa0] sm:$0xff]
        %v4774 = vld [vmem:[#allocation2 + $0xa8] sm:$0xff]
        %v4775 = vld [vmem:[#allocation2 + $0xb0] sm:$0xff]
        %v4776 = vld [vmem:[#allocation2 + $0xb8] sm:$0xff]
        %v4777 = vld [vmem:[#allocation2 + $0xc0] sm:$0xff]
        %v4778 = vld [vmem:[#allocation2 + $0xc8] sm:$0xff]
        %v4779 = vld [vmem:[#allocation2 + $0xd0] sm:$0xff]
        %v4780 = vld [vmem:[#allocation2 + $0xd8] sm:$0xff]
        %v4781 = vld [vmem:[#allocation2 + $0xe0] sm:$0xff]
        %v4782 = vld [vmem:[#allocation2 + $0xe8] sm:$0xff]
        %v4783 = vld [vmem:[#allocation2 + $0xf0] sm:$0xff]
        %v4784 = vld [vmem:[#allocation2 + $0xf8] sm:$0xff]
        %4785 = vmatprep.subr.mxu0 %v915
        %4786 = vmatpush1.msra.mxu0 %v914
        %4787 = vmatprep.subr.mxu0 %v911
        %4788 = vmatpush1.msra.mxu0 %v910
        %4789 = vmatprep.subr.mxu0 %v907
        %4790 = vmatpush1.msra.mxu0 %v906
        %4791 = vmatprep.subr.mxu0 %v903
        %4792 = vmatpush1.msra.mxu0 %v902
        %4793 = vmatprep.subr.mxu0 %v899
        %4794 = vmatpush1.msra.mxu0 %v898
        %4795 = vmatprep.subr.mxu0 %v895
        %4796 = vmatpush1.msra.mxu0 %v894
        %4797 = vmatprep.subr.mxu0 %v891
        %4798 = vmatpush1.msra.mxu0 %v890
        %4799 = vmatprep.subr.mxu0 %v887
        %4800 = vmatpush1.msra.mxu0 %v886
        %4801 = vmatprep.subr.mxu0 %v883
        %4802 = vmatpush1.msra.mxu0 %v882
        %4803 = vmatprep.subr.mxu0 %v879
        %4804 = vmatpush1.msra.mxu0 %v878
        %4805 = vmatprep.subr.mxu0 %v875
        %4806 = vmatpush1.msra.mxu0 %v874
        %4807 = vmatprep.subr.mxu0 %v871
        %4808 = vmatpush1.msra.mxu0 %v870
        %4809 = vmatprep.subr.mxu0 %v867
        %4810 = vmatpush1.msra.mxu0 %v866
        %4811 = vmatprep.subr.mxu0 %v863
        %4812 = vmatpush1.msra.mxu0 %v862
        %4813 = vmatprep.subr.mxu0 %v859
        %4814 = vmatpush1.msra.mxu0 %v858
        %4815 = vmatprep.subr.mxu0 %v855
        %4816 = vmatpush1.msra.mxu0 %v854
        %4817 = vmatprep.subr.mxu0 %v979
        %4818 = vmatpush2.msra.mxu0 %v978
        %4819 = vmatprep.subr.mxu0 %v975
        %4820 = vmatpush2.msra.mxu0 %v974
        %4821 = vmatprep.subr.mxu0 %v971
        %4822 = vmatpush2.msra.mxu0 %v970
        %4823 = vmatprep.subr.mxu0 %v967
        %4824 = vmatpush2.msra.mxu0 %v966
        %4825 = vmatprep.subr.mxu0 %v963
        %4826 = vmatpush2.msra.mxu0 %v962
        %4827 = vmatprep.subr.mxu0 %v959
        %4828 = vmatpush2.msra.mxu0 %v958
        %4829 = vmatprep.subr.mxu0 %v955
        %4830 = vmatpush2.msra.mxu0 %v954
        %4831 = vmatprep.subr.mxu0 %v951
        %4832 = vmatpush2.msra.mxu0 %v950
        %4833 = vmatprep.subr.mxu0 %v947
        %4834 = vmatpush2.msra.mxu0 %v946
        %4835 = vmatprep.subr.mxu0 %v943
        %4836 = vmatpush2.msra.mxu0 %v942
        %4837 = vmatprep.subr.mxu0 %v939
        %4838 = vmatpush2.msra.mxu0 %v938
        %4839 = vmatprep.subr.mxu0 %v935
        %4840 = vmatpush2.msra.mxu0 %v934
        %4841 = vmatprep.subr.mxu0 %v931
        %4842 = vmatpush2.msra.mxu0 %v930
        %4843 = vmatprep.subr.mxu0 %v927
        %4844 = vmatpush2.msra.mxu0 %v926
        %4845 = vmatprep.subr.mxu0 %v923
        %4846 = vmatpush2.msra.mxu0 %v922
        %4847 = vmatprep.subr.mxu0 %v919
        %4848 = vmatpush2.msra.mxu0 %v918
        %4849 = vmatprep.mubr.f32.mxu0 %v4745
        %4850 = vmatmul.mubr.f32.gmra.mxu0 %v4737
        %v4851 = vpop.f32.mrf.mxu0
        %v4852 = vadd.f32 0.0, %v4851
        %v4853 = vpop.f32.mrf.mxu0
        %v4854 = vadd.f32 0.0, %v4853
        %4855 = vmatprep.mubr.f32.mxu0 %v4746
        %4856 = vmatmul.mubr.f32.gmra.mxu0 %v4738
        %v4857 = vpop.f32.mrf.mxu0
        %v4858 = vadd.f32 0.0, %v4857
        %v4859 = vpop.f32.mrf.mxu0
        %v4860 = vadd.f32 0.0, %v4859
        %4861 = vmatprep.mubr.f32.mxu0 %v4747
        %4862 = vmatmul.mubr.f32.gmra.mxu0 %v4739
        %v4863 = vpop.f32.mrf.mxu0
        %v4864 = vadd.f32 0.0, %v4863
        %v4865 = vpop.f32.mrf.mxu0
        %v4866 = vadd.f32 0.0, %v4865
        %4867 = vmatprep.mubr.f32.mxu0 %v4748
        %4868 = vmatmul.mubr.f32.gmra.mxu0 %v4740
        %v4869 = vpop.f32.mrf.mxu0
        %v4870 = vadd.f32 0.0, %v4869
        %v4871 = vpop.f32.mrf.mxu0
        %v4872 = vadd.f32 0.0, %v4871
        %4873 = vmatprep.mubr.f32.mxu0 %v4749
        %4874 = vmatmul.mubr.f32.gmra.mxu0 %v4741
        %v4875 = vpop.f32.mrf.mxu0
        %v4876 = vadd.f32 0.0, %v4875
        %v4877 = vpop.f32.mrf.mxu0
        %v4878 = vadd.f32 0.0, %v4877
        %4879 = vmatprep.mubr.f32.mxu0 %v4750
        %4880 = vmatmul.mubr.f32.gmra.mxu0 %v4742
        %v4881 = vpop.f32.mrf.mxu0
        %v4882 = vadd.f32 0.0, %v4881
        %v4883 = vpop.f32.mrf.mxu0
        %v4884 = vadd.f32 0.0, %v4883
        %4885 = vmatprep.mubr.f32.mxu0 %v4751
        %4886 = vmatmul.mubr.f32.gmra.mxu0 %v4743
        %v4887 = vpop.f32.mrf.mxu0
        %v4888 = vadd.f32 0.0, %v4887
        %v4889 = vpop.f32.mrf.mxu0
        %v4890 = vadd.f32 0.0, %v4889
        %4891 = vmatprep.mubr.f32.mxu0 %v4752
        %4892 = vmatmul.mubr.f32.gmra.mxu0 %v4744
        %v4893 = vpop.f32.mrf.mxu0
        %v4894 = vadd.f32 0.0, %v4893
        %v4895 = vpop.f32.mrf.mxu0
        %v4896 = vadd.f32 0.0, %v4895
        %4897 = vdwg.mxu0
        %4898 = vmatprep.subr.mxu0 %v917
        %4899 = vmatpush1.msra.mxu0 %v916
        %4900 = vmatprep.subr.mxu0 %v913
        %4901 = vmatpush1.msra.mxu0 %v912
        %4902 = vmatprep.subr.mxu0 %v909
        %4903 = vmatpush1.msra.mxu0 %v908
        %4904 = vmatprep.subr.mxu0 %v905
        %4905 = vmatpush1.msra.mxu0 %v904
        %4906 = vmatprep.subr.mxu0 %v901
        %4907 = vmatpush1.msra.mxu0 %v900
        %4908 = vmatprep.subr.mxu0 %v897
        %4909 = vmatpush1.msra.mxu0 %v896
        %4910 = vmatprep.subr.mxu0 %v893
        %4911 = vmatpush1.msra.mxu0 %v892
        %4912 = vmatprep.subr.mxu0 %v889
        %4913 = vmatpush1.msra.mxu0 %v888
        %4914 = vmatprep.subr.mxu0 %v885
        %4915 = vmatpush1.msra.mxu0 %v884
        %4916 = vmatprep.subr.mxu0 %v881
        %4917 = vmatpush1.msra.mxu0 %v880
        %4918 = vmatprep.subr.mxu0 %v877
        %4919 = vmatpush1.msra.mxu0 %v876
        %4920 = vmatprep.subr.mxu0 %v873
        %4921 = vmatpush1.msra.mxu0 %v872
        %4922 = vmatprep.subr.mxu0 %v869
        %4923 = vmatpush1.msra.mxu0 %v868
        %4924 = vmatprep.subr.mxu0 %v865
        %4925 = vmatpush1.msra.mxu0 %v864
        %4926 = vmatprep.subr.mxu0 %v861
        %4927 = vmatpush1.msra.mxu0 %v860
        %4928 = vmatprep.subr.mxu0 %v857
        %4929 = vmatpush1.msra.mxu0 %v856
        %4930 = vmatprep.subr.mxu0 %v981
        %4931 = vmatpush2.msra.mxu0 %v980
        %4932 = vmatprep.subr.mxu0 %v977
        %4933 = vmatpush2.msra.mxu0 %v976
        %4934 = vmatprep.subr.mxu0 %v973
        %4935 = vmatpush2.msra.mxu0 %v972
        %4936 = vmatprep.subr.mxu0 %v969
        %4937 = vmatpush2.msra.mxu0 %v968
        %4938 = vmatprep.subr.mxu0 %v965
        %4939 = vmatpush2.msra.mxu0 %v964
        %4940 = vmatprep.subr.mxu0 %v961
        %4941 = vmatpush2.msra.mxu0 %v960
        %4942 = vmatprep.subr.mxu0 %v957
        %4943 = vmatpush2.msra.mxu0 %v956
        %4944 = vmatprep.subr.mxu0 %v953
        %4945 = vmatpush2.msra.mxu0 %v952
        %4946 = vmatprep.subr.mxu0 %v949
        %4947 = vmatpush2.msra.mxu0 %v948
        %4948 = vmatprep.subr.mxu0 %v945
        %4949 = vmatpush2.msra.mxu0 %v944
        %4950 = vmatprep.subr.mxu0 %v941
        %4951 = vmatpush2.msra.mxu0 %v940
        %4952 = vmatprep.subr.mxu0 %v937
        %4953 = vmatpush2.msra.mxu0 %v936
        %4954 = vmatprep.subr.mxu0 %v933
        %4955 = vmatpush2.msra.mxu0 %v932
        %4956 = vmatprep.subr.mxu0 %v929
        %4957 = vmatpush2.msra.mxu0 %v928
        %4958 = vmatprep.subr.mxu0 %v925
        %4959 = vmatpush2.msra.mxu0 %v924
        %4960 = vmatprep.subr.mxu0 %v921
        %4961 = vmatpush2.msra.mxu0 %v920
        %4962 = vmatprep.mubr.f32.mxu0 %v4745
        %4963 = vmatmul.mubr.f32.gmra.mxu0 %v4737
        %v4964 = vpop.f32.mrf.mxu0
        %v4965 = vadd.f32 0.0, %v4964
        %v4966 = vpop.f32.mrf.mxu0
        %v4967 = vadd.f32 0.0, %v4966
        %4968 = vmatprep.mubr.f32.mxu0 %v4746
        %4969 = vmatmul.mubr.f32.gmra.mxu0 %v4738
        %v4970 = vpop.f32.mrf.mxu0
        %v4971 = vadd.f32 0.0, %v4970
        %v4972 = vpop.f32.mrf.mxu0
        %v4973 = vadd.f32 0.0, %v4972
        %4974 = vmatprep.mubr.f32.mxu0 %v4747
        %4975 = vmatmul.mubr.f32.gmra.mxu0 %v4739
        %v4976 = vpop.f32.mrf.mxu0
        %v4977 = vadd.f32 0.0, %v4976
        %v4978 = vpop.f32.mrf.mxu0
        %v4979 = vadd.f32 0.0, %v4978
        %4980 = vmatprep.mubr.f32.mxu0 %v4748
        %4981 = vmatmul.mubr.f32.gmra.mxu0 %v4740
        %v4982 = vpop.f32.mrf.mxu0
        %v4983 = vadd.f32 0.0, %v4982
        %v4984 = vpop.f32.mrf.mxu0
        %v4985 = vadd.f32 0.0, %v4984
        %4986 = vmatprep.mubr.f32.mxu0 %v4749
        %4987 = vmatmul.mubr.f32.gmra.mxu0 %v4741
        %v4988 = vpop.f32.mrf.mxu0
        %v4989 = vadd.f32 0.0, %v4988
        %v4990 = vpop.f32.mrf.mxu0
        %v4991 = vadd.f32 0.0, %v4990
        %4992 = vmatprep.mubr.f32.mxu0 %v4750
        %4993 = vmatmul.mubr.f32.gmra.mxu0 %v4742
        %v4994 = vpop.f32.mrf.mxu0
        %v4995 = vadd.f32 0.0, %v4994
        %v4996 = vpop.f32.mrf.mxu0
        %v4997 = vadd.f32 0.0, %v4996
        %4998 = vmatprep.mubr.f32.mxu0 %v4751
        %4999 = vmatmul.mubr.f32.gmra.mxu0 %v4743
        %v5000 = vpop.f32.mrf.mxu0
        %v5001 = vadd.f32 0.0, %v5000
        %v5002 = vpop.f32.mrf.mxu0
        %v5003 = vadd.f32 0.0, %v5002
        %5004 = vmatprep.mubr.f32.mxu0 %v4752
        %5005 = vmatmul.mubr.f32.gmra.mxu0 %v4744
        %v5006 = vpop.f32.mrf.mxu0
        %v5007 = vadd.f32 0.0, %v5006
        %v5008 = vpop.f32.mrf.mxu0
        %v5009 = vadd.f32 0.0, %v5008
        %5010 = vdwg.mxu0
        %v5011 = vadd.f32 %v4753, %v4852
        %v5012 = vadd.f32 %v4754, %v4854
        %v5013 = vadd.f32 %v4755, %v4965
        %v5014 = vadd.f32 %v4756, %v4967
        %v5015 = vadd.f32 %v4757, %v4858
        %v5016 = vadd.f32 %v4758, %v4860
        %v5017 = vadd.f32 %v4759, %v4971
        %v5018 = vadd.f32 %v4760, %v4973
        %v5019 = vadd.f32 %v4761, %v4864
        %v5020 = vadd.f32 %v4762, %v4866
        %v5021 = vadd.f32 %v4763, %v4977
        %v5022 = vadd.f32 %v4764, %v4979
        %v5023 = vadd.f32 %v4765, %v4870
        %v5024 = vadd.f32 %v4766, %v4872
        %v5025 = vadd.f32 %v4767, %v4983
        %v5026 = vadd.f32 %v4768, %v4985
        %v5027 = vadd.f32 %v4769, %v4876
        %v5028 = vadd.f32 %v4770, %v4878
        %v5029 = vadd.f32 %v4771, %v4989
        %v5030 = vadd.f32 %v4772, %v4991
        %v5031 = vadd.f32 %v4773, %v4882
        %v5032 = vadd.f32 %v4774, %v4884
        %v5033 = vadd.f32 %v4775, %v4995
        %v5034 = vadd.f32 %v4776, %v4997
        %v5035 = vadd.f32 %v4777, %v4888
        %v5036 = vadd.f32 %v4778, %v4890
        %v5037 = vadd.f32 %v4779, %v5001
        %v5038 = vadd.f32 %v4780, %v5003
        %v5039 = vadd.f32 %v4781, %v4894
        %v5040 = vadd.f32 %v4782, %v4896
        %v5041 = vadd.f32 %v4783, %v5007
        %v5042 = vadd.f32 %v4784, %v5009
        %5043 = vst [vmem:[#allocation2] sm:$0xff] %v5011
        %5044 = vst [vmem:[#allocation2 + $0x8] sm:$0xff] %v5012
        %5045 = vst [vmem:[#allocation2 + $0x10] sm:$0xff] %v5013
        %5046 = vst [vmem:[#allocation2 + $0x18] sm:$0xff] %v5014
        %5047 = vst [vmem:[#allocation2 + $0x20] sm:$0xff] %v5015
        %5048 = vst [vmem:[#allocation2 + $0x28] sm:$0xff] %v5016
        %5049 = vst [vmem:[#allocation2 + $0x30] sm:$0xff] %v5017
        %5050 = vst [vmem:[#allocation2 + $0x38] sm:$0xff] %v5018
        %5051 = vst [vmem:[#allocation2 + $0x40] sm:$0xff] %v5019
        %5052 = vst [vmem:[#allocation2 + $0x48] sm:$0xff] %v5020
        %5053 = vst [vmem:[#allocation2 + $0x50] sm:$0xff] %v5021
        %5054 = vst [vmem:[#allocation2 + $0x58] sm:$0xff] %v5022
        %5055 = vst [vmem:[#allocation2 + $0x60] sm:$0xff] %v5023
        %5056 = vst [vmem:[#allocation2 + $0x68] sm:$0xff] %v5024
        %5057 = vst [vmem:[#allocation2 + $0x70] sm:$0xff] %v5025
        %5058 = vst [vmem:[#allocation2 + $0x78] sm:$0xff] %v5026
        %5059 = vst [vmem:[#allocation2 + $0x80] sm:$0xff] %v5027
        %5060 = vst [vmem:[#allocation2 + $0x88] sm:$0xff] %v5028
        %5061 = vst [vmem:[#allocation2 + $0x90] sm:$0xff] %v5029
        %5062 = vst [vmem:[#allocation2 + $0x98] sm:$0xff] %v5030
        %5063 = vst [vmem:[#allocation2 + $0xa0] sm:$0xff] %v5031
        %5064 = vst [vmem:[#allocation2 + $0xa8] sm:$0xff] %v5032
        %5065 = vst [vmem:[#allocation2 + $0xb0] sm:$0xff] %v5033
        %5066 = vst [vmem:[#allocation2 + $0xb8] sm:$0xff] %v5034
        %5067 = vst [vmem:[#allocation2 + $0xc0] sm:$0xff] %v5035
        %5068 = vst [vmem:[#allocation2 + $0xc8] sm:$0xff] %v5036
        %5069 = vst [vmem:[#allocation2 + $0xd0] sm:$0xff] %v5037
        %5070 = vst [vmem:[#allocation2 + $0xd8] sm:$0xff] %v5038
        %5071 = vst [vmem:[#allocation2 + $0xe0] sm:$0xff] %v5039
        %5072 = vst [vmem:[#allocation2 + $0xe8] sm:$0xff] %v5040
        %5073 = vst [vmem:[#allocation2 + $0xf0] sm:$0xff] %v5041
        %5074 = vst [vmem:[#allocation2 + $0xf8] sm:$0xff] %v5042
        %p5075 = scmp.eq.s32.totalorder %s31, 1
        // Predicated region
        $region65: #{tpu_custom_call.1} parent=39 // pred_check
          %p5076 = pneg %p5075
        $region66: #{tpu_custom_call.1} parent=39 // pred_check_branch
          %5078 = sbr.rel (%p5076) target = $region68
        $region67: #{tpu_custom_call.1} parent=39 // pred_region
          %v5079 = vld [vmem:[#allocation2] sm:$0xff]
          %v5080 = vld [vmem:[#allocation2 + $0x8] sm:$0xff]
          %v5081 = vld [vmem:[#allocation2 + $0x10] sm:$0xff]
          %v5082 = vld [vmem:[#allocation2 + $0x18] sm:$0xff]
          %v5083 = vld [vmem:[#allocation2 + $0x20] sm:$0xff]
          %v5084 = vld [vmem:[#allocation2 + $0x28] sm:$0xff]
          %v5085 = vld [vmem:[#allocation2 + $0x30] sm:$0xff]
          %v5086 = vld [vmem:[#allocation2 + $0x38] sm:$0xff]
          %v5087 = vld [vmem:[#allocation2 + $0x40] sm:$0xff]
          %v5088 = vld [vmem:[#allocation2 + $0x48] sm:$0xff]
          %v5089 = vld [vmem:[#allocation2 + $0x50] sm:$0xff]
          %v5090 = vld [vmem:[#allocation2 + $0x58] sm:$0xff]
          %v5091 = vld [vmem:[#allocation2 + $0x60] sm:$0xff]
          %v5092 = vld [vmem:[#allocation2 + $0x68] sm:$0xff]
          %v5093 = vld [vmem:[#allocation2 + $0x70] sm:$0xff]
          %v5094 = vld [vmem:[#allocation2 + $0x78] sm:$0xff]
          %v5095 = vld [vmem:[#allocation2 + $0x80] sm:$0xff]
          %v5096 = vld [vmem:[#allocation2 + $0x88] sm:$0xff]
          %v5097 = vld [vmem:[#allocation2 + $0x90] sm:$0xff]
          %v5098 = vld [vmem:[#allocation2 + $0x98] sm:$0xff]
          %v5099 = vld [vmem:[#allocation2 + $0xa0] sm:$0xff]
          %v5100 = vld [vmem:[#allocation2 + $0xa8] sm:$0xff]
          %v5101 = vld [vmem:[#allocation2 + $0xb0] sm:$0xff]
          %v5102 = vld [vmem:[#allocation2 + $0xb8] sm:$0xff]
          %v5103 = vld [vmem:[#allocation2 + $0xc0] sm:$0xff]
          %v5104 = vld [vmem:[#allocation2 + $0xc8] sm:$0xff]
          %v5105 = vld [vmem:[#allocation2 + $0xd0] sm:$0xff]
          %v5106 = vld [vmem:[#allocation2 + $0xd8] sm:$0xff]
          %v5107 = vld [vmem:[#allocation2 + $0xe0] sm:$0xff]
          %v5108 = vld [vmem:[#allocation2 + $0xe8] sm:$0xff]
          %v5109 = vld [vmem:[#allocation2 + $0xf0] sm:$0xff]
          %v5110 = vld [vmem:[#allocation2 + $0xf8] sm:$0xff]
          %5111 = vst [vmem:[%s321] sm:$0xff] %v5079
          %5112 = vst [vmem:[%s321 + $0x8] sm:$0xff] %v5080
          %5113 = vst [vmem:[%s321 + $0x10] sm:$0xff] %v5081
          %5114 = vst [vmem:[%s321 + $0x18] sm:$0xff] %v5082
          %5115 = vst [vmem:[%s321 + $0x20] sm:$0xff] %v5083
          %5116 = vst [vmem:[%s321 + $0x28] sm:$0xff] %v5084
          %5117 = vst [vmem:[%s321 + $0x30] sm:$0xff] %v5085
          %5118 = vst [vmem:[%s321 + $0x38] sm:$0xff] %v5086
          %5119 = vst [vmem:[%s321 + $0x40] sm:$0xff] %v5087
          %5120 = vst [vmem:[%s321 + $0x48] sm:$0xff] %v5088
          %5121 = vst [vmem:[%s321 + $0x50] sm:$0xff] %v5089
          %5122 = vst [vmem:[%s321 + $0x58] sm:$0xff] %v5090
          %5123 = vst [vmem:[%s321 + $0x60] sm:$0xff] %v5091
          %5124 = vst [vmem:[%s321 + $0x68] sm:$0xff] %v5092
          %5125 = vst [vmem:[%s321 + $0x70] sm:$0xff] %v5093
          %5126 = vst [vmem:[%s321 + $0x78] sm:$0xff] %v5094
          %5127 = vst [vmem:[%s321 + $0x80] sm:$0xff] %v5095
          %5128 = vst [vmem:[%s321 + $0x88] sm:$0xff] %v5096
          %5129 = vst [vmem:[%s321 + $0x90] sm:$0xff] %v5097
          %5130 = vst [vmem:[%s321 + $0x98] sm:$0xff] %v5098
          %5131 = vst [vmem:[%s321 + $0xa0] sm:$0xff] %v5099
          %5132 = vst [vmem:[%s321 + $0xa8] sm:$0xff] %v5100
          %5133 = vst [vmem:[%s321 + $0xb0] sm:$0xff] %v5101
          %5134 = vst [vmem:[%s321 + $0xb8] sm:$0xff] %v5102
          %5135 = vst [vmem:[%s321 + $0xc0] sm:$0xff] %v5103
          %5136 = vst [vmem:[%s321 + $0xc8] sm:$0xff] %v5104
          %5137 = vst [vmem:[%s321 + $0xd0] sm:$0xff] %v5105
          %5138 = vst [vmem:[%s321 + $0xd8] sm:$0xff] %v5106
          %5139 = vst [vmem:[%s321 + $0xe0] sm:$0xff] %v5107
          %5140 = vst [vmem:[%s321 + $0xe8] sm:$0xff] %v5108
          %5141 = vst [vmem:[%s321 + $0xf0] sm:$0xff] %v5109
          %5142 = vst [vmem:[%s321 + $0xf8] sm:$0xff] %v5110
        $region68: #{tpu_custom_call.1} parent=39 // pred_fallthru
          _
        %s5143 = sand.u32 %s163, 1
        %s5144 = scalar_lea.sflag [#allocation5], %s5143
        %s5145 = sand.u32 %s163, 1
        %s5146 = smul.addr %s5145, 256
        %s5147 = scalar_lea.vmem [#allocation12], %s5146
        // Predicated region
        $region69: #{tpu_custom_call.1} parent=39 // pred_check
          %p5148 = pneg %p173
        $region70: #{tpu_custom_call.1} parent=39 // pred_check_branch
          %5150 = sbr.rel (%p5148) target = $region72
        $region71: #{tpu_custom_call.1} parent=39 // pred_region
          %s5151 = smul.u32 8, %s30
          %s5153 = ssub.s32 4096, 4096
          %5154 = vsyncadd %s5144, %s5153
          %s5155 = smul.addr %s5151, 4
          %s5156 = smul.addr %s29, 64
          %s5157 = sadd.s32 %s5155, %s5156
          %s5158 = smul.addr %s5157, 128
          %s5159 = scalar_lea.hbm %s5, %s5158
          %s5160 = sshll.u32 %s5147, 4
          %s5161 = int_to_ptr.vmem [resolvable:$true] %s5160
          %5166 = dma.vmem_to_hbm [thread:$0]  %s5161, 4096, %s5159, %s5144, 512, 512, 32
        $region72: #{tpu_custom_call.1} parent=39 // pred_fallthru
          _
      $region40: #{tpu_custom_call.1} parent=5 // pred_fallthru
        _
      %p5167 = scmp.le.s32.totalorder 2, %s19
      // Predicated region
      $region73: #{tpu_custom_call.1} parent=5 // pred_check
        %p5168 = pneg %p5167
      $region74: #{tpu_custom_call.1} parent=5 // pred_check_branch
        %5170 = sbr.rel (%p5168) target = $region76
      $region75: #{tpu_custom_call.1} parent=5 // pred_region
        %s5171 = ssub.s32 %s19, 2
        // Predicated region
        $region77: #{tpu_custom_call.1} parent=75 // pred_check
          %p5172 = pneg %p179
        $region78: #{tpu_custom_call.1} parent=75 // pred_check_branch
          %5174 = sbr.rel (%p5172) target = $region80
        $region79: #{tpu_custom_call.1} parent=75 // pred_region
          %s5175 = sand.u32 %s164, 1
          %s5176 = scalar_lea.sflag [#allocation5], %s5175
          %s5177 = sand.u32 %s164, 1
          %s5178 = smul.addr %s5177, 256
          %s5179 = scalar_lea.vmem [#allocation12], %s5178
          %5180 = dma.done %s5176, 4096
        $region80: #{tpu_custom_call.1} parent=75 // pred_fallthru
          _
      $region76: #{tpu_custom_call.1} parent=5 // pred_fallthru
        _
    $region6: #{tpu_custom_call.1} parent=1 // loop_footer
      %s23 = sadd.s32 1, %s19
    $region7: #{tpu_custom_call.1} parent=1 // loop_footer_branch
      %18 = sbr.rel target = $region3
    $region8: #{tpu_custom_call.1} parent=1 // loop_exit
      _
    %5181 = vsyncpa [#allocation4], 1
    %s5182 = scalar_lea.sflag [#allocation4], 1
    %5183 = vsyncpa %s5182, 1
    %5184 = vsyncpa [#allocation7], 1
    %5185 = vsyncpa [#allocation10], 1
    %5186 = vsyncpa [#allocation5], 1
    %s5187 = scalar_lea.sflag [#allocation5], 1
    %5188 = vsyncpa %s5187, 1

</llo_original>
